<compile_context>
chip_gen: v7x
topology: tpu7x:2x2x1
jax: 0.10.0
libtpu: 0.0.40
codegen_flags: <defaults>
</compile_context>

<pallas_src>
import functools

import jax
import jax.numpy as jnp
from jax import lax
from jax.experimental import pallas as pl
from jax.experimental.pallas import tpu as pltpu


_VMEM_LIMIT = 48 * 1024 * 1024  # safe on v5e/v6e (128 MiB) and v7x (64 MiB)


def _round_up(n, m):
    return ((n + m - 1) // m) * m


def _pick_tile(n, target):
    """Largest multiple-of-8 divisor of n that is <= target (fallback: n)."""
    if n <= target:
        return n
    t = min(target, n)
    t -= t % 8
    while t >= 8:
        if n % t == 0:
            return t
        t -= 8
    return n


# ---------------------------------------------------------------------------
# Kernels
# ---------------------------------------------------------------------------
def _key_conv_kernel(x_ref, w_ref, b_ref, o_ref, st_ref):
    # x: (TN, Cp) bf16, w: (Cp, Kp) bf16, b: (1, Kp) f32
    # o: (TN, Kp) f32 pre-BN conv output
    # st: (8, Kp) per-tile stats block: row0 = sum, row1 = sum of squares
    y = jnp.dot(x_ref[...], w_ref[...], preferred_element_type=jnp.float32)
    y = y + b_ref[...]
    o_ref[...] = y
    kp = y.shape[-1]
    s = jnp.sum(y, axis=0, keepdims=True)
    q = jnp.sum(y * y, axis=0, keepdims=True)
    row = lax.broadcasted_iota(jnp.int32, (8, kp), 0)
    st_ref[...] = jnp.where(row == 0, s, jnp.where(row == 1, q, 0.0))


def _value_conv_kernel(x_ref, w1_ref, b1_ref, w2_ref, b2_ref, o_ref, *, H, W):
    # x: (1, (H+3)*(W+2), Cp) bf16  -- padded image flattened row-major
    # w1: (9, Cp, Vp) bf16 (tap order dh*3+dw), w2: (Vp, Vp) bf16
    # o: (1, H*(W+2), Vp) f32 (columns W, W+1 of each row are garbage and are
    #    sliced away in the wrapper)
    R = H * (W + 2)
    Vp = o_ref.shape[-1]
    acc = jnp.zeros((R, Vp), jnp.float32)
    for k in range(9):
        dh, dw = divmod(k, 3)
        off = dh * (W + 2) + dw
        xs = x_ref[0, off:off + R, :]
        acc = acc + jnp.dot(xs, w1_ref[k], preferred_element_type=jnp.float32)
    h1 = jnp.maximum(acc + b1_ref[...], 0.0).astype(jnp.bfloat16)
    out = jnp.dot(h1, w2_ref[...], preferred_element_type=jnp.float32)
    o_ref[0] = jnp.maximum(out + b2_ref[...], 0.0)


def _attn_kernel(q_ref, k_ref, scale_ref, shift_ref, v_ref, sim_ref, ctx_ref):
    # q: (1, TQ, Kp) f32, k: (1, HW, Kp) f32 (pre-BN conv output),
    # scale/shift: (1, Kp) folded BN * kc**-0.25, v: (1, HW, Vp) f32
    # sim: (1, TQ, HW) f32, ctx: (1, TQ, Vp) f32
    scale = scale_ref[...]
    shift = shift_ref[...]
    fq = jnp.maximum(q_ref[0] * scale + shift, 0.0).astype(jnp.bfloat16)
    fk = jnp.maximum(k_ref[0] * scale + shift, 0.0).astype(jnp.bfloat16)
    # trans_b contraction (no explicit transpose through the XLU)
    s = lax.dot_general(fq, fk, dimension_numbers=(((1,), (1,)), ((), ())),
                        preferred_element_type=jnp.float32)   # (TQ, HW)
    s = s - jnp.max(s, axis=-1, keepdims=True)
    e = jnp.exp(s)
    sm = e * pl.reciprocal(jnp.sum(e, axis=-1, keepdims=True), approx=True)
    sim_ref[0] = sm
    ctx_ref[0] = lax.dot_general(
        sm.astype(jnp.bfloat16), v_ref[0].astype(jnp.bfloat16),
        dimension_numbers=(((1,), (0,)), ((), ())),
        preferred_element_type=jnp.float32)


# ---------------------------------------------------------------------------
# Wrappers
# ---------------------------------------------------------------------------
def key_conv_bn_stats(x_flat, w, b, *, row_tile=256):
    N, Cp = x_flat.shape
    Kp = w.shape[1]
    tn = _pick_tile(N, row_tile)
    nt = N // tn
    return pl.pallas_call(
        _key_conv_kernel,
        out_shape=(
            jax.ShapeDtypeStruct((N, Kp), jnp.float32),
            jax.ShapeDtypeStruct((nt * 8, Kp), jnp.float32),
        ),
        grid=(nt,),
        in_specs=[
            pl.BlockSpec((tn, Cp), lambda i: (i, 0)),
            pl.BlockSpec((Cp, Kp), lambda i: (0, 0)),
            pl.BlockSpec((1, Kp), lambda i: (0, 0)),
        ],
        out_specs=[
            pl.BlockSpec((tn, Kp), lambda i: (i, 0)),
            pl.BlockSpec((8, Kp), lambda i: (i, 0)),
        ],
        compiler_params=pltpu.CompilerParams(
            dimension_semantics=("parallel",),
            vmem_limit_bytes=_VMEM_LIMIT),
    )(x_flat, w, b)


def value_conv(x_pad_flat, w1, b1, w2, b2, *, H, W):
    B, NP, Cp = x_pad_flat.shape
    Vp = w1.shape[-1]
    R = H * (W + 2)
    kernel = functools.partial(_value_conv_kernel, H=H, W=W)
    return pl.pallas_call(
        kernel,
        out_shape=jax.ShapeDtypeStruct((B, R, Vp), jnp.float32),
        grid=(B,),
        in_specs=[
            pl.BlockSpec((1, NP, Cp), lambda b: (b, 0, 0)),
            pl.BlockSpec((9, Cp, Vp), lambda b: (0, 0, 0)),
            pl.BlockSpec((1, Vp), lambda b: (0, 0)),
            pl.BlockSpec((Vp, Vp), lambda b: (0, 0)),
            pl.BlockSpec((1, Vp), lambda b: (0, 0)),
        ],
        out_specs=pl.BlockSpec((1, R, Vp), lambda b: (b, 0, 0)),
        compiler_params=pltpu.CompilerParams(
            dimension_semantics=("parallel",),
            vmem_limit_bytes=_VMEM_LIMIT),
    )(x_pad_flat, w1, b1, w2, b2)


def attention(key_pre, bn_scale, bn_shift, value, *, q_tile=128):
    B, HW, Kp = key_pre.shape
    Vp = value.shape[-1]
    tq = _pick_tile(HW, q_tile)
    nq = HW // tq
    return pl.pallas_call(
        _attn_kernel,
        out_shape=(
            jax.ShapeDtypeStruct((B, HW, HW), jnp.float32),
            jax.ShapeDtypeStruct((B, HW, Vp), jnp.float32),
        ),
        grid=(B, nq),
        in_specs=[
            pl.BlockSpec((1, tq, Kp), lambda b, q: (b, q, 0)),   # query tile
            pl.BlockSpec((1, HW, Kp), lambda b, q: (b, 0, 0)),   # full keys
            pl.BlockSpec((1, Kp), lambda b, q: (0, 0)),
            pl.BlockSpec((1, Kp), lambda b, q: (0, 0)),
            pl.BlockSpec((1, HW, Vp), lambda b, q: (b, 0, 0)),   # full values
        ],
        out_specs=[
            pl.BlockSpec((1, tq, HW), lambda b, q: (b, q, 0)),
            pl.BlockSpec((1, tq, Vp), lambda b, q: (b, q, 0)),
        ],
        compiler_params=pltpu.CompilerParams(
            dimension_semantics=("parallel", "parallel"),
            vmem_limit_bytes=_VMEM_LIMIT),
    )(key_pre, key_pre, bn_scale, bn_shift, value)


def init_params(key, in_channels, key_channels, value_channels):
    """Deterministic kaiming-normal-style init (std = sqrt(2/fan_in)), zero bias."""
    k1, k2, k3 = jax.random.split(key, 3)
    # f_key 1x1 conv: PyTorch (K, C, 1, 1) -> stored as (C, K)
    w_key = jax.random.normal(k1, (in_channels, key_channels), jnp.float32) * (
        2.0 / in_channels) ** 0.5
    b_key = jnp.zeros((key_channels,), jnp.float32)
    # f_value conv1 3x3: PyTorch (V, C, 3, 3) -> stored as (9, C, V), tap dh*3+dw
    w_v1 = jax.random.normal(
        k2, (9, in_channels, value_channels), jnp.float32) * (
        2.0 / (9 * in_channels)) ** 0.5
    b_v1 = jnp.zeros((value_channels,), jnp.float32)
    # f_value conv2 1x1: (V, V)
    w_v2 = jax.random.normal(
        k3, (value_channels, value_channels), jnp.float32) * (
        2.0 / value_channels) ** 0.5
    b_v2 = jnp.zeros((value_channels,), jnp.float32)
    return dict(w_key=w_key, b_key=b_key, w_v1=w_v1, b_v1=b_v1,
                w_v2=w_v2, b_v2=b_v2)


@functools.partial(jax.jit, static_argnames=("key_channels", "value_channels"))
def self_attention_block(x, params, *, key_channels, value_channels):
    """x: (B, C, H, W) float32 (NCHW like PyTorch). scale=1 path."""
    B, C, H, W = x.shape
    HW = H * W
    Cp = _round_up(C, 128)
    Kp = _round_up(key_channels, 128)
    Vp = _round_up(value_channels, 128)

    x_nhwc = jnp.transpose(x, (0, 2, 3, 1))                            # (B,H,W,C)
    x_nhwc_p = jnp.pad(x_nhwc, ((0, 0), (0, 0), (0, 0), (0, Cp - C)))  # lane-dense C

    # --- pad weights to lane-dense shapes; bf16 MXU operands, f32 biases -----
    w_key = jnp.zeros((Cp, Kp), jnp.float32).at[
        :C, :key_channels].set(params["w_key"]).astype(jnp.bfloat16)
    b_key = jnp.zeros((1, Kp), jnp.float32).at[0, :key_channels].set(params["b_key"])
    w_v1 = jnp.zeros((9, Cp, Vp), jnp.float32).at[
        :, :C, :value_channels].set(params["w_v1"]).astype(jnp.bfloat16)
    b_v1 = jnp.zeros((1, Vp), jnp.float32).at[0, :value_channels].set(params["b_v1"])
    w_v2 = jnp.zeros((Vp, Vp), jnp.float32).at[
        :value_channels, :value_channels].set(params["w_v2"]).astype(jnp.bfloat16)
    b_v2 = jnp.zeros((1, Vp), jnp.float32).at[0, :value_channels].set(params["b_v2"])

    # --- f_key / f_query (shared): tiled 1x1 conv with fused BN statistics ---
    x_flat = x_nhwc_p.reshape(B * HW, Cp).astype(jnp.bfloat16)
    key_pre, stats = key_conv_bn_stats(x_flat, w_key, b_key)
    # Cross-tile reduction of the tiny (Kp,) per-channel stats stays in JAX.
    n = float(B * HW)
    sums = jnp.sum(stats[0::8], axis=0)
    sqs = jnp.sum(stats[1::8], axis=0)
    mean = sums / n
    var = jnp.maximum(sqs / n - mean * mean, 0.0)     # biased var (BN train mode)
    rstd = 1.0 / jnp.sqrt(var + 1e-5)
    # Fold BN (gamma=1, beta=0) and the softmax key_channels**-0.5 scale
    # (split as kc**-0.25 on each of Q and K; valid since the fold is > 0
    # and commutes with ReLU).
    qk_fold = float(key_channels) ** -0.25
    bn_scale = (rstd * qk_fold).reshape(1, Kp)
    bn_shift = (-mean * rstd * qk_fold).reshape(1, Kp)

    # --- f_value: 3x3 conv -> ReLU -> 1x1 conv -> ReLU (no 9x im2col) --------
    # Pad H by (1,2) and W by (1,1), flatten rows: a (dh,dw) tap becomes a
    # row-shift of dh*(W+2)+dw in the flattened padded image.
    xpad = jnp.pad(x_nhwc_p, ((0, 0), (1, 2), (1, 1), (0, 0))).astype(jnp.bfloat16)
    xpad_flat = xpad.reshape(B, (H + 3) * (W + 2), Cp)
    value_full = value_conv(xpad_flat, w_v1, b_v1, w_v2, b_v2, H=H, W=W)
    value = value_full.reshape(B, H, W + 2, Vp)[:, :, :W, :].reshape(B, HW, Vp)

    # --- attention: softmax(kc^-0.5 * Q K^T) @ V, tiled over query rows ------
    key_pre = key_pre.reshape(B, HW, Kp)
    sim_map, ctx = attention(key_pre, bn_scale, bn_shift, value)

    # ctx: (B, HW, Vp) -> (B, V, H, W)  (matches torch permute(0,2,1).view(...))
    context = jnp.transpose(ctx[..., :value_channels], (0, 2, 1)).reshape(
        B, value_channels, H, W)
    return context, sim_map


if __name__ == "__main__":
    B, C, H, W = 2, 4, 16, 16
    KEY_CH, VAL_CH = 16, 16

    root = jax.random.PRNGKey(0)
    kx, kp = jax.random.split(root)
    x = jax.random.normal(kx, (B, C, H, W), jnp.float32)
    params = init_params(kp, C, KEY_CH, VAL_CH)

    context, sim_map = self_attention_block(
        x, params, key_channels=KEY_CH, value_channels=VAL_CH)
    jax.block_until_ready((context, sim_map))

    assert context.shape == (B, VAL_CH, H, W)
    assert sim_map.shape == (B, H * W, H * W)
    assert bool(jnp.all(jnp.isfinite(context)))
    assert bool(jnp.all(jnp.isfinite(sim_map)))
    # softmax rows must sum to ~1 (approx EUP reciprocal + bf16 operands)
    rowsum = jnp.sum(sim_map, axis=-1)
    assert jnp.allclose(rowsum, jnp.ones_like(rowsum), atol=5e-3)

    print("KERNEL_OK")
</pallas_src>

<mosaic_0001>
module attributes {stable_mosaic.version = 11 : i64} {
  func.func @_key_conv_kernel(%arg0: i32, %arg1: memref<256x128xbf16, #tpu.memory_space<vmem>>, %arg2: memref<128x128xbf16, #tpu.memory_space<vmem>>, %arg3: memref<1x128xf32, #tpu.memory_space<vmem>>, %arg4: memref<256x128xf32, #tpu.memory_space<vmem>>, %arg5: memref<8x128xf32, #tpu.memory_space<vmem>>) attributes {dimension_semantics = [#tpu.dimension_semantics<parallel>], iteration_bounds = array<i64: 2>, scalar_prefetch = 0 : i64, scratch_operands = 0 : i64, tpu.core_type = #tpu.core_type<tc>, window_params = [{transform_indices = @transform_0, window_bounds = array<i64: 256, 128>}, {pipeline_mode = #tpu.pipeline_mode<synchronous>, transform_indices = @transform_1, window_bounds = array<i64: 128, 128>}, {pipeline_mode = #tpu.pipeline_mode<synchronous>, transform_indices = @transform_2, window_bounds = array<i64: 1, 128>}, {transform_indices = @transform_3, window_bounds = array<i64: 256, 128>}, {transform_indices = @transform_4, window_bounds = array<i64: 8, 128>}]} {
    %c0 = arith.constant 0 : index
    %c0_0 = arith.constant 0 : index
    %0 = vector.load %arg1[%c0, %c0_0] : memref<256x128xbf16, #tpu.memory_space<vmem>>, vector<256x128xbf16>
    %c0_1 = arith.constant 0 : index
    %c0_2 = arith.constant 0 : index
    %1 = vector.load %arg2[%c0_1, %c0_2] : memref<128x128xbf16, #tpu.memory_space<vmem>>, vector<128x128xbf16>
    %cst = arith.constant dense<0.000000e+00> : vector<256x128xf32>
    %2 = tpu.matmul %0, %1, %cst {dimension_numbers = #tpu.dot_dimension_numbers<[1], [0], [0], [1], [0, 0, 1, 1], [], []>} : vector<256x128xbf16>, vector<128x128xbf16>, vector<256x128xf32> -> vector<256x128xf32>
    %c0_3 = arith.constant 0 : index
    %c0_4 = arith.constant 0 : index
    %3 = vector.load %arg3[%c0_3, %c0_4] : memref<1x128xf32, #tpu.memory_space<vmem>>, vector<1x128xf32>
    %4 = vector.broadcast %3 : vector<1x128xf32> to vector<256x128xf32>
    %5 = arith.addf %2, %4 : vector<256x128xf32>
    %c0_5 = arith.constant 0 : index
    %c0_6 = arith.constant 0 : index
    %6 = vector.load %arg4[%c0_5, %c0_6] : memref<256x128xf32, #tpu.memory_space<vmem>>, vector<256x128xf32>
    tpu.vector_store %arg4[%c0_5, %c0_6], %5 {strides = array<i32>} : memref<256x128xf32, #tpu.memory_space<vmem>>, vector<256x128xf32>,
    %cst_7 = arith.constant dense<0.000000e+00> : vector<128xf32>
    %7 = vector.multi_reduction <add>, %5, %cst_7 [0] : vector<256x128xf32> to vector<128xf32>
    %8 = vector.shape_cast %7 : vector<128xf32> to vector<1x128xf32>
    %9 = arith.mulf %5, %5 : vector<256x128xf32>
    %cst_8 = arith.constant dense<0.000000e+00> : vector<128xf32>
    %10 = vector.multi_reduction <add>, %9, %cst_8 [0] : vector<256x128xf32> to vector<128xf32>
    %11 = vector.shape_cast %10 : vector<128xf32> to vector<1x128xf32>
    %12 = tpu.iota {dimensions = array<i32: 0>} : vector<8x128xi32>
    %c0_i32 = arith.constant 0 : i32
    %13 = vector.broadcast %c0_i32 : i32 to vector<8x128xi32>
    %14 = arith.cmpi eq, %12, %13 : vector<8x128xi32>
    %c1_i32 = arith.constant 1 : i32
    %15 = vector.broadcast %c1_i32 : i32 to vector<8x128xi32>
    %16 = arith.cmpi eq, %12, %15 : vector<8x128xi32>
    %cst_9 = arith.constant 0.000000e+00 : f32
    %17 = vector.shape_cast %11 : vector<1x128xf32> to vector<1x128xf32>
    %18 = vector.broadcast %17 : vector<1x128xf32> to vector<8x128xf32>
    %19 = vector.broadcast %cst_9 : f32 to vector<8x128xf32>
    %20 = arith.select %16, %18, %19 : vector<8x128xi1>, vector<8x128xf32>
    %21 = vector.shape_cast %8 : vector<1x128xf32> to vector<1x128xf32>
    %22 = vector.broadcast %21 : vector<1x128xf32> to vector<8x128xf32>
    %23 = arith.select %14, %22, %20 : vector<8x128xi1>, vector<8x128xf32>
    %c0_10 = arith.constant 0 : index
    %c0_11 = arith.constant 0 : index
    %24 = vector.load %arg5[%c0_10, %c0_11] : memref<8x128xf32, #tpu.memory_space<vmem>>, vector<8x128xf32>
    tpu.vector_store %arg5[%c0_10, %c0_11], %23 {strides = array<i32>} : memref<8x128xf32, #tpu.memory_space<vmem>>, vector<8x128xf32>,
    return
  }
  func.func @transform_0(%arg0: i32) -> (i32, i32) {
    %c0_i32 = arith.constant 0 : i32
    %c0_i32_0 = arith.constant 0 : i32
    return %arg0, %c0_i32 : i32, i32
  }
  func.func @transform_1(%arg0: i32) -> (i32, i32) {
    %c0_i32 = arith.constant 0 : i32
    %c0_i32_0 = arith.constant 0 : i32
    %c0_i32_1 = arith.constant 0 : i32
    return %c0_i32, %c0_i32_0 : i32, i32
  }
  func.func @transform_2(%arg0: i32) -> (i32, i32) {
    %c0_i32 = arith.constant 0 : i32
    %c0_i32_0 = arith.constant 0 : i32
    %c0_i32_1 = arith.constant 0 : i32
    return %c0_i32, %c0_i32_0 : i32, i32
  }
  func.func @transform_3(%arg0: i32) -> (i32, i32) {
    %c0_i32 = arith.constant 0 : i32
    %c0_i32_0 = arith.constant 0 : i32
    return %arg0, %c0_i32 : i32, i32
  }
  func.func @transform_4(%arg0: i32) -> (i32, i32) {
    %c0_i32 = arith.constant 0 : i32
    %c0_i32_0 = arith.constant 0 : i32
    return %arg0, %c0_i32 : i32, i32
  }
}

module attributes {stable_mosaic.version = 11 : i64} {
  func.func @_value_conv_kernel(%arg0: i32, %arg1: memref<1x342x128xbf16, #tpu.memory_space<vmem>>, %arg2: memref<9x128x128xbf16, #tpu.memory_space<vmem>>, %arg3: memref<1x128xf32, #tpu.memory_space<vmem>>, %arg4: memref<128x128xbf16, #tpu.memory_space<vmem>>, %arg5: memref<1x128xf32, #tpu.memory_space<vmem>>, %arg6: memref<1x288x128xf32, #tpu.memory_space<vmem>>) attributes {dimension_semantics = [#tpu.dimension_semantics<parallel>], iteration_bounds = array<i64: 2>, scalar_prefetch = 0 : i64, scratch_operands = 0 : i64, tpu.core_type = #tpu.core_type<tc>, window_params = [{transform_indices = @transform_0, window_bounds = array<i64: 1, 342, 128>}, {pipeline_mode = #tpu.pipeline_mode<synchronous>, transform_indices = @transform_1, window_bounds = array<i64: 9, 128, 128>}, {pipeline_mode = #tpu.pipeline_mode<synchronous>, transform_indices = @transform_2, window_bounds = array<i64: 1, 128>}, {pipeline_mode = #tpu.pipeline_mode<synchronous>, transform_indices = @transform_3, window_bounds = array<i64: 128, 128>}, {pipeline_mode = #tpu.pipeline_mode<synchronous>, transform_indices = @transform_4, window_bounds = array<i64: 1, 128>}, {transform_indices = @transform_5, window_bounds = array<i64: 1, 288, 128>}]} {
    %cst = arith.constant 0.000000e+00 : f32
    %0 = vector.broadcast %cst : f32 to vector<288x128xf32>
    %c0 = arith.constant 0 : index
    %c0_0 = arith.constant 0 : index
    %c0_1 = arith.constant 0 : index
    %1 = vector.load %arg1[%c0, %c0_0, %c0_1] : memref<1x342x128xbf16, #tpu.memory_space<vmem>>, vector<1x288x128xbf16>
    %2 = vector.shape_cast %1 : vector<1x288x128xbf16> to vector<288x128xbf16>
    %c0_2 = arith.constant 0 : index
    %c0_3 = arith.constant 0 : index
    %c0_4 = arith.constant 0 : index
    %3 = vector.load %arg2[%c0_2, %c0_3, %c0_4] : memref<9x128x128xbf16, #tpu.memory_space<vmem>>, vector<1x128x128xbf16>
    %4 = vector.shape_cast %3 : vector<1x128x128xbf16> to vector<128x128xbf16>
    %cst_5 = arith.constant dense<0.000000e+00> : vector<288x128xf32>
    %5 = tpu.matmul %2, %4, %cst_5 {dimension_numbers = #tpu.dot_dimension_numbers<[1], [0], [0], [1], [0, 0, 1, 1], [], []>} : vector<288x128xbf16>, vector<128x128xbf16>, vector<288x128xf32> -> vector<288x128xf32>
    %6 = arith.addf %0, %5 : vector<288x128xf32>
    %c0_6 = arith.constant 0 : index
    %c1 = arith.constant 1 : index
    %c0_7 = arith.constant 0 : index
    %7 = vector.load %arg1[%c0_6, %c1, %c0_7] : memref<1x342x128xbf16, #tpu.memory_space<vmem>>, vector<1x288x128xbf16>
    %8 = vector.shape_cast %7 : vector<1x288x128xbf16> to vector<288x128xbf16>
    %c1_8 = arith.constant 1 : index
    %c0_9 = arith.constant 0 : index
    %c0_10 = arith.constant 0 : index
    %9 = vector.load %arg2[%c1_8, %c0_9, %c0_10] : memref<9x128x128xbf16, #tpu.memory_space<vmem>>, vector<1x128x128xbf16>
    %10 = vector.shape_cast %9 : vector<1x128x128xbf16> to vector<128x128xbf16>
    %cst_11 = arith.constant dense<0.000000e+00> : vector<288x128xf32>
    %11 = tpu.matmul %8, %10, %cst_11 {dimension_numbers = #tpu.dot_dimension_numbers<[1], [0], [0], [1], [0, 0, 1, 1], [], []>} : vector<288x128xbf16>, vector<128x128xbf16>, vector<288x128xf32> -> vector<288x128xf32>
    %12 = arith.addf %6, %11 : vector<288x128xf32>
    %c0_12 = arith.constant 0 : index
    %c2 = arith.constant 2 : index
    %c0_13 = arith.constant 0 : index
    %13 = vector.load %arg1[%c0_12, %c2, %c0_13] : memref<1x342x128xbf16, #tpu.memory_space<vmem>>, vector<1x288x128xbf16>
    %14 = vector.shape_cast %13 : vector<1x288x128xbf16> to vector<288x128xbf16>
    %c2_14 = arith.constant 2 : index
    %c0_15 = arith.constant 0 : index
    %c0_16 = arith.constant 0 : index
    %15 = vector.load %arg2[%c2_14, %c0_15, %c0_16] : memref<9x128x128xbf16, #tpu.memory_space<vmem>>, vector<1x128x128xbf16>
    %16 = vector.shape_cast %15 : vector<1x128x128xbf16> to vector<128x128xbf16>
    %cst_17 = arith.constant dense<0.000000e+00> : vector<288x128xf32>
    %17 = tpu.matmul %14, %16, %cst_17 {dimension_numbers = #tpu.dot_dimension_numbers<[1], [0], [0], [1], [0, 0, 1, 1], [], []>} : vector<288x128xbf16>, vector<128x128xbf16>, vector<288x128xf32> -> vector<288x128xf32>
    %18 = arith.addf %12, %17 : vector<288x128xf32>
    %c0_18 = arith.constant 0 : index
    %c18 = arith.constant 18 : index
    %c0_19 = arith.constant 0 : index
    %19 = vector.load %arg1[%c0_18, %c18, %c0_19] : memref<1x342x128xbf16, #tpu.memory_space<vmem>>, vector<1x288x128xbf16>
    %20 = vector.shape_cast %19 : vector<1x288x128xbf16> to vector<288x128xbf16>
    %c3 = arith.constant 3 : index
    %c0_20 = arith.constant 0 : index
    %c0_21 = arith.constant 0 : index
    %21 = vector.load %arg2[%c3, %c0_20, %c0_21] : memref<9x128x128xbf16, #tpu.memory_space<vmem>>, vector<1x128x128xbf16>
    %22 = vector.shape_cast %21 : vector<1x128x128xbf16> to vector<128x128xbf16>
    %cst_22 = arith.constant dense<0.000000e+00> : vector<288x128xf32>
    %23 = tpu.matmul %20, %22, %cst_22 {dimension_numbers = #tpu.dot_dimension_numbers<[1], [0], [0], [1], [0, 0, 1, 1], [], []>} : vector<288x128xbf16>, vector<128x128xbf16>, vector<288x128xf32> -> vector<288x128xf32>
    %24 = arith.addf %18, %23 : vector<288x128xf32>
    %c0_23 = arith.constant 0 : index
    %c19 = arith.constant 19 : index
    %c0_24 = arith.constant 0 : index
    %25 = vector.load %arg1[%c0_23, %c19, %c0_24] : memref<1x342x128xbf16, #tpu.memory_space<vmem>>, vector<1x288x128xbf16>
    %26 = vector.shape_cast %25 : vector<1x288x128xbf16> to vector<288x128xbf16>
    %c4 = arith.constant 4 : index
    %c0_25 = arith.constant 0 : index
    %c0_26 = arith.constant 0 : index
    %27 = vector.load %arg2[%c4, %c0_25, %c0_26] : memref<9x128x128xbf16, #tpu.memory_space<vmem>>, vector<1x128x128xbf16>
    %28 = vector.shape_cast %27 : vector<1x128x128xbf16> to vector<128x128xbf16>
    %cst_27 = arith.constant dense<0.000000e+00> : vector<288x128xf32>
    %29 = tpu.matmul %26, %28, %cst_27 {dimension_numbers = #tpu.dot_dimension_numbers<[1], [0], [0], [1], [0, 0, 1, 1], [], []>} : vector<288x128xbf16>, vector<128x128xbf16>, vector<288x128xf32> -> vector<288x128xf32>
    %30 = arith.addf %24, %29 : vector<288x128xf32>
    %c0_28 = arith.constant 0 : index
    %c20 = arith.constant 20 : index
    %c0_29 = arith.constant 0 : index
    %31 = vector.load %arg1[%c0_28, %c20, %c0_29] : memref<1x342x128xbf16, #tpu.memory_space<vmem>>, vector<1x288x128xbf16>
    %32 = vector.shape_cast %31 : vector<1x288x128xbf16> to vector<288x128xbf16>
    %c5 = arith.constant 5 : index
    %c0_30 = arith.constant 0 : index
    %c0_31 = arith.constant 0 : index
    %33 = vector.load %arg2[%c5, %c0_30, %c0_31] : memref<9x128x128xbf16, #tpu.memory_space<vmem>>, vector<1x128x128xbf16>
    %34 = vector.shape_cast %33 : vector<1x128x128xbf16> to vector<128x128xbf16>
    %cst_32 = arith.constant dense<0.000000e+00> : vector<288x128xf32>
    %35 = tpu.matmul %32, %34, %cst_32 {dimension_numbers = #tpu.dot_dimension_numbers<[1], [0], [0], [1], [0, 0, 1, 1], [], []>} : vector<288x128xbf16>, vector<128x128xbf16>, vector<288x128xf32> -> vector<288x128xf32>
    %36 = arith.addf %30, %35 : vector<288x128xf32>
    %c0_33 = arith.constant 0 : index
    %c36 = arith.constant 36 : index
    %c0_34 = arith.constant 0 : index
    %37 = vector.load %arg1[%c0_33, %c36, %c0_34] : memref<1x342x128xbf16, #tpu.memory_space<vmem>>, vector<1x288x128xbf16>
    %38 = vector.shape_cast %37 : vector<1x288x128xbf16> to vector<288x128xbf16>
    %c6 = arith.constant 6 : index
    %c0_35 = arith.constant 0 : index
    %c0_36 = arith.constant 0 : index
    %39 = vector.load %arg2[%c6, %c0_35, %c0_36] : memref<9x128x128xbf16, #tpu.memory_space<vmem>>, vector<1x128x128xbf16>
    %40 = vector.shape_cast %39 : vector<1x128x128xbf16> to vector<128x128xbf16>
    %cst_37 = arith.constant dense<0.000000e+00> : vector<288x128xf32>
    %41 = tpu.matmul %38, %40, %cst_37 {dimension_numbers = #tpu.dot_dimension_numbers<[1], [0], [0], [1], [0, 0, 1, 1], [], []>} : vector<288x128xbf16>, vector<128x128xbf16>, vector<288x128xf32> -> vector<288x128xf32>
    %42 = arith.addf %36, %41 : vector<288x128xf32>
    %c0_38 = arith.constant 0 : index
    %c37 = arith.constant 37 : index
    %c0_39 = arith.constant 0 : index
    %43 = vector.load %arg1[%c0_38, %c37, %c0_39] : memref<1x342x128xbf16, #tpu.memory_space<vmem>>, vector<1x288x128xbf16>
    %44 = vector.shape_cast %43 : vector<1x288x128xbf16> to vector<288x128xbf16>
    %c7 = arith.constant 7 : index
    %c0_40 = arith.constant 0 : index
    %c0_41 = arith.constant 0 : index
    %45 = vector.load %arg2[%c7, %c0_40, %c0_41] : memref<9x128x128xbf16, #tpu.memory_space<vmem>>, vector<1x128x128xbf16>
    %46 = vector.shape_cast %45 : vector<1x128x128xbf16> to vector<128x128xbf16>
    %cst_42 = arith.constant dense<0.000000e+00> : vector<288x128xf32>
    %47 = tpu.matmul %44, %46, %cst_42 {dimension_numbers = #tpu.dot_dimension_numbers<[1], [0], [0], [1], [0, 0, 1, 1], [], []>} : vector<288x128xbf16>, vector<128x128xbf16>, vector<288x128xf32> -> vector<288x128xf32>
    %48 = arith.addf %42, %47 : vector<288x128xf32>
    %c0_43 = arith.constant 0 : index
    %c38 = arith.constant 38 : index
    %c0_44 = arith.constant 0 : index
    %49 = vector.load %arg1[%c0_43, %c38, %c0_44] : memref<1x342x128xbf16, #tpu.memory_space<vmem>>, vector<1x288x128xbf16>
    %50 = vector.shape_cast %49 : vector<1x288x128xbf16> to vector<288x128xbf16>
    %c8 = arith.constant 8 : index
    %c0_45 = arith.constant 0 : index
    %c0_46 = arith.constant 0 : index
    %51 = vector.load %arg2[%c8, %c0_45, %c0_46] : memref<9x128x128xbf16, #tpu.memory_space<vmem>>, vector<1x128x128xbf16>
    %52 = vector.shape_cast %51 : vector<1x128x128xbf16> to vector<128x128xbf16>
    %cst_47 = arith.constant dense<0.000000e+00> : vector<288x128xf32>
    %53 = tpu.matmul %50, %52, %cst_47 {dimension_numbers = #tpu.dot_dimension_numbers<[1], [0], [0], [1], [0, 0, 1, 1], [], []>} : vector<288x128xbf16>, vector<128x128xbf16>, vector<288x128xf32> -> vector<288x128xf32>
    %54 = arith.addf %48, %53 : vector<288x128xf32>
    %c0_48 = arith.constant 0 : index
    %c0_49 = arith.constant 0 : index
    %55 = vector.load %arg3[%c0_48, %c0_49] : memref<1x128xf32, #tpu.memory_space<vmem>>, vector<1x128xf32>
    %56 = vector.broadcast %55 : vector<1x128xf32> to vector<288x128xf32>
    %57 = arith.addf %54, %56 : vector<288x128xf32>
    %cst_50 = arith.constant 0.000000e+00 : f32
    %58 = vector.broadcast %cst_50 : f32 to vector<288x128xf32>
    %59 = arith.maximumf %57, %58 : vector<288x128xf32>
    %60 = arith.truncf %59 : vector<288x128xf32> to vector<288x128xbf16>
    %c0_51 = arith.constant 0 : index
    %c0_52 = arith.constant 0 : index
    %61 = vector.load %arg4[%c0_51, %c0_52] : memref<128x128xbf16, #tpu.memory_space<vmem>>, vector<128x128xbf16>
    %cst_53 = arith.constant dense<0.000000e+00> : vector<288x128xf32>
    %62 = tpu.matmul %60, %61, %cst_53 {dimension_numbers = #tpu.dot_dimension_numbers<[1], [0], [0], [1], [0, 0, 1, 1], [], []>} : vector<288x128xbf16>, vector<128x128xbf16>, vector<288x128xf32> -> vector<288x128xf32>
    %c0_54 = arith.constant 0 : index
    %c0_55 = arith.constant 0 : index
    %63 = vector.load %arg5[%c0_54, %c0_55] : memref<1x128xf32, #tpu.memory_space<vmem>>, vector<1x128xf32>
    %64 = vector.broadcast %63 : vector<1x128xf32> to vector<288x128xf32>
    %65 = arith.addf %62, %64 : vector<288x128xf32>
    %cst_56 = arith.constant 0.000000e+00 : f32
    %66 = vector.broadcast %cst_56 : f32 to vector<288x128xf32>
    %67 = arith.maximumf %65, %66 : vector<288x128xf32>
    %c0_57 = arith.constant 0 : index
    %c0_58 = arith.constant 0 : index
    %c0_59 = arith.constant 0 : index
    %68 = vector.load %arg6[%c0_57, %c0_58, %c0_59] : memref<1x288x128xf32, #tpu.memory_space<vmem>>, vector<1x288x128xf32>
    %69 = vector.shape_cast %68 : vector<1x288x128xf32> to vector<288x128xf32>
    %70 = vector.shape_cast %67 : vector<288x128xf32> to vector<1x288x128xf32>
    tpu.vector_store %arg6[%c0_57, %c0_58, %c0_59], %70 {strides = array<i32>} : memref<1x288x128xf32, #tpu.memory_space<vmem>>, vector<1x288x128xf32>,
    return
  }
  func.func @transform_0(%arg0: i32) -> (i32, i32, i32) {
    %c0_i32 = arith.constant 0 : i32
    %c0_i32_0 = arith.constant 0 : i32
    %c0_i32_1 = arith.constant 0 : i32
    return %arg0, %c0_i32, %c0_i32_0 : i32, i32, i32
  }
  func.func @transform_1(%arg0: i32) -> (i32, i32, i32) {
    %c0_i32 = arith.constant 0 : i32
    %c0_i32_0 = arith.constant 0 : i32
    %c0_i32_1 = arith.constant 0 : i32
    %c0_i32_2 = arith.constant 0 : i32
    return %c0_i32, %c0_i32_0, %c0_i32_1 : i32, i32, i32
  }
  func.func @transform_2(%arg0: i32) -> (i32, i32) {
    %c0_i32 = arith.constant 0 : i32
    %c0_i32_0 = arith.constant 0 : i32
    %c0_i32_1 = arith.constant 0 : i32
    return %c0_i32, %c0_i32_0 : i32, i32
  }
  func.func @transform_3(%arg0: i32) -> (i32, i32) {
    %c0_i32 = arith.constant 0 : i32
    %c0_i32_0 = arith.constant 0 : i32
    %c0_i32_1 = arith.constant 0 : i32
    return %c0_i32, %c0_i32_0 : i32, i32
  }
  func.func @transform_4(%arg0: i32) -> (i32, i32) {
    %c0_i32 = arith.constant 0 : i32
    %c0_i32_0 = arith.constant 0 : i32
    %c0_i32_1 = arith.constant 0 : i32
    return %c0_i32, %c0_i32_0 : i32, i32
  }
  func.func @transform_5(%arg0: i32) -> (i32, i32, i32) {
    %c0_i32 = arith.constant 0 : i32
    %c0_i32_0 = arith.constant 0 : i32
    %c0_i32_1 = arith.constant 0 : i32
    return %arg0, %c0_i32, %c0_i32_0 : i32, i32, i32
  }
}

module attributes {stable_mosaic.version = 11 : i64} {
  func.func @_attn_kernel(%arg0: i32, %arg1: i32, %arg2: memref<1x128x128xf32, #tpu.memory_space<vmem>>, %arg3: memref<1x256x128xf32, #tpu.memory_space<vmem>>, %arg4: memref<1x128xf32, #tpu.memory_space<vmem>>, %arg5: memref<1x128xf32, #tpu.memory_space<vmem>>, %arg6: memref<1x256x128xf32, #tpu.memory_space<vmem>>, %arg7: memref<1x128x256xf32, #tpu.memory_space<vmem>>, %arg8: memref<1x128x128xf32, #tpu.memory_space<vmem>>) attributes {dimension_semantics = [#tpu.dimension_semantics<parallel>, #tpu.dimension_semantics<parallel>], iteration_bounds = array<i64: 2, 2>, scalar_prefetch = 0 : i64, scratch_operands = 0 : i64, tpu.core_type = #tpu.core_type<tc>, window_params = [{transform_indices = @transform_0, window_bounds = array<i64: 1, 128, 128>}, {transform_indices = @transform_1, window_bounds = array<i64: 1, 256, 128>}, {pipeline_mode = #tpu.pipeline_mode<synchronous>, transform_indices = @transform_2, window_bounds = array<i64: 1, 128>}, {pipeline_mode = #tpu.pipeline_mode<synchronous>, transform_indices = @transform_3, window_bounds = array<i64: 1, 128>}, {transform_indices = @transform_4, window_bounds = array<i64: 1, 256, 128>}, {transform_indices = @transform_5, window_bounds = array<i64: 1, 128, 256>}, {transform_indices = @transform_6, window_bounds = array<i64: 1, 128, 128>}]} {
    %c0 = arith.constant 0 : index
    %c0_0 = arith.constant 0 : index
    %0 = vector.load %arg4[%c0, %c0_0] : memref<1x128xf32, #tpu.memory_space<vmem>>, vector<1x128xf32>
    %c0_1 = arith.constant 0 : index
    %c0_2 = arith.constant 0 : index
    %1 = vector.load %arg5[%c0_1, %c0_2] : memref<1x128xf32, #tpu.memory_space<vmem>>, vector<1x128xf32>
    %c0_3 = arith.constant 0 : index
    %c0_4 = arith.constant 0 : index
    %c0_5 = arith.constant 0 : index
    %2 = vector.load %arg2[%c0_3, %c0_4, %c0_5] : memref<1x128x128xf32, #tpu.memory_space<vmem>>, vector<1x128x128xf32>
    %3 = vector.shape_cast %2 : vector<1x128x128xf32> to vector<128x128xf32>
    %4 = vector.broadcast %0 : vector<1x128xf32> to vector<128x128xf32>
    %5 = arith.mulf %3, %4 : vector<128x128xf32>
    %6 = vector.broadcast %1 : vector<1x128xf32> to vector<128x128xf32>
    %7 = arith.addf %5, %6 : vector<128x128xf32>
    %cst = arith.constant 0.000000e+00 : f32
    %8 = vector.broadcast %cst : f32 to vector<128x128xf32>
    %9 = arith.maximumf %7, %8 : vector<128x128xf32>
    %10 = arith.truncf %9 : vector<128x128xf32> to vector<128x128xbf16>
    %c0_6 = arith.constant 0 : index
    %c0_7 = arith.constant 0 : index
    %c0_8 = arith.constant 0 : index
    %11 = vector.load %arg3[%c0_6, %c0_7, %c0_8] : memref<1x256x128xf32, #tpu.memory_space<vmem>>, vector<1x256x128xf32>
    %12 = vector.shape_cast %11 : vector<1x256x128xf32> to vector<256x128xf32>
    %13 = vector.broadcast %0 : vector<1x128xf32> to vector<256x128xf32>
    %14 = arith.mulf %12, %13 : vector<256x128xf32>
    %15 = vector.broadcast %1 : vector<1x128xf32> to vector<256x128xf32>
    %16 = arith.addf %14, %15 : vector<256x128xf32>
    %cst_9 = arith.constant 0.000000e+00 : f32
    %17 = vector.broadcast %cst_9 : f32 to vector<256x128xf32>
    %18 = arith.maximumf %16, %17 : vector<256x128xf32>
    %19 = arith.truncf %18 : vector<256x128xf32> to vector<256x128xbf16>
    %cst_10 = arith.constant dense<0.000000e+00> : vector<128x256xf32>
    %20 = tpu.matmul %10, %19, %cst_10 {dimension_numbers = #tpu.dot_dimension_numbers<[1], [1], [0], [0], [0, 0, 1, 0], [], []>} : vector<128x128xbf16>, vector<256x128xbf16>, vector<128x256xf32> -> vector<128x256xf32>
    %cst_11 = arith.constant dense<0xFF800000> : vector<128xf32>
    %21 = vector.multi_reduction <maximumf>, %20, %cst_11 [1] : vector<128x256xf32> to vector<128xf32>
    %22 = vector.shape_cast %21 : vector<128xf32> to vector<128x1xf32>
    %23 = vector.broadcast %22 : vector<128x1xf32> to vector<128x256xf32>
    %24 = arith.subf %20, %23 : vector<128x256xf32>
    %25 = math.exp %24 : vector<128x256xf32>
    %cst_12 = arith.constant dense<0.000000e+00> : vector<128xf32>
    %26 = vector.multi_reduction <add>, %25, %cst_12 [1] : vector<128x256xf32> to vector<128xf32>
    %27 = vector.shape_cast %26 : vector<128xf32> to vector<128x1xf32>
    %28 = tpu.reciprocal %27 {approx = true} : vector<128x1xf32> -> vector<128x1xf32>
    %29 = vector.broadcast %28 : vector<128x1xf32> to vector<128x256xf32>
    %30 = arith.mulf %25, %29 : vector<128x256xf32>
    %c0_13 = arith.constant 0 : index
    %c0_14 = arith.constant 0 : index
    %c0_15 = arith.constant 0 : index
    %31 = vector.load %arg7[%c0_13, %c0_14, %c0_15] : memref<1x128x256xf32, #tpu.memory_space<vmem>>, vector<1x128x256xf32>
    %32 = vector.shape_cast %31 : vector<1x128x256xf32> to vector<128x256xf32>
    %33 = vector.shape_cast %30 : vector<128x256xf32> to vector<1x128x256xf32>
    tpu.vector_store %arg7[%c0_13, %c0_14, %c0_15], %33 {strides = array<i32>} : memref<1x128x256xf32, #tpu.memory_space<vmem>>, vector<1x128x256xf32>,
    %34 = arith.truncf %30 : vector<128x256xf32> to vector<128x256xbf16>
    %c0_16 = arith.constant 0 : index
    %c0_17 = arith.constant 0 : index
    %c0_18 = arith.constant 0 : index
    %35 = vector.load %arg6[%c0_16, %c0_17, %c0_18] : memref<1x256x128xf32, #tpu.memory_space<vmem>>, vector<1x256x128xf32>
    %36 = vector.shape_cast %35 : vector<1x256x128xf32> to vector<256x128xf32>
    %37 = arith.truncf %36 : vector<256x128xf32> to vector<256x128xbf16>
    %cst_19 = arith.constant dense<0.000000e+00> : vector<128x128xf32>
    %38 = tpu.matmul %34, %37, %cst_19 {dimension_numbers = #tpu.dot_dimension_numbers<[1], [0], [0], [1], [0, 0, 1, 1], [], []>} : vector<128x256xbf16>, vector<256x128xbf16>, vector<128x128xf32> -> vector<128x128xf32>
    %c0_20 = arith.constant 0 : index
    %c0_21 = arith.constant 0 : index
    %c0_22 = arith.constant 0 : index
    %39 = vector.load %arg8[%c0_20, %c0_21, %c0_22] : memref<1x128x128xf32, #tpu.memory_space<vmem>>, vector<1x128x128xf32>
    %40 = vector.shape_cast %39 : vector<1x128x128xf32> to vector<128x128xf32>
    %41 = vector.shape_cast %38 : vector<128x128xf32> to vector<1x128x128xf32>
    tpu.vector_store %arg8[%c0_20, %c0_21, %c0_22], %41 {strides = array<i32>} : memref<1x128x128xf32, #tpu.memory_space<vmem>>, vector<1x128x128xf32>,
    return
  }
  func.func @transform_0(%arg0: i32, %arg1: i32) -> (i32, i32, i32) {
    %c0_i32 = arith.constant 0 : i32
    %c0_i32_0 = arith.constant 0 : i32
    return %arg0, %arg1, %c0_i32 : i32, i32, i32
  }
  func.func @transform_1(%arg0: i32, %arg1: i32) -> (i32, i32, i32) {
    %c0_i32 = arith.constant 0 : i32
    %c0_i32_0 = arith.constant 0 : i32
    %c0_i32_1 = arith.constant 0 : i32
    return %arg0, %c0_i32, %c0_i32_0 : i32, i32, i32
  }
  func.func @transform_2(%arg0: i32, %arg1: i32) -> (i32, i32) {
    %c0_i32 = arith.constant 0 : i32
    %c0_i32_0 = arith.constant 0 : i32
    %c0_i32_1 = arith.constant 0 : i32
    return %c0_i32, %c0_i32_0 : i32, i32
  }
  func.func @transform_3(%arg0: i32, %arg1: i32) -> (i32, i32) {
    %c0_i32 = arith.constant 0 : i32
    %c0_i32_0 = arith.constant 0 : i32
    %c0_i32_1 = arith.constant 0 : i32
    return %c0_i32, %c0_i32_0 : i32, i32
  }
  func.func @transform_4(%arg0: i32, %arg1: i32) -> (i32, i32, i32) {
    %c0_i32 = arith.constant 0 : i32
    %c0_i32_0 = arith.constant 0 : i32
    %c0_i32_1 = arith.constant 0 : i32
    return %arg0, %c0_i32, %c0_i32_0 : i32, i32, i32
  }
  func.func @transform_5(%arg0: i32, %arg1: i32) -> (i32, i32, i32) {
    %c0_i32 = arith.constant 0 : i32
    %c0_i32_0 = arith.constant 0 : i32
    return %arg0, %arg1, %c0_i32 : i32, i32, i32
  }
  func.func @transform_6(%arg0: i32, %arg1: i32) -> (i32, i32, i32) {
    %c0_i32 = arith.constant 0 : i32
    %c0_i32_0 = arith.constant 0 : i32
    return %arg0, %arg1, %c0_i32 : i32, i32, i32
  }
}

</mosaic_0001>

<llo_original>
// kernel: self_attention_block.3
$region0: #{self_attention_block.3}
  #allocation0 [shape = 'u32[]', space=smem, size = 0x4, offset = 0x4, fixed_abs, tag = 'smem constant byte address 0x4 - core index']
  #allocation1 [shape = 'u32[144,128]{1,0:T(1,128)}', space=vmem, size = 0x12000, scoped, tag = 'internal scratch']
  %s0 = inlined_call_operand.vmem [shape: bf16[512,128], index: 0, kind: input, shape index: {}]
  %s1 = inlined_call_operand.vmem [shape: bf16[128,128], index: 1, kind: input, shape index: {}]
  %s2 = inlined_call_operand.vmem [shape: f32[1,128], index: 2, kind: input, shape index: {}]
  %s3 = inlined_call_operand.vmem [shape: f32[512,128], index: 3, kind: output, shape index: {0}]
  %s4 = inlined_call_operand.vmem [shape: f32[16,128], index: 4, kind: output, shape index: {1}]
  %5 = xla_tuple %s3, %s4
  %s6 = sld [smem:[#allocation0]]
  $region53: #{self_attention_block.3} parent=0
    _
  %s8 = ssub.s32 1, %s6
  %s9 = scalar_select 0, %s8, %s6
  loop: start=0, step=1, limit=4
  $region2: #{self_attention_block.3} parent=0 // loop_pre_header
    _
  $region3: #{self_attention_block.3} parent=0 // loop_header
    %s11 = sphi 0, %s15
    %p12 = scmp.ge.s32.totalorder %s11, 4
    %s21 = sphi 0, %s23
    %s24 = sphi 0, %s21
    %s25 = sphi 0, %s24
    %s41 = sphi 0, %s25
    %s45 = sphi 0, %s45
    %s47 = sphi 0, %s45
    %s48 = sphi 0, %s47
    %s62 = sphi 0, %s48
    %s66 = sphi 0, %s66
    %s68 = sphi 0, %s66
    %s69 = sphi 0, %s68
    %s83 = sphi 0, %s69
    %s89 = sphi 0, %s91
    %s92 = sphi 0, %s89
    %s93 = sphi 0, %s92
    %s109 = sphi 0, %s93
    %s115 = sphi 0, %s117
    %s118 = sphi 0, %s115
    %s119 = sphi 0, %s118
    %s135 = sphi 0, %s119
  $region4: #{self_attention_block.3} parent=0 // loop_header_branch
    %14 = sbr.rel (%p12) target = $region8
  $region5: #{self_attention_block.3} parent=0 // loop_body
    %s16 = ssub.s32 %s11, 1
    %s17 = ssub.s32 %s11, 2
    %s18 = sadd.s32 %s11, 1
    %s19 = ssub.s32 %s11, %s18
    %p20 = scmp.eq.s32.totalorder %s19, 0
    %s22 = sadd.s32 %s21, 1
    %s23 = scalar_select %p20, %s21, %s22
    %p26 = pneg %p20
    %p27 = scmp.eq.s32.totalorder %s11, 1
    %p28 = por %p26, %p27
    %p29 = scmp.ne.s32.totalorder %s21, %s24
    %p30 = scmp.eq.s32.totalorder %s11, 0
    %p31 = por %p29, %p30
    %p32 = scmp.ne.s32.totalorder %s21, %s24
    %p33 = scmp.eq.s32.totalorder %s16, 1
    %p34 = por %p32, %p33
    %p35 = scmp.ne.s32.totalorder %s24, %s25
    %p36 = scmp.eq.s32.totalorder %s16, 0
    %p37 = por %p35, %p36
    %p38 = scmp.ne.s32.totalorder %s24, %s25
    %p39 = scmp.eq.s32.totalorder %s17, 1
    %p40 = por %p38, %p39
    %p42 = scmp.ne.s32.totalorder %s25, %s41
    %p43 = scmp.eq.s32.totalorder %s17, 0
    %p44 = por %p42, %p43
    %s46 = sadd.s32 %s45, 1
    %p49 = scmp.eq.s32.totalorder %s11, 1
    %p50 = scmp.ne.s32.totalorder %s45, %s47
    %p51 = scmp.eq.s32.totalorder %s11, 0
    %p52 = por %p50, %p51
    %p53 = scmp.ne.s32.totalorder %s45, %s47
    %p54 = scmp.eq.s32.totalorder %s16, 1
    %p55 = por %p53, %p54
    %p56 = scmp.ne.s32.totalorder %s47, %s48
    %p57 = scmp.eq.s32.totalorder %s16, 0
    %p58 = por %p56, %p57
    %p59 = scmp.ne.s32.totalorder %s47, %s48
    %p60 = scmp.eq.s32.totalorder %s17, 1
    %p61 = por %p59, %p60
    %p63 = scmp.ne.s32.totalorder %s48, %s62
    %p64 = scmp.eq.s32.totalorder %s17, 0
    %p65 = por %p63, %p64
    %s67 = sadd.s32 %s66, 1
    %p70 = scmp.eq.s32.totalorder %s11, 1
    %p71 = scmp.ne.s32.totalorder %s66, %s68
    %p72 = scmp.eq.s32.totalorder %s11, 0
    %p73 = por %p71, %p72
    %p74 = scmp.ne.s32.totalorder %s66, %s68
    %p75 = scmp.eq.s32.totalorder %s16, 1
    %p76 = por %p74, %p75
    %p77 = scmp.ne.s32.totalorder %s68, %s69
    %p78 = scmp.eq.s32.totalorder %s16, 0
    %p79 = por %p77, %p78
    %p80 = scmp.ne.s32.totalorder %s68, %s69
    %p81 = scmp.eq.s32.totalorder %s17, 1
    %p82 = por %p80, %p81
    %p84 = scmp.ne.s32.totalorder %s69, %s83
    %p85 = scmp.eq.s32.totalorder %s17, 0
    %p86 = por %p84, %p85
    %s87 = ssub.s32 %s11, %s18
    %p88 = scmp.eq.s32.totalorder %s87, 0
    %s90 = sadd.s32 %s89, 1
    %s91 = scalar_select %p88, %s89, %s90
    %p94 = pneg %p88
    %p95 = scmp.eq.s32.totalorder %s11, 1
    %p96 = por %p94, %p95
    %p97 = scmp.ne.s32.totalorder %s89, %s92
    %p98 = scmp.eq.s32.totalorder %s11, 0
    %p99 = por %p97, %p98
    %p100 = scmp.ne.s32.totalorder %s89, %s92
    %p101 = scmp.eq.s32.totalorder %s16, 1
    %p102 = por %p100, %p101
    %p103 = scmp.ne.s32.totalorder %s92, %s93
    %p104 = scmp.eq.s32.totalorder %s16, 0
    %p105 = por %p103, %p104
    %p106 = scmp.ne.s32.totalorder %s92, %s93
    %p107 = scmp.eq.s32.totalorder %s17, 1
    %p108 = por %p106, %p107
    %p110 = scmp.ne.s32.totalorder %s93, %s109
    %p111 = scmp.eq.s32.totalorder %s17, 0
    %p112 = por %p110, %p111
    %s113 = ssub.s32 %s11, %s18
    %p114 = scmp.eq.s32.totalorder %s113, 0
    %s116 = sadd.s32 %s115, 1
    %s117 = scalar_select %p114, %s115, %s116
    %p120 = pneg %p114
    %p121 = scmp.eq.s32.totalorder %s11, 1
    %p122 = por %p120, %p121
    %p123 = scmp.ne.s32.totalorder %s115, %s118
    %p124 = scmp.eq.s32.totalorder %s11, 0
    %p125 = por %p123, %p124
    %p126 = scmp.ne.s32.totalorder %s115, %s118
    %p127 = scmp.eq.s32.totalorder %s16, 1
    %p128 = por %p126, %p127
    %p129 = scmp.ne.s32.totalorder %s118, %s119
    %p130 = scmp.eq.s32.totalorder %s16, 0
    %p131 = por %p129, %p130
    %p132 = scmp.ne.s32.totalorder %s118, %s119
    %p133 = scmp.eq.s32.totalorder %s17, 1
    %p134 = por %p132, %p133
    %p136 = scmp.ne.s32.totalorder %s119, %s135
    %p137 = scmp.eq.s32.totalorder %s17, 0
    %p138 = por %p136, %p137
    %p139 = scmp.le.s32.totalorder 1, %s11
    %p140 = scmp.lt.s32.totalorder %s11, 3
    %p141 = pnand %p139, %p140
    %p142 = pneg %p141
    // Predicated region
    $region9: #{self_attention_block.3} parent=5 // pred_check
      _
    $region10: #{self_attention_block.3} parent=5 // pred_check_branch
      %144 = sbr.rel (%p141) target = $region12
    $region11: #{self_attention_block.3} parent=5 // pred_region
      %s145 = ssub.s32 %s11, 1
      // Predicated region
      $region13: #{self_attention_block.3} parent=11 // pred_check
        %p146 = pneg %p58
      $region14: #{self_attention_block.3} parent=11 // pred_check_branch
        %148 = sbr.rel (%p146) target = $region16
      $region15: #{self_attention_block.3} parent=11 // pred_region
        _
      $region16: #{self_attention_block.3} parent=11 // pred_fallthru
        _
      // Predicated region
      $region17: #{self_attention_block.3} parent=11 // pred_check
        %p149 = pneg %p79
      $region18: #{self_attention_block.3} parent=11 // pred_check_branch
        %151 = sbr.rel (%p149) target = $region20
      $region19: #{self_attention_block.3} parent=11 // pred_region
        _
      $region20: #{self_attention_block.3} parent=11 // pred_fallthru
        _
    $region12: #{self_attention_block.3} parent=5 // pred_fallthru
      _
    %p152 = scmp.lt.s32.totalorder %s11, 2
    // Predicated region
    $region21: #{self_attention_block.3} parent=5 // pred_check
      %p153 = pneg %p152
    $region22: #{self_attention_block.3} parent=5 // pred_check_branch
      %155 = sbr.rel (%p153) target = $region24
    $region23: #{self_attention_block.3} parent=5 // pred_region
      // Predicated region
      $region25: #{self_attention_block.3} parent=23 // pred_check
        %p156 = pneg %p31
      $region26: #{self_attention_block.3} parent=23 // pred_check_branch
        %158 = sbr.rel (%p156) target = $region28
      $region27: #{self_attention_block.3} parent=23 // pred_region
        %s159 = smul.u32 32, %s11
        %p160 = scmp.lt.s32.totalorder %s159, 63
        %s161 = scalar_select %p160, %s159, 63
        %s162 = smul.addr %s161, 4
        %s163 = scalar_lea.vmem %s0, %s162
        %s164 = smul.u32 32, %s11
      $region28: #{self_attention_block.3} parent=23 // pred_fallthru
        _
    $region24: #{self_attention_block.3} parent=5 // pred_fallthru
      _
    %p165 = scmp.le.s32.totalorder 1, %s11
    %p166 = scmp.lt.s32.totalorder %s11, 3
    %p167 = pnand %p165, %p166
    %p168 = pneg %p167
    // Predicated region
    $region29: #{self_attention_block.3} parent=5 // pred_check
      _
    $region30: #{self_attention_block.3} parent=5 // pred_check_branch
      %170 = sbr.rel (%p167) target = $region32
    $region31: #{self_attention_block.3} parent=5 // pred_region
      %s171 = ssub.s32 %s11, 1
      %s172 = smul.u32 32, %s16
      %p173 = scmp.lt.s32.totalorder %s172, 63
      %s174 = scalar_select %p173, %s172, 63
      %s175 = smul.addr %s174, 4
      %s176 = scalar_lea.vmem %s0, %s175
      %p177 = pneg %p37
      %p178 = pneg %p34
      %p179 = pneg %p58
      %p180 = pneg %p55
      %p181 = pneg %p79
      %p182 = pneg %p76
      %p183 = pneg %p105
      %p184 = pneg %p102
      %s185 = smul.u32 32, %s16
      %p186 = scmp.lt.s32.totalorder %s185, 63
      %s187 = scalar_select %p186, %s185, 63
      %s188 = smul.addr %s187, 8
      %s189 = scalar_lea.vmem %s3, %s188
      %p190 = pneg %p131
      %p191 = pneg %p128
      %p192 = scmp.lt.s32.totalorder %s16, 1
      %s193 = scalar_select %p192, %s16, 1
      %s194 = smul.addr %s193, 8
      %s195 = scalar_lea.vmem %s4, %s194
      %s196 = smul.u32 32, %s16
      %p197 = scmp.lt.s32.totalorder %s196, 63
      %s198 = scalar_select %p197, %s196, 63
      %s199 = smul.addr %s198, 4
      %s200 = scalar_lea.vmem %s0, %s199
      %s201 = smul.u32 32, %s16
      %s202 = smul.u32 32, %s16
      %p203 = scmp.lt.s32.totalorder %s202, 63
      %s204 = scalar_select %p203, %s202, 63
      %s205 = smul.addr %s204, 8
      %s206 = scalar_lea.vmem %s3, %s205
      %s207 = smul.u32 32, %s16
      %p208 = scmp.lt.s32.totalorder %s16, 1
      %s209 = scalar_select %p208, %s16, 1
      %s210 = smul.addr %s209, 8
      %s211 = scalar_lea.vmem %s4, %s210
      %v213 = vld [vmem:[%s200] sm:$0xf]
      %v214 = vld [vmem:[%s200 + $0x4] sm:$0xf]
      %v215 = vld [vmem:[%s200 + $0x8] sm:$0xf]
      %v216 = vld [vmem:[%s200 + $0xc] sm:$0xf]
      %v217 = vld [vmem:[%s200 + $0x10] sm:$0xf]
      %v218 = vld [vmem:[%s200 + $0x14] sm:$0xf]
      %v219 = vld [vmem:[%s200 + $0x18] sm:$0xf]
      %v220 = vld [vmem:[%s200 + $0x1c] sm:$0xf]
      %v221 = vld [vmem:[%s200 + $0x20] sm:$0xf]
      %v222 = vld [vmem:[%s200 + $0x24] sm:$0xf]
      %v223 = vld [vmem:[%s200 + $0x28] sm:$0xf]
      %v224 = vld [vmem:[%s200 + $0x2c] sm:$0xf]
      %v225 = vld [vmem:[%s200 + $0x30] sm:$0xf]
      %v226 = vld [vmem:[%s200 + $0x34] sm:$0xf]
      %v227 = vld [vmem:[%s200 + $0x38] sm:$0xf]
      %v228 = vld [vmem:[%s200 + $0x3c] sm:$0xf]
      %v229 = vld [vmem:[%s200 + $0x40] sm:$0xf]
      %v230 = vld [vmem:[%s200 + $0x44] sm:$0xf]
      %v231 = vld [vmem:[%s200 + $0x48] sm:$0xf]
      %v232 = vld [vmem:[%s200 + $0x4c] sm:$0xf]
      %v233 = vld [vmem:[%s200 + $0x50] sm:$0xf]
      %v234 = vld [vmem:[%s200 + $0x54] sm:$0xf]
      %v235 = vld [vmem:[%s200 + $0x58] sm:$0xf]
      %v236 = vld [vmem:[%s200 + $0x5c] sm:$0xf]
      %v237 = vld [vmem:[%s200 + $0x60] sm:$0xf]
      %v238 = vld [vmem:[%s200 + $0x64] sm:$0xf]
      %v239 = vld [vmem:[%s200 + $0x68] sm:$0xf]
      %v240 = vld [vmem:[%s200 + $0x6c] sm:$0xf]
      %v241 = vld [vmem:[%s200 + $0x70] sm:$0xf]
      %v242 = vld [vmem:[%s200 + $0x74] sm:$0xf]
      %v243 = vld [vmem:[%s200 + $0x78] sm:$0xf]
      %v244 = vld [vmem:[%s200 + $0x7c] sm:$0xf]
      %v245 = vld [vmem:[%s1] sm:$0xf]
      %v246 = vld [vmem:[%s1 + $0x4] sm:$0xf]
      %v247 = vld [vmem:[%s1 + $0x8] sm:$0xf]
      %v248 = vld [vmem:[%s1 + $0xc] sm:$0xf]
      %v249 = vld [vmem:[%s1 + $0x10] sm:$0xf]
      %v250 = vld [vmem:[%s1 + $0x14] sm:$0xf]
      %v251 = vld [vmem:[%s1 + $0x18] sm:$0xf]
      %v252 = vld [vmem:[%s1 + $0x1c] sm:$0xf]
      %v253 = vld [vmem:[%s1 + $0x20] sm:$0xf]
      %v254 = vld [vmem:[%s1 + $0x24] sm:$0xf]
      %v255 = vld [vmem:[%s1 + $0x28] sm:$0xf]
      %v256 = vld [vmem:[%s1 + $0x2c] sm:$0xf]
      %v257 = vld [vmem:[%s1 + $0x30] sm:$0xf]
      %v258 = vld [vmem:[%s1 + $0x34] sm:$0xf]
      %v259 = vld [vmem:[%s1 + $0x38] sm:$0xf]
      %v260 = vld [vmem:[%s1 + $0x3c] sm:$0xf]
      %v261 = vld [vmem:[%s2] sm:$0x1]
      %v263 = vlaneseq
      %v264 = vshrl.u32 %v263, 7
      %v265 = vsub.s32 0, %v264
      %v266 = vrot.slane %v261, %v265
      %v300 = vunpack.c.l.b16 %v213
      %v301 = vunpack.c.l.b16 %v214
      %v302 = vunpack.c.l.b16 %v215
      %v303 = vunpack.c.l.b16 %v216
      %v304 = vunpack.c.l.b16 %v217
      %v305 = vunpack.c.l.b16 %v218
      %v306 = vunpack.c.l.b16 %v219
      %v307 = vunpack.c.l.b16 %v220
      %v308 = vunpack.c.l.b16 %v221
      %v309 = vunpack.c.l.b16 %v222
      %v310 = vunpack.c.l.b16 %v223
      %v311 = vunpack.c.l.b16 %v224
      %v312 = vunpack.c.l.b16 %v225
      %v313 = vunpack.c.l.b16 %v226
      %v314 = vunpack.c.l.b16 %v227
      %v315 = vunpack.c.l.b16 %v228
      %v316 = vunpack.c.l.b16 %v229
      %v317 = vunpack.c.l.b16 %v230
      %v318 = vunpack.c.l.b16 %v231
      %v319 = vunpack.c.l.b16 %v232
      %v320 = vunpack.c.l.b16 %v233
      %v321 = vunpack.c.l.b16 %v234
      %v322 = vunpack.c.l.b16 %v235
      %v323 = vunpack.c.l.b16 %v236
      %v324 = vunpack.c.l.b16 %v237
      %v325 = vunpack.c.l.b16 %v238
      %v326 = vunpack.c.l.b16 %v239
      %v327 = vunpack.c.l.b16 %v240
      %v328 = vunpack.c.l.b16 %v241
      %v329 = vunpack.c.l.b16 %v242
      %v330 = vunpack.c.l.b16 %v243
      %v331 = vunpack.c.l.b16 %v244
      %v332 = vpack.c.b16 %v301, %v300
      %v333 = vpack.c.b16 %v303, %v302
      %v334 = vpack.c.b16 %v305, %v304
      %v335 = vpack.c.b16 %v307, %v306
      %v336 = vpack.c.b16 %v309, %v308
      %v337 = vpack.c.b16 %v311, %v310
      %v338 = vpack.c.b16 %v313, %v312
      %v339 = vpack.c.b16 %v315, %v314
      %v340 = vpack.c.b16 %v317, %v316
      %v341 = vpack.c.b16 %v319, %v318
      %v342 = vpack.c.b16 %v321, %v320
      %v343 = vpack.c.b16 %v323, %v322
      %v344 = vpack.c.b16 %v325, %v324
      %v345 = vpack.c.b16 %v327, %v326
      %v346 = vpack.c.b16 %v329, %v328
      %v347 = vpack.c.b16 %v331, %v330
      %v380 = vunpack.c.l.b16 %v245
      %v381 = vunpack.c.l.b16 %v246
      %v382 = vunpack.c.l.b16 %v247
      %v383 = vunpack.c.l.b16 %v248
      %v384 = vunpack.c.l.b16 %v249
      %v385 = vunpack.c.l.b16 %v250
      %v386 = vunpack.c.l.b16 %v251
      %v387 = vunpack.c.l.b16 %v252
      %v388 = vunpack.c.l.b16 %v253
      %v389 = vunpack.c.l.b16 %v254
      %v390 = vunpack.c.l.b16 %v255
      %v391 = vunpack.c.l.b16 %v256
      %v392 = vunpack.c.l.b16 %v257
      %v393 = vunpack.c.l.b16 %v258
      %v394 = vunpack.c.l.b16 %v259
      %v395 = vunpack.c.l.b16 %v260
      %v396 = vpack.c.b16 %v381, %v380
      %v397 = vpack.c.b16 %v383, %v382
      %v398 = vpack.c.b16 %v385, %v384
      %v399 = vpack.c.b16 %v387, %v386
      %v400 = vpack.c.b16 %v389, %v388
      %v401 = vpack.c.b16 %v391, %v390
      %v402 = vpack.c.b16 %v393, %v392
      %v403 = vpack.c.b16 %v395, %v394
      %412 = vmatprep.subr.bf16.mxu0 0
      %413 = vmatpush1.bf16.msra.mxu0 %v396
      %414 = vmatprep.subr.bf16.mxu0 0
      %415 = vmatpush1.bf16.msra.mxu0 %v397
      %416 = vmatprep.subr.bf16.mxu0 0
      %417 = vmatpush1.bf16.msra.mxu0 %v398
      %418 = vmatprep.subr.bf16.mxu0 0
      %419 = vmatpush1.bf16.msra.mxu0 %v399
      %420 = vmatprep.subr.bf16.mxu0 0
      %421 = vmatpush1.bf16.msra.mxu0 %v400
      %422 = vmatprep.subr.bf16.mxu0 0
      %423 = vmatpush1.bf16.msra.mxu0 %v401
      %424 = vmatprep.subr.bf16.mxu0 0
      %425 = vmatpush1.bf16.msra.mxu0 %v402
      %426 = vmatprep.subr.bf16.mxu0 0
      %427 = vmatpush1.bf16.msra.mxu0 %v403
      %428 = vmatprep.subr.bf16.mxu0 0
      %429 = vmatpush1.bf16.msra.mxu0 0
      %430 = vmatprep.subr.bf16.mxu0 0
      %431 = vmatpush1.bf16.msra.mxu0 0
      %432 = vmatprep.subr.bf16.mxu0 0
      %433 = vmatpush1.bf16.msra.mxu0 0
      %434 = vmatprep.subr.bf16.mxu0 0
      %435 = vmatpush1.bf16.msra.mxu0 0
      %436 = vmatprep.subr.bf16.mxu0 0
      %437 = vmatpush1.bf16.msra.mxu0 0
      %438 = vmatprep.subr.bf16.mxu0 0
      %439 = vmatpush1.bf16.msra.mxu0 0
      %440 = vmatprep.subr.bf16.mxu0 0
      %441 = vmatpush1.bf16.msra.mxu0 0
      %442 = vmatprep.subr.bf16.mxu0 0
      %443 = vmatpush1.bf16.msra.mxu0 0
      %444 = vmatprep.mubr.bf16.mxu0 0
      %445 = vmatmul.mubr.bf16.gmra.mrb[0].mxu0 %v332
      %v446 = vpop.f32.mrb[0].mxu0
      %v447 = vadd.f32 %v266, %v446
      %v448 = vpop.f32.mrb[0].mxu0
      %v449 = vpop.f32.mrb[0].mxu0
      %v450 = vadd.f32 %v266, %v449
      %v451 = vpop.f32.mrb[0].mxu0
      %452 = vmatprep.mubr.bf16.mxu0 0
      %453 = vmatmul.mubr.bf16.gmra.mrb[0].mxu0 %v333
      %v454 = vpop.f32.mrb[0].mxu0
      %v455 = vadd.f32 %v266, %v454
      %v456 = vpop.f32.mrb[0].mxu0
      %v457 = vpop.f32.mrb[0].mxu0
      %v458 = vadd.f32 %v266, %v457
      %v459 = vpop.f32.mrb[0].mxu0
      %460 = vmatprep.mubr.bf16.mxu0 0
      %461 = vmatmul.mubr.bf16.gmra.mrb[0].mxu0 %v334
      %v462 = vpop.f32.mrb[0].mxu0
      %v463 = vadd.f32 %v266, %v462
      %v464 = vpop.f32.mrb[0].mxu0
      %v465 = vpop.f32.mrb[0].mxu0
      %v466 = vadd.f32 %v266, %v465
      %v467 = vpop.f32.mrb[0].mxu0
      %468 = vmatprep.mubr.bf16.mxu0 0
      %469 = vmatmul.mubr.bf16.gmra.mrb[0].mxu0 %v335
      %v470 = vpop.f32.mrb[0].mxu0
      %v471 = vadd.f32 %v266, %v470
      %v472 = vpop.f32.mrb[0].mxu0
      %v473 = vpop.f32.mrb[0].mxu0
      %v474 = vadd.f32 %v266, %v473
      %v475 = vpop.f32.mrb[0].mxu0
      %476 = vmatprep.mubr.bf16.mxu0 0
      %477 = vmatmul.mubr.bf16.gmra.mrb[0].mxu0 %v336
      %v478 = vpop.f32.mrb[0].mxu0
      %v479 = vadd.f32 %v266, %v478
      %v480 = vpop.f32.mrb[0].mxu0
      %v481 = vpop.f32.mrb[0].mxu0
      %v482 = vadd.f32 %v266, %v481
      %v483 = vpop.f32.mrb[0].mxu0
      %484 = vmatprep.mubr.bf16.mxu0 0
      %485 = vmatmul.mubr.bf16.gmra.mrb[0].mxu0 %v337
      %v486 = vpop.f32.mrb[0].mxu0
      %v487 = vadd.f32 %v266, %v486
      %v488 = vpop.f32.mrb[0].mxu0
      %v489 = vpop.f32.mrb[0].mxu0
      %v490 = vadd.f32 %v266, %v489
      %v491 = vpop.f32.mrb[0].mxu0
      %492 = vmatprep.mubr.bf16.mxu0 0
      %493 = vmatmul.mubr.bf16.gmra.mrb[0].mxu0 %v338
      %v494 = vpop.f32.mrb[0].mxu0
      %v495 = vadd.f32 %v266, %v494
      %v496 = vpop.f32.mrb[0].mxu0
      %v497 = vpop.f32.mrb[0].mxu0
      %v498 = vadd.f32 %v266, %v497
      %v499 = vpop.f32.mrb[0].mxu0
      %500 = vmatprep.mubr.bf16.mxu0 0
      %501 = vmatmul.mubr.bf16.gmra.mrb[0].mxu0 %v339
      %v502 = vpop.f32.mrb[0].mxu0
      %v503 = vadd.f32 %v266, %v502
      %v504 = vpop.f32.mrb[0].mxu0
      %v505 = vpop.f32.mrb[0].mxu0
      %v506 = vadd.f32 %v266, %v505
      %v507 = vpop.f32.mrb[0].mxu0
      %508 = vmatprep.mubr.bf16.mxu0 0
      %509 = vmatmul.mubr.bf16.gmra.mrb[0].mxu0 %v340
      %v510 = vpop.f32.mrb[0].mxu0
      %v511 = vadd.f32 %v266, %v510
      %v512 = vpop.f32.mrb[0].mxu0
      %v513 = vpop.f32.mrb[0].mxu0
      %v514 = vadd.f32 %v266, %v513
      %v515 = vpop.f32.mrb[0].mxu0
      %516 = vmatprep.mubr.bf16.mxu0 0
      %517 = vmatmul.mubr.bf16.gmra.mrb[0].mxu0 %v341
      %v518 = vpop.f32.mrb[0].mxu0
      %v519 = vadd.f32 %v266, %v518
      %v520 = vpop.f32.mrb[0].mxu0
      %v521 = vpop.f32.mrb[0].mxu0
      %v522 = vadd.f32 %v266, %v521
      %v523 = vpop.f32.mrb[0].mxu0
      %524 = vmatprep.mubr.bf16.mxu0 0
      %525 = vmatmul.mubr.bf16.gmra.mrb[0].mxu0 %v342
      %v526 = vpop.f32.mrb[0].mxu0
      %v527 = vadd.f32 %v266, %v526
      %v528 = vpop.f32.mrb[0].mxu0
      %v529 = vpop.f32.mrb[0].mxu0
      %v530 = vadd.f32 %v266, %v529
      %v531 = vpop.f32.mrb[0].mxu0
      %532 = vmatprep.mubr.bf16.mxu0 0
      %533 = vmatmul.mubr.bf16.gmra.mrb[0].mxu0 %v343
      %v534 = vpop.f32.mrb[0].mxu0
      %v535 = vadd.f32 %v266, %v534
      %v536 = vpop.f32.mrb[0].mxu0
      %v537 = vpop.f32.mrb[0].mxu0
      %v538 = vadd.f32 %v266, %v537
      %v539 = vpop.f32.mrb[0].mxu0
      %540 = vmatprep.mubr.bf16.mxu0 0
      %541 = vmatmul.mubr.bf16.gmra.mrb[0].mxu0 %v344
      %v542 = vpop.f32.mrb[0].mxu0
      %v543 = vadd.f32 %v266, %v542
      %v544 = vpop.f32.mrb[0].mxu0
      %v545 = vpop.f32.mrb[0].mxu0
      %v546 = vadd.f32 %v266, %v545
      %v547 = vpop.f32.mrb[0].mxu0
      %548 = vmatprep.mubr.bf16.mxu0 0
      %549 = vmatmul.mubr.bf16.gmra.mrb[0].mxu0 %v345
      %v550 = vpop.f32.mrb[0].mxu0
      %v551 = vadd.f32 %v266, %v550
      %v552 = vpop.f32.mrb[0].mxu0
      %v553 = vpop.f32.mrb[0].mxu0
      %v554 = vadd.f32 %v266, %v553
      %v555 = vpop.f32.mrb[0].mxu0
      %556 = vmatprep.mubr.bf16.mxu0 0
      %557 = vmatmul.mubr.bf16.gmra.mrb[0].mxu0 %v346
      %v558 = vpop.f32.mrb[0].mxu0
      %v559 = vadd.f32 %v266, %v558
      %v560 = vpop.f32.mrb[0].mxu0
      %v561 = vpop.f32.mrb[0].mxu0
      %v562 = vadd.f32 %v266, %v561
      %v563 = vpop.f32.mrb[0].mxu0
      %564 = vmatprep.mubr.bf16.mxu0 0
      %565 = vmatmul.mubr.bf16.gmra.mrb[0].mxu0 %v347
      %v566 = vpop.f32.mrb[0].mxu0
      %v567 = vadd.f32 %v266, %v566
      %v568 = vpop.f32.mrb[0].mxu0
      %v569 = vpop.f32.mrb[0].mxu0
      %v570 = vadd.f32 %v266, %v569
      %v571 = vpop.f32.mrb[0].mxu0
      %572 = vdwg.mxu0
      %573 = vst [vmem:[%s206] sm:$0xff] %v447
      %574 = vst [vmem:[%s206 + $0x8] sm:$0xff] %v450
      %575 = vst [vmem:[%s206 + $0x10] sm:$0xff] %v455
      %576 = vst [vmem:[%s206 + $0x18] sm:$0xff] %v458
      %577 = vst [vmem:[%s206 + $0x20] sm:$0xff] %v463
      %578 = vst [vmem:[%s206 + $0x28] sm:$0xff] %v466
      %579 = vst [vmem:[%s206 + $0x30] sm:$0xff] %v471
      %580 = vst [vmem:[%s206 + $0x38] sm:$0xff] %v474
      %581 = vst [vmem:[%s206 + $0x40] sm:$0xff] %v479
      %582 = vst [vmem:[%s206 + $0x48] sm:$0xff] %v482
      %583 = vst [vmem:[%s206 + $0x50] sm:$0xff] %v487
      %584 = vst [vmem:[%s206 + $0x58] sm:$0xff] %v490
      %585 = vst [vmem:[%s206 + $0x60] sm:$0xff] %v495
      %586 = vst [vmem:[%s206 + $0x68] sm:$0xff] %v498
      %587 = vst [vmem:[%s206 + $0x70] sm:$0xff] %v503
      %588 = vst [vmem:[%s206 + $0x78] sm:$0xff] %v506
      %589 = vst [vmem:[%s206 + $0x80] sm:$0xff] %v511
      %590 = vst [vmem:[%s206 + $0x88] sm:$0xff] %v514
      %591 = vst [vmem:[%s206 + $0x90] sm:$0xff] %v519
      %592 = vst [vmem:[%s206 + $0x98] sm:$0xff] %v522
      %593 = vst [vmem:[%s206 + $0xa0] sm:$0xff] %v527
      %594 = vst [vmem:[%s206 + $0xa8] sm:$0xff] %v530
      %595 = vst [vmem:[%s206 + $0xb0] sm:$0xff] %v535
      %596 = vst [vmem:[%s206 + $0xb8] sm:$0xff] %v538
      %597 = vst [vmem:[%s206 + $0xc0] sm:$0xff] %v543
      %598 = vst [vmem:[%s206 + $0xc8] sm:$0xff] %v546
      %599 = vst [vmem:[%s206 + $0xd0] sm:$0xff] %v551
      %600 = vst [vmem:[%s206 + $0xd8] sm:$0xff] %v554
      %601 = vst [vmem:[%s206 + $0xe0] sm:$0xff] %v559
      %602 = vst [vmem:[%s206 + $0xe8] sm:$0xff] %v562
      %603 = vst [vmem:[%s206 + $0xf0] sm:$0xff] %v567
      %604 = vst [vmem:[%s206 + $0xf8] sm:$0xff] %v570
      %v605 = vadd.f32 %v447, %v450
      %v606 = vadd.f32 %v605, %v455
      %v607 = vadd.f32 %v606, %v458
      %v608 = vadd.f32 %v607, %v463
      %v609 = vadd.f32 %v608, %v466
      %v610 = vadd.f32 %v609, %v471
      %v611 = vadd.f32 %v610, %v474
      %v612 = vadd.f32 %v611, %v479
      %v613 = vadd.f32 %v612, %v482
      %v614 = vadd.f32 %v613, %v487
      %v615 = vadd.f32 %v614, %v490
      %v616 = vadd.f32 %v615, %v495
      %v617 = vadd.f32 %v616, %v498
      %v618 = vadd.f32 %v617, %v503
      %v619 = vadd.f32 %v618, %v506
      %v620 = vadd.f32 %v619, %v511
      %v621 = vadd.f32 %v620, %v514
      %v622 = vadd.f32 %v621, %v519
      %v623 = vadd.f32 %v622, %v522
      %v624 = vadd.f32 %v623, %v527
      %v625 = vadd.f32 %v624, %v530
      %v626 = vadd.f32 %v625, %v535
      %v627 = vadd.f32 %v626, %v538
      %v628 = vadd.f32 %v627, %v543
      %v629 = vadd.f32 %v628, %v546
      %v630 = vadd.f32 %v629, %v551
      %v631 = vadd.f32 %v630, %v554
      %v632 = vadd.f32 %v631, %v559
      %v633 = vadd.f32 %v632, %v562
      %v634 = vadd.f32 %v633, %v567
      %v635 = vadd.f32 %v634, %v570
      %v636 = vrot.slane %v635, 4
      %v637 = vadd.f32 %v635, %v636
      %v638 = vrot.slane %v637, 2
      %v639 = vadd.f32 %v637, %v638
      %v640 = vrot.slane %v639, 1
      %v641 = vadd.f32 %v639, %v640
      %v642 = vmul.f32 %v447, %v447
      %v643 = vmul.f32 %v450, %v450
      %v644 = vmul.f32 %v455, %v455
      %v645 = vmul.f32 %v458, %v458
      %v646 = vmul.f32 %v463, %v463
      %v647 = vmul.f32 %v466, %v466
      %v648 = vmul.f32 %v471, %v471
      %v649 = vmul.f32 %v474, %v474
      %v650 = vmul.f32 %v479, %v479
      %v651 = vmul.f32 %v482, %v482
      %v652 = vmul.f32 %v487, %v487
      %v653 = vmul.f32 %v490, %v490
      %v654 = vmul.f32 %v495, %v495
      %v655 = vmul.f32 %v498, %v498
      %v656 = vmul.f32 %v503, %v503
      %v657 = vmul.f32 %v506, %v506
      %v658 = vmul.f32 %v511, %v511
      %v659 = vmul.f32 %v514, %v514
      %v660 = vmul.f32 %v519, %v519
      %v661 = vmul.f32 %v522, %v522
      %v662 = vmul.f32 %v527, %v527
      %v663 = vmul.f32 %v530, %v530
      %v664 = vmul.f32 %v535, %v535
      %v665 = vmul.f32 %v538, %v538
      %v666 = vmul.f32 %v543, %v543
      %v667 = vmul.f32 %v546, %v546
      %v668 = vmul.f32 %v551, %v551
      %v669 = vmul.f32 %v554, %v554
      %v670 = vmul.f32 %v559, %v559
      %v671 = vmul.f32 %v562, %v562
      %v672 = vmul.f32 %v567, %v567
      %v673 = vmul.f32 %v570, %v570
      %v674 = vadd.f32 %v642, %v643
      %v675 = vadd.f32 %v674, %v644
      %v676 = vadd.f32 %v675, %v645
      %v677 = vadd.f32 %v676, %v646
      %v678 = vadd.f32 %v677, %v647
      %v679 = vadd.f32 %v678, %v648
      %v680 = vadd.f32 %v679, %v649
      %v681 = vadd.f32 %v680, %v650
      %v682 = vadd.f32 %v681, %v651
      %v683 = vadd.f32 %v682, %v652
      %v684 = vadd.f32 %v683, %v653
      %v685 = vadd.f32 %v684, %v654
      %v686 = vadd.f32 %v685, %v655
      %v687 = vadd.f32 %v686, %v656
      %v688 = vadd.f32 %v687, %v657
      %v689 = vadd.f32 %v688, %v658
      %v690 = vadd.f32 %v689, %v659
      %v691 = vadd.f32 %v690, %v660
      %v692 = vadd.f32 %v691, %v661
      %v693 = vadd.f32 %v692, %v662
      %v694 = vadd.f32 %v693, %v663
      %v695 = vadd.f32 %v694, %v664
      %v696 = vadd.f32 %v695, %v665
      %v697 = vadd.f32 %v696, %v666
      %v698 = vadd.f32 %v697, %v667
      %v699 = vadd.f32 %v698, %v668
      %v700 = vadd.f32 %v699, %v669
      %v701 = vadd.f32 %v700, %v670
      %v702 = vadd.f32 %v701, %v671
      %v703 = vadd.f32 %v702, %v672
      %v704 = vadd.f32 %v703, %v673
      %v705 = vrot.slane %v704, 4
      %v706 = vadd.f32 %v704, %v705
      %v707 = vrot.slane %v706, 2
      %v708 = vadd.f32 %v706, %v707
      %v709 = vrot.slane %v708, 1
      %v710 = vadd.f32 %v708, %v709
      %v711 = vlaneseq
      %v712 = vshrl.u32 %v711, 7
      %vm713 = vcmp.eq.s32.totalorder %v712, 0
      %vm714 = vcmp.eq.s32.totalorder %v712, 1
      %v715 = vsel %vm714, %v710, 0.0
      %v716 = vsel %vm713, %v641, %v715
      %717 = vst [vmem:[%s211] sm:$0xff] %v716
      %s718 = smul.u32 32, %s16
      %p719 = scmp.lt.s32.totalorder %s718, 63
      %s720 = scalar_select %p719, %s718, 63
      %s721 = smul.addr %s720, 8
      %s722 = scalar_lea.vmem %s3, %s721
      %p723 = scmp.lt.s32.totalorder %s16, 1
      %s724 = scalar_select %p723, %s16, 1
      %s725 = smul.addr %s724, 8
      %s726 = scalar_lea.vmem %s4, %s725
      // Predicated region
      $region33: #{self_attention_block.3} parent=31 // pred_check
        %p727 = pneg %p102
      $region34: #{self_attention_block.3} parent=31 // pred_check_branch
        %729 = sbr.rel (%p727) target = $region36
      $region35: #{self_attention_block.3} parent=31 // pred_region
        %s730 = smul.u32 32, %s16
      $region36: #{self_attention_block.3} parent=31 // pred_fallthru
        _
      // Predicated region
      $region37: #{self_attention_block.3} parent=31 // pred_check
        %p731 = pneg %p128
      $region38: #{self_attention_block.3} parent=31 // pred_check_branch
        %733 = sbr.rel (%p731) target = $region40
      $region39: #{self_attention_block.3} parent=31 // pred_region
        _
      $region40: #{self_attention_block.3} parent=31 // pred_fallthru
        _
    $region32: #{self_attention_block.3} parent=5 // pred_fallthru
      _
    %p734 = scmp.le.s32.totalorder 2, %s11
    // Predicated region
    $region41: #{self_attention_block.3} parent=5 // pred_check
      %p735 = pneg %p734
    $region42: #{self_attention_block.3} parent=5 // pred_check_branch
      %737 = sbr.rel (%p735) target = $region44
    $region43: #{self_attention_block.3} parent=5 // pred_region
      %s738 = ssub.s32 %s11, 2
      // Predicated region
      $region45: #{self_attention_block.3} parent=43 // pred_check
        %p739 = pneg %p108
      $region46: #{self_attention_block.3} parent=43 // pred_check_branch
        %741 = sbr.rel (%p739) target = $region48
      $region47: #{self_attention_block.3} parent=43 // pred_region
        %s742 = smul.u32 32, %s17
        %p743 = scmp.lt.s32.totalorder %s742, 63
        %s744 = scalar_select %p743, %s742, 63
        %s745 = smul.addr %s744, 8
        %s746 = scalar_lea.vmem %s3, %s745
      $region48: #{self_attention_block.3} parent=43 // pred_fallthru
        _
      // Predicated region
      $region49: #{self_attention_block.3} parent=43 // pred_check
        %p747 = pneg %p134
      $region50: #{self_attention_block.3} parent=43 // pred_check_branch
        %749 = sbr.rel (%p747) target = $region52
      $region51: #{self_attention_block.3} parent=43 // pred_region
        %p750 = scmp.lt.s32.totalorder %s17, 1
        %s751 = scalar_select %p750, %s17, 1
        %s752 = smul.addr %s751, 8
        %s753 = scalar_lea.vmem %s4, %s752
      $region52: #{self_attention_block.3} parent=43 // pred_fallthru
        _
    $region44: #{self_attention_block.3} parent=5 // pred_fallthru
      _
  $region6: #{self_attention_block.3} parent=0 // loop_footer
    %s15 = sadd.s32 1, %s11
  $region7: #{self_attention_block.3} parent=0 // loop_footer_branch
    %10 = sbr.rel target = $region3
  $region8: #{self_attention_block.3} parent=0 // loop_exit
    _

// kernel: self_attention_block.4
$region0: #{self_attention_block.4}
  #allocation0 [shape = 'u32[]', space=smem, size = 0x4, offset = 0x4, fixed_abs, tag = 'smem constant byte address 0x4 - core index']
  #allocation1 [shape = 'u32[144,128]{1,0:T(1,128)}', space=vmem, size = 0x12000, scoped, tag = 'internal scratch']
  %s0 = inlined_call_operand.vmem [shape: bf16[2,342,128], index: 0, kind: input, shape index: {}]
  %s1 = inlined_call_operand.vmem [shape: bf16[9,128,128], index: 1, kind: input, shape index: {}]
  %s2 = inlined_call_operand.vmem [shape: f32[1,128], index: 2, kind: input, shape index: {}]
  %s3 = inlined_call_operand.vmem [shape: bf16[128,128], index: 3, kind: input, shape index: {}]
  %s4 = inlined_call_operand.vmem [shape: f32[1,128], index: 4, kind: input, shape index: {}]
  %s5 = inlined_call_operand.vmem [shape: f32[2,288,128], index: 5, kind: output, shape index: {}]
  %s6 = sld [smem:[#allocation0]]
  $region53: #{self_attention_block.4} parent=0
    _
  %s8 = ssub.s32 1, %s6
  %s9 = scalar_select 0, %s8, %s6
  loop: start=0, step=1, limit=4
  $region2: #{self_attention_block.4} parent=0 // loop_pre_header
    _
  $region3: #{self_attention_block.4} parent=0 // loop_header
    %s11 = sphi 0, %s15
    %p12 = scmp.ge.s32.totalorder %s11, 4
    %s21 = sphi 0, %s23
    %s24 = sphi 0, %s21
    %s25 = sphi 0, %s24
    %s41 = sphi 0, %s25
    %s45 = sphi 0, %s45
    %s47 = sphi 0, %s45
    %s48 = sphi 0, %s47
    %s62 = sphi 0, %s48
    %s66 = sphi 0, %s66
    %s68 = sphi 0, %s66
    %s69 = sphi 0, %s68
    %s83 = sphi 0, %s69
    %s87 = sphi 0, %s87
    %s89 = sphi 0, %s87
    %s90 = sphi 0, %s89
    %s104 = sphi 0, %s90
    %s108 = sphi 0, %s108
    %s110 = sphi 0, %s108
    %s111 = sphi 0, %s110
    %s125 = sphi 0, %s111
    %s131 = sphi 0, %s133
    %s134 = sphi 0, %s131
    %s135 = sphi 0, %s134
    %s151 = sphi 0, %s135
  $region4: #{self_attention_block.4} parent=0 // loop_header_branch
    %14 = sbr.rel (%p12) target = $region8
  $region5: #{self_attention_block.4} parent=0 // loop_body
    %s16 = ssub.s32 %s11, 1
    %s17 = ssub.s32 %s11, 2
    %s18 = sadd.s32 %s11, 1
    %s19 = ssub.s32 %s11, %s18
    %p20 = scmp.eq.s32.totalorder %s19, 0
    %s22 = sadd.s32 %s21, 1
    %s23 = scalar_select %p20, %s21, %s22
    %p26 = pneg %p20
    %p27 = scmp.eq.s32.totalorder %s11, 1
    %p28 = por %p26, %p27
    %p29 = scmp.ne.s32.totalorder %s21, %s24
    %p30 = scmp.eq.s32.totalorder %s11, 0
    %p31 = por %p29, %p30
    %p32 = scmp.ne.s32.totalorder %s21, %s24
    %p33 = scmp.eq.s32.totalorder %s16, 1
    %p34 = por %p32, %p33
    %p35 = scmp.ne.s32.totalorder %s24, %s25
    %p36 = scmp.eq.s32.totalorder %s16, 0
    %p37 = por %p35, %p36
    %p38 = scmp.ne.s32.totalorder %s24, %s25
    %p39 = scmp.eq.s32.totalorder %s17, 1
    %p40 = por %p38, %p39
    %p42 = scmp.ne.s32.totalorder %s25, %s41
    %p43 = scmp.eq.s32.totalorder %s17, 0
    %p44 = por %p42, %p43
    %s46 = sadd.s32 %s45, 1
    %p49 = scmp.eq.s32.totalorder %s11, 1
    %p50 = scmp.ne.s32.totalorder %s45, %s47
    %p51 = scmp.eq.s32.totalorder %s11, 0
    %p52 = por %p50, %p51
    %p53 = scmp.ne.s32.totalorder %s45, %s47
    %p54 = scmp.eq.s32.totalorder %s16, 1
    %p55 = por %p53, %p54
    %p56 = scmp.ne.s32.totalorder %s47, %s48
    %p57 = scmp.eq.s32.totalorder %s16, 0
    %p58 = por %p56, %p57
    %p59 = scmp.ne.s32.totalorder %s47, %s48
    %p60 = scmp.eq.s32.totalorder %s17, 1
    %p61 = por %p59, %p60
    %p63 = scmp.ne.s32.totalorder %s48, %s62
    %p64 = scmp.eq.s32.totalorder %s17, 0
    %p65 = por %p63, %p64
    %s67 = sadd.s32 %s66, 1
    %p70 = scmp.eq.s32.totalorder %s11, 1
    %p71 = scmp.ne.s32.totalorder %s66, %s68
    %p72 = scmp.eq.s32.totalorder %s11, 0
    %p73 = por %p71, %p72
    %p74 = scmp.ne.s32.totalorder %s66, %s68
    %p75 = scmp.eq.s32.totalorder %s16, 1
    %p76 = por %p74, %p75
    %p77 = scmp.ne.s32.totalorder %s68, %s69
    %p78 = scmp.eq.s32.totalorder %s16, 0
    %p79 = por %p77, %p78
    %p80 = scmp.ne.s32.totalorder %s68, %s69
    %p81 = scmp.eq.s32.totalorder %s17, 1
    %p82 = por %p80, %p81
    %p84 = scmp.ne.s32.totalorder %s69, %s83
    %p85 = scmp.eq.s32.totalorder %s17, 0
    %p86 = por %p84, %p85
    %s88 = sadd.s32 %s87, 1
    %p91 = scmp.eq.s32.totalorder %s11, 1
    %p92 = scmp.ne.s32.totalorder %s87, %s89
    %p93 = scmp.eq.s32.totalorder %s11, 0
    %p94 = por %p92, %p93
    %p95 = scmp.ne.s32.totalorder %s87, %s89
    %p96 = scmp.eq.s32.totalorder %s16, 1
    %p97 = por %p95, %p96
    %p98 = scmp.ne.s32.totalorder %s89, %s90
    %p99 = scmp.eq.s32.totalorder %s16, 0
    %p100 = por %p98, %p99
    %p101 = scmp.ne.s32.totalorder %s89, %s90
    %p102 = scmp.eq.s32.totalorder %s17, 1
    %p103 = por %p101, %p102
    %p105 = scmp.ne.s32.totalorder %s90, %s104
    %p106 = scmp.eq.s32.totalorder %s17, 0
    %p107 = por %p105, %p106
    %s109 = sadd.s32 %s108, 1
    %p112 = scmp.eq.s32.totalorder %s11, 1
    %p113 = scmp.ne.s32.totalorder %s108, %s110
    %p114 = scmp.eq.s32.totalorder %s11, 0
    %p115 = por %p113, %p114
    %p116 = scmp.ne.s32.totalorder %s108, %s110
    %p117 = scmp.eq.s32.totalorder %s16, 1
    %p118 = por %p116, %p117
    %p119 = scmp.ne.s32.totalorder %s110, %s111
    %p120 = scmp.eq.s32.totalorder %s16, 0
    %p121 = por %p119, %p120
    %p122 = scmp.ne.s32.totalorder %s110, %s111
    %p123 = scmp.eq.s32.totalorder %s17, 1
    %p124 = por %p122, %p123
    %p126 = scmp.ne.s32.totalorder %s111, %s125
    %p127 = scmp.eq.s32.totalorder %s17, 0
    %p128 = por %p126, %p127
    %s129 = ssub.s32 %s11, %s18
    %p130 = scmp.eq.s32.totalorder %s129, 0
    %s132 = sadd.s32 %s131, 1
    %s133 = scalar_select %p130, %s131, %s132
    %p136 = pneg %p130
    %p137 = scmp.eq.s32.totalorder %s11, 1
    %p138 = por %p136, %p137
    %p139 = scmp.ne.s32.totalorder %s131, %s134
    %p140 = scmp.eq.s32.totalorder %s11, 0
    %p141 = por %p139, %p140
    %p142 = scmp.ne.s32.totalorder %s131, %s134
    %p143 = scmp.eq.s32.totalorder %s16, 1
    %p144 = por %p142, %p143
    %p145 = scmp.ne.s32.totalorder %s134, %s135
    %p146 = scmp.eq.s32.totalorder %s16, 0
    %p147 = por %p145, %p146
    %p148 = scmp.ne.s32.totalorder %s134, %s135
    %p149 = scmp.eq.s32.totalorder %s17, 1
    %p150 = por %p148, %p149
    %p152 = scmp.ne.s32.totalorder %s135, %s151
    %p153 = scmp.eq.s32.totalorder %s17, 0
    %p154 = por %p152, %p153
    %p155 = scmp.le.s32.totalorder 1, %s11
    %p156 = scmp.lt.s32.totalorder %s11, 3
    %p157 = pnand %p155, %p156
    %p158 = pneg %p157
    // Predicated region
    $region9: #{self_attention_block.4} parent=5 // pred_check
      _
    $region10: #{self_attention_block.4} parent=5 // pred_check_branch
      %160 = sbr.rel (%p157) target = $region12
    $region11: #{self_attention_block.4} parent=5 // pred_region
      %s161 = ssub.s32 %s11, 1
      // Predicated region
      $region13: #{self_attention_block.4} parent=11 // pred_check
        %p162 = pneg %p58
      $region14: #{self_attention_block.4} parent=11 // pred_check_branch
        %164 = sbr.rel (%p162) target = $region16
      $region15: #{self_attention_block.4} parent=11 // pred_region
        _
      $region16: #{self_attention_block.4} parent=11 // pred_fallthru
        _
      // Predicated region
      $region17: #{self_attention_block.4} parent=11 // pred_check
        %p165 = pneg %p79
      $region18: #{self_attention_block.4} parent=11 // pred_check_branch
        %167 = sbr.rel (%p165) target = $region20
      $region19: #{self_attention_block.4} parent=11 // pred_region
        _
      $region20: #{self_attention_block.4} parent=11 // pred_fallthru
        _
      // Predicated region
      $region21: #{self_attention_block.4} parent=11 // pred_check
        %p168 = pneg %p100
      $region22: #{self_attention_block.4} parent=11 // pred_check_branch
        %170 = sbr.rel (%p168) target = $region24
      $region23: #{self_attention_block.4} parent=11 // pred_region
        _
      $region24: #{self_attention_block.4} parent=11 // pred_fallthru
        _
      // Predicated region
      $region25: #{self_attention_block.4} parent=11 // pred_check
        %p171 = pneg %p121
      $region26: #{self_attention_block.4} parent=11 // pred_check_branch
        %173 = sbr.rel (%p171) target = $region28
      $region27: #{self_attention_block.4} parent=11 // pred_region
        _
      $region28: #{self_attention_block.4} parent=11 // pred_fallthru
        _
    $region12: #{self_attention_block.4} parent=5 // pred_fallthru
      _
    %p174 = scmp.lt.s32.totalorder %s11, 2
    // Predicated region
    $region29: #{self_attention_block.4} parent=5 // pred_check
      %p175 = pneg %p174
    $region30: #{self_attention_block.4} parent=5 // pred_check_branch
      %177 = sbr.rel (%p175) target = $region32
    $region31: #{self_attention_block.4} parent=5 // pred_region
      // Predicated region
      $region33: #{self_attention_block.4} parent=31 // pred_check
        %p178 = pneg %p31
      $region34: #{self_attention_block.4} parent=31 // pred_check_branch
        %180 = sbr.rel (%p178) target = $region36
      $region35: #{self_attention_block.4} parent=31 // pred_region
        %p181 = scmp.lt.s32.totalorder %s11, 1
        %s182 = scalar_select %p181, %s11, 1
        %s183 = smul.addr %s182, 43
        %s184 = smul.addr %s183, 4
        %s185 = scalar_lea.vmem %s0, %s184
      $region36: #{self_attention_block.4} parent=31 // pred_fallthru
        _
    $region32: #{self_attention_block.4} parent=5 // pred_fallthru
      _
    %p186 = scmp.le.s32.totalorder 1, %s11
    %p187 = scmp.lt.s32.totalorder %s11, 3
    %p188 = pnand %p186, %p187
    %p189 = pneg %p188
    // Predicated region
    $region37: #{self_attention_block.4} parent=5 // pred_check
      _
    $region38: #{self_attention_block.4} parent=5 // pred_check_branch
      %191 = sbr.rel (%p188) target = $region40
    $region39: #{self_attention_block.4} parent=5 // pred_region
      %s192 = ssub.s32 %s11, 1
      %p193 = scmp.lt.s32.totalorder %s16, 1
      %s194 = scalar_select %p193, %s16, 1
      %s195 = smul.addr %s194, 43
      %s196 = smul.addr %s195, 4
      %s197 = scalar_lea.vmem %s0, %s196
      %p198 = pneg %p37
      %p199 = pneg %p34
      %p200 = pneg %p58
      %p201 = pneg %p55
      %p202 = pneg %p79
      %p203 = pneg %p76
      %p204 = pneg %p100
      %p205 = pneg %p97
      %p206 = pneg %p121
      %p207 = pneg %p118
      %p208 = pneg %p147
      %p209 = pneg %p144
      %p210 = scmp.lt.s32.totalorder %s16, 1
      %s211 = scalar_select %p210, %s16, 1
      %s212 = smul.addr %s211, 36
      %s213 = smul.addr %s212, 8
      %s214 = scalar_lea.vmem %s5, %s213
      %p215 = scmp.lt.s32.totalorder %s16, 1
      %s216 = scalar_select %p215, %s16, 1
      %s217 = smul.addr %s216, 43
      %s218 = smul.addr %s217, 4
      %s219 = scalar_lea.vmem %s0, %s218
      %p220 = scmp.lt.s32.totalorder %s16, 1
      %s221 = scalar_select %p220, %s16, 1
      %s222 = smul.addr %s221, 36
      %s223 = smul.addr %s222, 8
      %s224 = scalar_lea.vmem %s5, %s223
      %v226 = vld [vmem:[%s219] sm:$0xf]
      %v227 = vld [vmem:[%s219 + $0x4] sm:$0xf]
      %v228 = vld [vmem:[%s219 + $0x8] sm:$0xf]
      %v229 = vld [vmem:[%s219 + $0xc] sm:$0xf]
      %v230 = vld [vmem:[%s219 + $0x10] sm:$0xf]
      %v231 = vld [vmem:[%s219 + $0x14] sm:$0xf]
      %v232 = vld [vmem:[%s219 + $0x18] sm:$0xf]
      %v233 = vld [vmem:[%s219 + $0x1c] sm:$0xf]
      %v234 = vld [vmem:[%s219 + $0x20] sm:$0xf]
      %v235 = vld [vmem:[%s219 + $0x24] sm:$0xf]
      %v236 = vld [vmem:[%s219 + $0x28] sm:$0xf]
      %v237 = vld [vmem:[%s219 + $0x2c] sm:$0xf]
      %v238 = vld [vmem:[%s219 + $0x30] sm:$0xf]
      %v239 = vld [vmem:[%s219 + $0x34] sm:$0xf]
      %v240 = vld [vmem:[%s219 + $0x38] sm:$0xf]
      %v241 = vld [vmem:[%s219 + $0x3c] sm:$0xf]
      %v242 = vld [vmem:[%s219 + $0x40] sm:$0xf]
      %v243 = vld [vmem:[%s219 + $0x44] sm:$0xf]
      %v244 = vld [vmem:[%s219 + $0x48] sm:$0xf]
      %v245 = vld [vmem:[%s219 + $0x4c] sm:$0xf]
      %v246 = vld [vmem:[%s219 + $0x50] sm:$0xf]
      %v247 = vld [vmem:[%s219 + $0x54] sm:$0xf]
      %v248 = vld [vmem:[%s219 + $0x58] sm:$0xf]
      %v249 = vld [vmem:[%s219 + $0x5c] sm:$0xf]
      %v250 = vld [vmem:[%s219 + $0x60] sm:$0xf]
      %v251 = vld [vmem:[%s219 + $0x64] sm:$0xf]
      %v252 = vld [vmem:[%s219 + $0x68] sm:$0xf]
      %v253 = vld [vmem:[%s219 + $0x6c] sm:$0xf]
      %v254 = vld [vmem:[%s219 + $0x70] sm:$0xf]
      %v255 = vld [vmem:[%s219 + $0x74] sm:$0xf]
      %v256 = vld [vmem:[%s219 + $0x78] sm:$0xf]
      %v257 = vld [vmem:[%s219 + $0x7c] sm:$0xf]
      %v258 = vld [vmem:[%s219 + $0x80] sm:$0xf]
      %v259 = vld [vmem:[%s219 + $0x84] sm:$0xf]
      %v260 = vld [vmem:[%s219 + $0x88] sm:$0xf]
      %v261 = vld [vmem:[%s219 + $0x8c] sm:$0xf]
      %v262 = vld [vmem:[%s1] sm:$0xf]
      %v263 = vld [vmem:[%s1 + $0x4] sm:$0xf]
      %v264 = vld [vmem:[%s1 + $0x8] sm:$0xf]
      %v265 = vld [vmem:[%s1 + $0xc] sm:$0xf]
      %v266 = vld [vmem:[%s1 + $0x10] sm:$0xf]
      %v267 = vld [vmem:[%s1 + $0x14] sm:$0xf]
      %v268 = vld [vmem:[%s1 + $0x18] sm:$0xf]
      %v269 = vld [vmem:[%s1 + $0x1c] sm:$0xf]
      %v270 = vld [vmem:[%s1 + $0x20] sm:$0xf]
      %v271 = vld [vmem:[%s1 + $0x24] sm:$0xf]
      %v272 = vld [vmem:[%s1 + $0x28] sm:$0xf]
      %v273 = vld [vmem:[%s1 + $0x2c] sm:$0xf]
      %v274 = vld [vmem:[%s1 + $0x30] sm:$0xf]
      %v275 = vld [vmem:[%s1 + $0x34] sm:$0xf]
      %v276 = vld [vmem:[%s1 + $0x38] sm:$0xf]
      %v277 = vld [vmem:[%s1 + $0x3c] sm:$0xf]
      %v278 = vld [vmem:[%s219 + $0x90] sm:$0x1]
      %s279 = scalar_lea.vmem %s1, 64
      %v280 = vld [vmem:[%s279] sm:$0xf]
      %v281 = vld [vmem:[%s279 + $0x4] sm:$0xf]
      %v282 = vld [vmem:[%s279 + $0x8] sm:$0xf]
      %v283 = vld [vmem:[%s279 + $0xc] sm:$0xf]
      %v284 = vld [vmem:[%s279 + $0x10] sm:$0xf]
      %v285 = vld [vmem:[%s279 + $0x14] sm:$0xf]
      %v286 = vld [vmem:[%s279 + $0x18] sm:$0xf]
      %v287 = vld [vmem:[%s279 + $0x1c] sm:$0xf]
      %v288 = vld [vmem:[%s279 + $0x20] sm:$0xf]
      %v289 = vld [vmem:[%s279 + $0x24] sm:$0xf]
      %v290 = vld [vmem:[%s279 + $0x28] sm:$0xf]
      %v291 = vld [vmem:[%s279 + $0x2c] sm:$0xf]
      %v292 = vld [vmem:[%s279 + $0x30] sm:$0xf]
      %v293 = vld [vmem:[%s279 + $0x34] sm:$0xf]
      %v294 = vld [vmem:[%s279 + $0x38] sm:$0xf]
      %v295 = vld [vmem:[%s279 + $0x3c] sm:$0xf]
      %v333 = vunpack.c.l.b16 %v226
      %v334 = vunpack.c.l.b16 %v227
      %v335 = vunpack.c.l.b16 %v228
      %v336 = vunpack.c.l.b16 %v229
      %v337 = vunpack.c.l.b16 %v230
      %v338 = vunpack.c.l.b16 %v231
      %v339 = vunpack.c.l.b16 %v232
      %v340 = vunpack.c.l.b16 %v233
      %v341 = vunpack.c.l.b16 %v234
      %v342 = vunpack.c.l.b16 %v235
      %v343 = vunpack.c.l.b16 %v236
      %v344 = vunpack.c.l.b16 %v237
      %v345 = vunpack.c.l.b16 %v238
      %v346 = vunpack.c.l.b16 %v239
      %v347 = vunpack.c.l.b16 %v240
      %v348 = vunpack.c.l.b16 %v241
      %v349 = vunpack.c.l.b16 %v242
      %v350 = vunpack.c.l.b16 %v243
      %v351 = vunpack.c.l.b16 %v244
      %v352 = vunpack.c.l.b16 %v245
      %v353 = vunpack.c.l.b16 %v246
      %v354 = vunpack.c.l.b16 %v247
      %v355 = vunpack.c.l.b16 %v248
      %v356 = vunpack.c.l.b16 %v249
      %v357 = vunpack.c.l.b16 %v250
      %v358 = vunpack.c.l.b16 %v251
      %v359 = vunpack.c.l.b16 %v252
      %v360 = vunpack.c.l.b16 %v253
      %v361 = vunpack.c.l.b16 %v254
      %v362 = vunpack.c.l.b16 %v255
      %v363 = vunpack.c.l.b16 %v256
      %v364 = vunpack.c.l.b16 %v257
      %v365 = vunpack.c.l.b16 %v258
      %v366 = vunpack.c.l.b16 %v259
      %v367 = vunpack.c.l.b16 %v260
      %v368 = vunpack.c.l.b16 %v261
      %v369 = vunpack.c.l.b16 %v278
      %v370 = vpack.c.b16 %v334, %v333
      %v371 = vpack.c.b16 %v336, %v335
      %v372 = vpack.c.b16 %v338, %v337
      %v373 = vpack.c.b16 %v340, %v339
      %v374 = vpack.c.b16 %v342, %v341
      %v375 = vpack.c.b16 %v344, %v343
      %v376 = vpack.c.b16 %v346, %v345
      %v377 = vpack.c.b16 %v348, %v347
      %v378 = vpack.c.b16 %v350, %v349
      %v379 = vpack.c.b16 %v352, %v351
      %v380 = vpack.c.b16 %v354, %v353
      %v381 = vpack.c.b16 %v356, %v355
      %v382 = vpack.c.b16 %v358, %v357
      %v383 = vpack.c.b16 %v360, %v359
      %v384 = vpack.c.b16 %v362, %v361
      %v385 = vpack.c.b16 %v364, %v363
      %v386 = vpack.c.b16 %v366, %v365
      %v387 = vpack.c.b16 %v368, %v367
      %v388 = vpack.c.b16 %v369, %v369
      %vm389 = vsmask.f32 7424
      %v391 = vshrl.u32 %v370, 16
      %v393 = vshll.u32 %v370, 16
      %v395 = vrot.slane %v393, 1
      %v396 = vor.u32 %v391, %v395
      %v398 = vshll.u32 %v371, 16
      %v400 = vrot.slane %v398, 1
      %v401 = vsel %vm389, %v396, %v400
      %v402 = vshrl.u32 %v371, 16
      %v404 = vor.u32 %v402, %v400
      %v406 = vshll.u32 %v372, 16
      %v408 = vrot.slane %v406, 1
      %v409 = vsel %vm389, %v404, %v408
      %v410 = vshrl.u32 %v372, 16
      %v412 = vor.u32 %v410, %v408
      %v414 = vshll.u32 %v373, 16
      %v416 = vrot.slane %v414, 1
      %v417 = vsel %vm389, %v412, %v416
      %v418 = vshrl.u32 %v373, 16
      %v420 = vor.u32 %v418, %v416
      %v422 = vshll.u32 %v374, 16
      %v424 = vrot.slane %v422, 1
      %v425 = vsel %vm389, %v420, %v424
      %v426 = vshrl.u32 %v374, 16
      %v428 = vor.u32 %v426, %v424
      %v430 = vshll.u32 %v375, 16
      %v432 = vrot.slane %v430, 1
      %v433 = vsel %vm389, %v428, %v432
      %v434 = vshrl.u32 %v375, 16
      %v436 = vor.u32 %v434, %v432
      %v438 = vshll.u32 %v376, 16
      %v440 = vrot.slane %v438, 1
      %v441 = vsel %vm389, %v436, %v440
      %v442 = vshrl.u32 %v376, 16
      %v444 = vor.u32 %v442, %v440
      %v446 = vshll.u32 %v377, 16
      %v448 = vrot.slane %v446, 1
      %v449 = vsel %vm389, %v444, %v448
      %v450 = vshrl.u32 %v377, 16
      %v452 = vor.u32 %v450, %v448
      %v454 = vshll.u32 %v378, 16
      %v456 = vrot.slane %v454, 1
      %v457 = vsel %vm389, %v452, %v456
      %v458 = vshrl.u32 %v378, 16
      %v460 = vor.u32 %v458, %v456
      %v462 = vshll.u32 %v379, 16
      %v464 = vrot.slane %v462, 1
      %v465 = vsel %vm389, %v460, %v464
      %v466 = vshrl.u32 %v379, 16
      %v468 = vor.u32 %v466, %v464
      %v470 = vshll.u32 %v380, 16
      %v472 = vrot.slane %v470, 1
      %v473 = vsel %vm389, %v468, %v472
      %v474 = vshrl.u32 %v380, 16
      %v476 = vor.u32 %v474, %v472
      %v478 = vshll.u32 %v381, 16
      %v480 = vrot.slane %v478, 1
      %v481 = vsel %vm389, %v476, %v480
      %v482 = vshrl.u32 %v381, 16
      %v484 = vor.u32 %v482, %v480
      %v486 = vshll.u32 %v382, 16
      %v488 = vrot.slane %v486, 1
      %v489 = vsel %vm389, %v484, %v488
      %v490 = vshrl.u32 %v382, 16
      %v492 = vor.u32 %v490, %v488
      %v494 = vshll.u32 %v383, 16
      %v496 = vrot.slane %v494, 1
      %v497 = vsel %vm389, %v492, %v496
      %v498 = vshrl.u32 %v383, 16
      %v500 = vor.u32 %v498, %v496
      %v502 = vshll.u32 %v384, 16
      %v504 = vrot.slane %v502, 1
      %v505 = vsel %vm389, %v500, %v504
      %v506 = vshrl.u32 %v384, 16
      %v508 = vor.u32 %v506, %v504
      %v510 = vshll.u32 %v385, 16
      %v512 = vrot.slane %v510, 1
      %v513 = vsel %vm389, %v508, %v512
      %v514 = vshrl.u32 %v385, 16
      %v516 = vor.u32 %v514, %v512
      %v518 = vshll.u32 %v386, 16
      %v520 = vrot.slane %v518, 1
      %v521 = vsel %vm389, %v516, %v520
      %v522 = vshrl.u32 %v386, 16
      %v524 = vor.u32 %v522, %v520
      %v526 = vshll.u32 %v387, 16
      %v528 = vrot.slane %v526, 1
      %v529 = vsel %vm389, %v524, %v528
      %v530 = vshrl.u32 %v387, 16
      %v532 = vor.u32 %v530, %v528
      %v534 = vshll.u32 %v388, 16
      %v536 = vrot.slane %v534, 1
      %v537 = vsel %vm389, %v532, %v536
      %v572 = vunpack.c.l.b16 %v280
      %v573 = vunpack.c.l.b16 %v281
      %v574 = vunpack.c.l.b16 %v282
      %v575 = vunpack.c.l.b16 %v283
      %v576 = vunpack.c.l.b16 %v284
      %v577 = vunpack.c.l.b16 %v285
      %v578 = vunpack.c.l.b16 %v286
      %v579 = vunpack.c.l.b16 %v287
      %v580 = vunpack.c.l.b16 %v288
      %v581 = vunpack.c.l.b16 %v289
      %v582 = vunpack.c.l.b16 %v290
      %v583 = vunpack.c.l.b16 %v291
      %v584 = vunpack.c.l.b16 %v292
      %v585 = vunpack.c.l.b16 %v293
      %v586 = vunpack.c.l.b16 %v294
      %v587 = vunpack.c.l.b16 %v295
      %v588 = vpack.c.b16 %v573, %v572
      %v589 = vpack.c.b16 %v575, %v574
      %v590 = vpack.c.b16 %v577, %v576
      %v591 = vpack.c.b16 %v579, %v578
      %v592 = vpack.c.b16 %v581, %v580
      %v593 = vpack.c.b16 %v583, %v582
      %v594 = vpack.c.b16 %v585, %v584
      %v595 = vpack.c.b16 %v587, %v586
      %604 = vmatprep.subr.bf16.mxu0 0
      %605 = vmatpush1.bf16.msra.mxu0 %v588
      %606 = vmatprep.subr.bf16.mxu0 0
      %607 = vmatpush1.bf16.msra.mxu0 %v589
      %608 = vmatprep.subr.bf16.mxu0 0
      %609 = vmatpush1.bf16.msra.mxu0 %v590
      %610 = vmatprep.subr.bf16.mxu0 0
      %611 = vmatpush1.bf16.msra.mxu0 %v591
      %612 = vmatprep.subr.bf16.mxu0 0
      %613 = vmatpush1.bf16.msra.mxu0 %v592
      %614 = vmatprep.subr.bf16.mxu0 0
      %615 = vmatpush1.bf16.msra.mxu0 %v593
      %616 = vmatprep.subr.bf16.mxu0 0
      %617 = vmatpush1.bf16.msra.mxu0 %v594
      %618 = vmatprep.subr.bf16.mxu0 0
      %619 = vmatpush1.bf16.msra.mxu0 %v595
      %620 = vmatprep.subr.bf16.mxu0 0
      %621 = vmatpush1.bf16.msra.mxu0 0
      %622 = vmatprep.subr.bf16.mxu0 0
      %623 = vmatpush1.bf16.msra.mxu0 0
      %624 = vmatprep.subr.bf16.mxu0 0
      %625 = vmatpush1.bf16.msra.mxu0 0
      %626 = vmatprep.subr.bf16.mxu0 0
      %627 = vmatpush1.bf16.msra.mxu0 0
      %628 = vmatprep.subr.bf16.mxu0 0
      %629 = vmatpush1.bf16.msra.mxu0 0
      %630 = vmatprep.subr.bf16.mxu0 0
      %631 = vmatpush1.bf16.msra.mxu0 0
      %632 = vmatprep.subr.bf16.mxu0 0
      %633 = vmatpush1.bf16.msra.mxu0 0
      %634 = vmatprep.subr.bf16.mxu0 0
      %635 = vmatpush1.bf16.msra.mxu0 0
      %636 = vmatprep.mubr.bf16.mxu0 0
      %637 = vmatmul.mubr.bf16.gmra.mrb[0].mxu0 %v401
      %v638 = vpop.f32.mrb[0].mxu0
      %v639 = vadd.f32 0.0, %v638
      %v640 = vpop.f32.mrb[0].mxu0
      %v641 = vpop.f32.mrb[0].mxu0
      %v642 = vadd.f32 0.0, %v641
      %v643 = vpop.f32.mrb[0].mxu0
      %644 = vmatprep.mubr.bf16.mxu0 0
      %645 = vmatmul.mubr.bf16.gmra.mrb[0].mxu0 %v409
      %v646 = vpop.f32.mrb[0].mxu0
      %v647 = vadd.f32 0.0, %v646
      %v648 = vpop.f32.mrb[0].mxu0
      %v649 = vpop.f32.mrb[0].mxu0
      %v650 = vadd.f32 0.0, %v649
      %v651 = vpop.f32.mrb[0].mxu0
      %652 = vmatprep.mubr.bf16.mxu0 0
      %653 = vmatmul.mubr.bf16.gmra.mrb[0].mxu0 %v417
      %v654 = vpop.f32.mrb[0].mxu0
      %v655 = vadd.f32 0.0, %v654
      %v656 = vpop.f32.mrb[0].mxu0
      %v657 = vpop.f32.mrb[0].mxu0
      %v658 = vadd.f32 0.0, %v657
      %v659 = vpop.f32.mrb[0].mxu0
      %660 = vmatprep.mubr.bf16.mxu0 0
      %661 = vmatmul.mubr.bf16.gmra.mrb[0].mxu0 %v425
      %v662 = vpop.f32.mrb[0].mxu0
      %v663 = vadd.f32 0.0, %v662
      %v664 = vpop.f32.mrb[0].mxu0
      %v665 = vpop.f32.mrb[0].mxu0
      %v666 = vadd.f32 0.0, %v665
      %v667 = vpop.f32.mrb[0].mxu0
      %668 = vmatprep.mubr.bf16.mxu0 0
      %669 = vmatmul.mubr.bf16.gmra.mrb[0].mxu0 %v433
      %v670 = vpop.f32.mrb[0].mxu0
      %v671 = vadd.f32 0.0, %v670
      %v672 = vpop.f32.mrb[0].mxu0
      %v673 = vpop.f32.mrb[0].mxu0
      %v674 = vadd.f32 0.0, %v673
      %v675 = vpop.f32.mrb[0].mxu0
      %676 = vmatprep.mubr.bf16.mxu0 0
      %677 = vmatmul.mubr.bf16.gmra.mrb[0].mxu0 %v441
      %v678 = vpop.f32.mrb[0].mxu0
      %v679 = vadd.f32 0.0, %v678
      %v680 = vpop.f32.mrb[0].mxu0
      %v681 = vpop.f32.mrb[0].mxu0
      %v682 = vadd.f32 0.0, %v681
      %v683 = vpop.f32.mrb[0].mxu0
      %684 = vmatprep.mubr.bf16.mxu0 0
      %685 = vmatmul.mubr.bf16.gmra.mrb[0].mxu0 %v449
      %v686 = vpop.f32.mrb[0].mxu0
      %v687 = vadd.f32 0.0, %v686
      %v688 = vpop.f32.mrb[0].mxu0
      %v689 = vpop.f32.mrb[0].mxu0
      %v690 = vadd.f32 0.0, %v689
      %v691 = vpop.f32.mrb[0].mxu0
      %692 = vmatprep.mubr.bf16.mxu0 0
      %693 = vmatmul.mubr.bf16.gmra.mrb[0].mxu0 %v457
      %v694 = vpop.f32.mrb[0].mxu0
      %v695 = vadd.f32 0.0, %v694
      %v696 = vpop.f32.mrb[0].mxu0
      %v697 = vpop.f32.mrb[0].mxu0
      %v698 = vadd.f32 0.0, %v697
      %v699 = vpop.f32.mrb[0].mxu0
      %700 = vmatprep.mubr.bf16.mxu0 0
      %701 = vmatmul.mubr.bf16.gmra.mrb[0].mxu0 %v465
      %v702 = vpop.f32.mrb[0].mxu0
      %v703 = vadd.f32 0.0, %v702
      %v704 = vpop.f32.mrb[0].mxu0
      %v705 = vpop.f32.mrb[0].mxu0
      %v706 = vadd.f32 0.0, %v705
      %v707 = vpop.f32.mrb[0].mxu0
      %708 = vmatprep.mubr.bf16.mxu0 0
      %709 = vmatmul.mubr.bf16.gmra.mrb[0].mxu0 %v473
      %v710 = vpop.f32.mrb[0].mxu0
      %v711 = vadd.f32 0.0, %v710
      %v712 = vpop.f32.mrb[0].mxu0
      %v713 = vpop.f32.mrb[0].mxu0
      %v714 = vadd.f32 0.0, %v713
      %v715 = vpop.f32.mrb[0].mxu0
      %716 = vmatprep.mubr.bf16.mxu0 0
      %717 = vmatmul.mubr.bf16.gmra.mrb[0].mxu0 %v481
      %v718 = vpop.f32.mrb[0].mxu0
      %v719 = vadd.f32 0.0, %v718
      %v720 = vpop.f32.mrb[0].mxu0
      %v721 = vpop.f32.mrb[0].mxu0
      %v722 = vadd.f32 0.0, %v721
      %v723 = vpop.f32.mrb[0].mxu0
      %724 = vmatprep.mubr.bf16.mxu0 0
      %725 = vmatmul.mubr.bf16.gmra.mrb[0].mxu0 %v489
      %v726 = vpop.f32.mrb[0].mxu0
      %v727 = vadd.f32 0.0, %v726
      %v728 = vpop.f32.mrb[0].mxu0
      %v729 = vpop.f32.mrb[0].mxu0
      %v730 = vadd.f32 0.0, %v729
      %v731 = vpop.f32.mrb[0].mxu0
      %732 = vmatprep.mubr.bf16.mxu0 0
      %733 = vmatmul.mubr.bf16.gmra.mrb[0].mxu0 %v497
      %v734 = vpop.f32.mrb[0].mxu0
      %v735 = vadd.f32 0.0, %v734
      %v736 = vpop.f32.mrb[0].mxu0
      %v737 = vpop.f32.mrb[0].mxu0
      %v738 = vadd.f32 0.0, %v737
      %v739 = vpop.f32.mrb[0].mxu0
      %740 = vmatprep.mubr.bf16.mxu0 0
      %741 = vmatmul.mubr.bf16.gmra.mrb[0].mxu0 %v505
      %v742 = vpop.f32.mrb[0].mxu0
      %v743 = vadd.f32 0.0, %v742
      %v744 = vpop.f32.mrb[0].mxu0
      %v745 = vpop.f32.mrb[0].mxu0
      %v746 = vadd.f32 0.0, %v745
      %v747 = vpop.f32.mrb[0].mxu0
      %748 = vmatprep.mubr.bf16.mxu0 0
      %749 = vmatmul.mubr.bf16.gmra.mrb[0].mxu0 %v513
      %v750 = vpop.f32.mrb[0].mxu0
      %v751 = vadd.f32 0.0, %v750
      %v752 = vpop.f32.mrb[0].mxu0
      %v753 = vpop.f32.mrb[0].mxu0
      %v754 = vadd.f32 0.0, %v753
      %v755 = vpop.f32.mrb[0].mxu0
      %756 = vmatprep.mubr.bf16.mxu0 0
      %757 = vmatmul.mubr.bf16.gmra.mrb[0].mxu0 %v521
      %v758 = vpop.f32.mrb[0].mxu0
      %v759 = vadd.f32 0.0, %v758
      %v760 = vpop.f32.mrb[0].mxu0
      %v761 = vpop.f32.mrb[0].mxu0
      %v762 = vadd.f32 0.0, %v761
      %v763 = vpop.f32.mrb[0].mxu0
      %764 = vmatprep.mubr.bf16.mxu0 0
      %765 = vmatmul.mubr.bf16.gmra.mrb[0].mxu0 %v529
      %v766 = vpop.f32.mrb[0].mxu0
      %v767 = vadd.f32 0.0, %v766
      %v768 = vpop.f32.mrb[0].mxu0
      %v769 = vpop.f32.mrb[0].mxu0
      %v770 = vadd.f32 0.0, %v769
      %v771 = vpop.f32.mrb[0].mxu0
      %772 = vmatprep.mubr.bf16.mxu0 0
      %773 = vmatmul.mubr.bf16.gmra.mrb[0].mxu0 %v537
      %v774 = vpop.f32.mrb[0].mxu0
      %v775 = vadd.f32 0.0, %v774
      %v776 = vpop.f32.mrb[0].mxu0
      %v777 = vpop.f32.mrb[0].mxu0
      %v778 = vadd.f32 0.0, %v777
      %v779 = vpop.f32.mrb[0].mxu0
      %780 = vdwg.mxu0
      %v815 = vunpack.c.l.b16 %v262
      %v816 = vunpack.c.l.b16 %v263
      %v817 = vunpack.c.l.b16 %v264
      %v818 = vunpack.c.l.b16 %v265
      %v819 = vunpack.c.l.b16 %v266
      %v820 = vunpack.c.l.b16 %v267
      %v821 = vunpack.c.l.b16 %v268
      %v822 = vunpack.c.l.b16 %v269
      %v823 = vunpack.c.l.b16 %v270
      %v824 = vunpack.c.l.b16 %v271
      %v825 = vunpack.c.l.b16 %v272
      %v826 = vunpack.c.l.b16 %v273
      %v827 = vunpack.c.l.b16 %v274
      %v828 = vunpack.c.l.b16 %v275
      %v829 = vunpack.c.l.b16 %v276
      %v830 = vunpack.c.l.b16 %v277
      %v831 = vpack.c.b16 %v816, %v815
      %v832 = vpack.c.b16 %v818, %v817
      %v833 = vpack.c.b16 %v820, %v819
      %v834 = vpack.c.b16 %v822, %v821
      %v835 = vpack.c.b16 %v824, %v823
      %v836 = vpack.c.b16 %v826, %v825
      %v837 = vpack.c.b16 %v828, %v827
      %v838 = vpack.c.b16 %v830, %v829
      %847 = vmatprep.subr.bf16.mxu0 0
      %848 = vmatpush1.bf16.msra.mxu0 %v831
      %849 = vmatprep.subr.bf16.mxu0 0
      %850 = vmatpush1.bf16.msra.mxu0 %v832
      %851 = vmatprep.subr.bf16.mxu0 0
      %852 = vmatpush1.bf16.msra.mxu0 %v833
      %853 = vmatprep.subr.bf16.mxu0 0
      %854 = vmatpush1.bf16.msra.mxu0 %v834
      %855 = vmatprep.subr.bf16.mxu0 0
      %856 = vmatpush1.bf16.msra.mxu0 %v835
      %857 = vmatprep.subr.bf16.mxu0 0
      %858 = vmatpush1.bf16.msra.mxu0 %v836
      %859 = vmatprep.subr.bf16.mxu0 0
      %860 = vmatpush1.bf16.msra.mxu0 %v837
      %861 = vmatprep.subr.bf16.mxu0 0
      %862 = vmatpush1.bf16.msra.mxu0 %v838
      %863 = vmatprep.subr.bf16.mxu0 0
      %864 = vmatpush1.bf16.msra.mxu0 0
      %865 = vmatprep.subr.bf16.mxu0 0
      %866 = vmatpush1.bf16.msra.mxu0 0
      %867 = vmatprep.subr.bf16.mxu0 0
      %868 = vmatpush1.bf16.msra.mxu0 0
      %869 = vmatprep.subr.bf16.mxu0 0
      %870 = vmatpush1.bf16.msra.mxu0 0
      %871 = vmatprep.subr.bf16.mxu0 0
      %872 = vmatpush1.bf16.msra.mxu0 0
      %873 = vmatprep.subr.bf16.mxu0 0
      %874 = vmatpush1.bf16.msra.mxu0 0
      %875 = vmatprep.subr.bf16.mxu0 0
      %876 = vmatpush1.bf16.msra.mxu0 0
      %877 = vmatprep.subr.bf16.mxu0 0
      %878 = vmatpush1.bf16.msra.mxu0 0
      %879 = vmatprep.mubr.bf16.mxu0 0
      %880 = vmatmul.mubr.bf16.gmra.mrb[0].mxu0 %v370
      %v881 = vpop.f32.mrb[0].mxu0
      %v882 = vadd.f32 %v639, %v881
      %v883 = vpop.f32.mrb[0].mxu0
      %v884 = vpop.f32.mrb[0].mxu0
      %v885 = vadd.f32 %v642, %v884
      %v886 = vpop.f32.mrb[0].mxu0
      %887 = vmatprep.mubr.bf16.mxu0 0
      %888 = vmatmul.mubr.bf16.gmra.mrb[0].mxu0 %v371
      %v889 = vpop.f32.mrb[0].mxu0
      %v890 = vadd.f32 %v647, %v889
      %v891 = vpop.f32.mrb[0].mxu0
      %v892 = vpop.f32.mrb[0].mxu0
      %v893 = vadd.f32 %v650, %v892
      %v894 = vpop.f32.mrb[0].mxu0
      %895 = vmatprep.mubr.bf16.mxu0 0
      %896 = vmatmul.mubr.bf16.gmra.mrb[0].mxu0 %v372
      %v897 = vpop.f32.mrb[0].mxu0
      %v898 = vadd.f32 %v655, %v897
      %v899 = vpop.f32.mrb[0].mxu0
      %v900 = vpop.f32.mrb[0].mxu0
      %v901 = vadd.f32 %v658, %v900
      %v902 = vpop.f32.mrb[0].mxu0
      %903 = vmatprep.mubr.bf16.mxu0 0
      %904 = vmatmul.mubr.bf16.gmra.mrb[0].mxu0 %v373
      %v905 = vpop.f32.mrb[0].mxu0
      %v906 = vadd.f32 %v663, %v905
      %v907 = vpop.f32.mrb[0].mxu0
      %v908 = vpop.f32.mrb[0].mxu0
      %v909 = vadd.f32 %v666, %v908
      %v910 = vpop.f32.mrb[0].mxu0
      %911 = vmatprep.mubr.bf16.mxu0 0
      %912 = vmatmul.mubr.bf16.gmra.mrb[0].mxu0 %v374
      %v913 = vpop.f32.mrb[0].mxu0
      %v914 = vadd.f32 %v671, %v913
      %v915 = vpop.f32.mrb[0].mxu0
      %v916 = vpop.f32.mrb[0].mxu0
      %v917 = vadd.f32 %v674, %v916
      %v918 = vpop.f32.mrb[0].mxu0
      %919 = vmatprep.mubr.bf16.mxu0 0
      %920 = vmatmul.mubr.bf16.gmra.mrb[0].mxu0 %v375
      %v921 = vpop.f32.mrb[0].mxu0
      %v922 = vadd.f32 %v679, %v921
      %v923 = vpop.f32.mrb[0].mxu0
      %v924 = vpop.f32.mrb[0].mxu0
      %v925 = vadd.f32 %v682, %v924
      %v926 = vpop.f32.mrb[0].mxu0
      %927 = vmatprep.mubr.bf16.mxu0 0
      %928 = vmatmul.mubr.bf16.gmra.mrb[0].mxu0 %v376
      %v929 = vpop.f32.mrb[0].mxu0
      %v930 = vadd.f32 %v687, %v929
      %v931 = vpop.f32.mrb[0].mxu0
      %v932 = vpop.f32.mrb[0].mxu0
      %v933 = vadd.f32 %v690, %v932
      %v934 = vpop.f32.mrb[0].mxu0
      %935 = vmatprep.mubr.bf16.mxu0 0
      %936 = vmatmul.mubr.bf16.gmra.mrb[0].mxu0 %v377
      %v937 = vpop.f32.mrb[0].mxu0
      %v938 = vadd.f32 %v695, %v937
      %v939 = vpop.f32.mrb[0].mxu0
      %v940 = vpop.f32.mrb[0].mxu0
      %v941 = vadd.f32 %v698, %v940
      %v942 = vpop.f32.mrb[0].mxu0
      %943 = vmatprep.mubr.bf16.mxu0 0
      %944 = vmatmul.mubr.bf16.gmra.mrb[0].mxu0 %v378
      %v945 = vpop.f32.mrb[0].mxu0
      %v946 = vadd.f32 %v703, %v945
      %v947 = vpop.f32.mrb[0].mxu0
      %v948 = vpop.f32.mrb[0].mxu0
      %v949 = vadd.f32 %v706, %v948
      %v950 = vpop.f32.mrb[0].mxu0
      %951 = vmatprep.mubr.bf16.mxu0 0
      %952 = vmatmul.mubr.bf16.gmra.mrb[0].mxu0 %v379
      %v953 = vpop.f32.mrb[0].mxu0
      %v954 = vadd.f32 %v711, %v953
      %v955 = vpop.f32.mrb[0].mxu0
      %v956 = vpop.f32.mrb[0].mxu0
      %v957 = vadd.f32 %v714, %v956
      %v958 = vpop.f32.mrb[0].mxu0
      %959 = vmatprep.mubr.bf16.mxu0 0
      %960 = vmatmul.mubr.bf16.gmra.mrb[0].mxu0 %v380
      %v961 = vpop.f32.mrb[0].mxu0
      %v962 = vadd.f32 %v719, %v961
      %v963 = vpop.f32.mrb[0].mxu0
      %v964 = vpop.f32.mrb[0].mxu0
      %v965 = vadd.f32 %v722, %v964
      %v966 = vpop.f32.mrb[0].mxu0
      %967 = vmatprep.mubr.bf16.mxu0 0
      %968 = vmatmul.mubr.bf16.gmra.mrb[0].mxu0 %v381
      %v969 = vpop.f32.mrb[0].mxu0
      %v970 = vadd.f32 %v727, %v969
      %v971 = vpop.f32.mrb[0].mxu0
      %v972 = vpop.f32.mrb[0].mxu0
      %v973 = vadd.f32 %v730, %v972
      %v974 = vpop.f32.mrb[0].mxu0
      %975 = vmatprep.mubr.bf16.mxu0 0
      %976 = vmatmul.mubr.bf16.gmra.mrb[0].mxu0 %v382
      %v977 = vpop.f32.mrb[0].mxu0
      %v978 = vadd.f32 %v735, %v977
      %v979 = vpop.f32.mrb[0].mxu0
      %v980 = vpop.f32.mrb[0].mxu0
      %v981 = vadd.f32 %v738, %v980
      %v982 = vpop.f32.mrb[0].mxu0
      %983 = vmatprep.mubr.bf16.mxu0 0
      %984 = vmatmul.mubr.bf16.gmra.mrb[0].mxu0 %v383
      %v985 = vpop.f32.mrb[0].mxu0
      %v986 = vadd.f32 %v743, %v985
      %v987 = vpop.f32.mrb[0].mxu0
      %v988 = vpop.f32.mrb[0].mxu0
      %v989 = vadd.f32 %v746, %v988
      %v990 = vpop.f32.mrb[0].mxu0
      %991 = vmatprep.mubr.bf16.mxu0 0
      %992 = vmatmul.mubr.bf16.gmra.mrb[0].mxu0 %v384
      %v993 = vpop.f32.mrb[0].mxu0
      %v994 = vadd.f32 %v751, %v993
      %v995 = vpop.f32.mrb[0].mxu0
      %v996 = vpop.f32.mrb[0].mxu0
      %v997 = vadd.f32 %v754, %v996
      %v998 = vpop.f32.mrb[0].mxu0
      %999 = vmatprep.mubr.bf16.mxu0 0
      %1000 = vmatmul.mubr.bf16.gmra.mrb[0].mxu0 %v385
      %v1001 = vpop.f32.mrb[0].mxu0
      %v1002 = vadd.f32 %v759, %v1001
      %v1003 = vpop.f32.mrb[0].mxu0
      %v1004 = vpop.f32.mrb[0].mxu0
      %v1005 = vadd.f32 %v762, %v1004
      %v1006 = vpop.f32.mrb[0].mxu0
      %1007 = vmatprep.mubr.bf16.mxu0 0
      %1008 = vmatmul.mubr.bf16.gmra.mrb[0].mxu0 %v386
      %v1009 = vpop.f32.mrb[0].mxu0
      %v1010 = vadd.f32 %v767, %v1009
      %v1011 = vpop.f32.mrb[0].mxu0
      %v1012 = vpop.f32.mrb[0].mxu0
      %v1013 = vadd.f32 %v770, %v1012
      %v1014 = vpop.f32.mrb[0].mxu0
      %1015 = vmatprep.mubr.bf16.mxu0 0
      %1016 = vmatmul.mubr.bf16.gmra.mrb[0].mxu0 %v387
      %v1017 = vpop.f32.mrb[0].mxu0
      %v1018 = vadd.f32 %v775, %v1017
      %v1019 = vpop.f32.mrb[0].mxu0
      %v1020 = vpop.f32.mrb[0].mxu0
      %v1021 = vadd.f32 %v778, %v1020
      %v1022 = vpop.f32.mrb[0].mxu0
      %1023 = vdwg.mxu0
      %v1024 = vld [vmem:[%s219] sm:$0xe]
      %s1025 = scalar_lea.vmem %s1, 128
      %v1026 = vld [vmem:[%s1025] sm:$0xf]
      %v1027 = vld [vmem:[%s1025 + $0x4] sm:$0xf]
      %v1028 = vld [vmem:[%s1025 + $0x8] sm:$0xf]
      %v1029 = vld [vmem:[%s1025 + $0xc] sm:$0xf]
      %v1030 = vld [vmem:[%s1025 + $0x10] sm:$0xf]
      %v1031 = vld [vmem:[%s1025 + $0x14] sm:$0xf]
      %v1032 = vld [vmem:[%s1025 + $0x18] sm:$0xf]
      %v1033 = vld [vmem:[%s1025 + $0x1c] sm:$0xf]
      %v1034 = vld [vmem:[%s1025 + $0x20] sm:$0xf]
      %v1035 = vld [vmem:[%s1025 + $0x24] sm:$0xf]
      %v1036 = vld [vmem:[%s1025 + $0x28] sm:$0xf]
      %v1037 = vld [vmem:[%s1025 + $0x2c] sm:$0xf]
      %v1038 = vld [vmem:[%s1025 + $0x30] sm:$0xf]
      %v1039 = vld [vmem:[%s1025 + $0x34] sm:$0xf]
      %v1040 = vld [vmem:[%s1025 + $0x38] sm:$0xf]
      %v1041 = vld [vmem:[%s1025 + $0x3c] sm:$0xf]
      %v1043 = vunpack.c.l.b16 %v1024
      %v1044 = vpack.c.b16 %v334, %v1043
      %vm1045 = vcmask 1046528
      %v1046 = vrot.slane %v1044, 1
      %v1047 = vrot.slane %v371, 1
      %v1048 = vsel %vm1045, %v1046, %v1047
      %v1049 = vrot.slane %v372, 1
      %v1050 = vsel %vm1045, %v1047, %v1049
      %v1051 = vrot.slane %v373, 1
      %v1052 = vsel %vm1045, %v1049, %v1051
      %v1053 = vrot.slane %v374, 1
      %v1054 = vsel %vm1045, %v1051, %v1053
      %v1055 = vrot.slane %v375, 1
      %v1056 = vsel %vm1045, %v1053, %v1055
      %v1057 = vrot.slane %v376, 1
      %v1058 = vsel %vm1045, %v1055, %v1057
      %v1059 = vrot.slane %v377, 1
      %v1060 = vsel %vm1045, %v1057, %v1059
      %v1061 = vrot.slane %v378, 1
      %v1062 = vsel %vm1045, %v1059, %v1061
      %v1063 = vrot.slane %v379, 1
      %v1064 = vsel %vm1045, %v1061, %v1063
      %v1065 = vrot.slane %v380, 1
      %v1066 = vsel %vm1045, %v1063, %v1065
      %v1067 = vrot.slane %v381, 1
      %v1068 = vsel %vm1045, %v1065, %v1067
      %v1069 = vrot.slane %v382, 1
      %v1070 = vsel %vm1045, %v1067, %v1069
      %v1071 = vrot.slane %v383, 1
      %v1072 = vsel %vm1045, %v1069, %v1071
      %v1073 = vrot.slane %v384, 1
      %v1074 = vsel %vm1045, %v1071, %v1073
      %v1075 = vrot.slane %v385, 1
      %v1076 = vsel %vm1045, %v1073, %v1075
      %v1077 = vrot.slane %v386, 1
      %v1078 = vsel %vm1045, %v1075, %v1077
      %v1079 = vrot.slane %v387, 1
      %v1080 = vsel %vm1045, %v1077, %v1079
      %v1081 = vrot.slane %v388, 1
      %v1082 = vsel %vm1045, %v1079, %v1081
      %v1117 = vunpack.c.l.b16 %v1026
      %v1118 = vunpack.c.l.b16 %v1027
      %v1119 = vunpack.c.l.b16 %v1028
      %v1120 = vunpack.c.l.b16 %v1029
      %v1121 = vunpack.c.l.b16 %v1030
      %v1122 = vunpack.c.l.b16 %v1031
      %v1123 = vunpack.c.l.b16 %v1032
      %v1124 = vunpack.c.l.b16 %v1033
      %v1125 = vunpack.c.l.b16 %v1034
      %v1126 = vunpack.c.l.b16 %v1035
      %v1127 = vunpack.c.l.b16 %v1036
      %v1128 = vunpack.c.l.b16 %v1037
      %v1129 = vunpack.c.l.b16 %v1038
      %v1130 = vunpack.c.l.b16 %v1039
      %v1131 = vunpack.c.l.b16 %v1040
      %v1132 = vunpack.c.l.b16 %v1041
      %v1133 = vpack.c.b16 %v1118, %v1117
      %v1134 = vpack.c.b16 %v1120, %v1119
      %v1135 = vpack.c.b16 %v1122, %v1121
      %v1136 = vpack.c.b16 %v1124, %v1123
      %v1137 = vpack.c.b16 %v1126, %v1125
      %v1138 = vpack.c.b16 %v1128, %v1127
      %v1139 = vpack.c.b16 %v1130, %v1129
      %v1140 = vpack.c.b16 %v1132, %v1131
      %1149 = vmatprep.subr.bf16.mxu0 0
      %1150 = vmatpush1.bf16.msra.mxu0 %v1133
      %1151 = vmatprep.subr.bf16.mxu0 0
      %1152 = vmatpush1.bf16.msra.mxu0 %v1134
      %1153 = vmatprep.subr.bf16.mxu0 0
      %1154 = vmatpush1.bf16.msra.mxu0 %v1135
      %1155 = vmatprep.subr.bf16.mxu0 0
      %1156 = vmatpush1.bf16.msra.mxu0 %v1136
      %1157 = vmatprep.subr.bf16.mxu0 0
      %1158 = vmatpush1.bf16.msra.mxu0 %v1137
      %1159 = vmatprep.subr.bf16.mxu0 0
      %1160 = vmatpush1.bf16.msra.mxu0 %v1138
      %1161 = vmatprep.subr.bf16.mxu0 0
      %1162 = vmatpush1.bf16.msra.mxu0 %v1139
      %1163 = vmatprep.subr.bf16.mxu0 0
      %1164 = vmatpush1.bf16.msra.mxu0 %v1140
      %1165 = vmatprep.subr.bf16.mxu0 0
      %1166 = vmatpush1.bf16.msra.mxu0 0
      %1167 = vmatprep.subr.bf16.mxu0 0
      %1168 = vmatpush1.bf16.msra.mxu0 0
      %1169 = vmatprep.subr.bf16.mxu0 0
      %1170 = vmatpush1.bf16.msra.mxu0 0
      %1171 = vmatprep.subr.bf16.mxu0 0
      %1172 = vmatpush1.bf16.msra.mxu0 0
      %1173 = vmatprep.subr.bf16.mxu0 0
      %1174 = vmatpush1.bf16.msra.mxu0 0
      %1175 = vmatprep.subr.bf16.mxu0 0
      %1176 = vmatpush1.bf16.msra.mxu0 0
      %1177 = vmatprep.subr.bf16.mxu0 0
      %1178 = vmatpush1.bf16.msra.mxu0 0
      %1179 = vmatprep.subr.bf16.mxu0 0
      %1180 = vmatpush1.bf16.msra.mxu0 0
      %1181 = vmatprep.mubr.bf16.mxu0 0
      %1182 = vmatmul.mubr.bf16.gmra.mrb[0].mxu0 %v1048
      %v1183 = vpop.f32.mrb[0].mxu0
      %v1184 = vadd.f32 0.0, %v1183
      %v1185 = vpop.f32.mrb[0].mxu0
      %v1186 = vpop.f32.mrb[0].mxu0
      %v1187 = vadd.f32 0.0, %v1186
      %v1188 = vpop.f32.mrb[0].mxu0
      %1189 = vmatprep.mubr.bf16.mxu0 0
      %1190 = vmatmul.mubr.bf16.gmra.mrb[0].mxu0 %v1050
      %v1191 = vpop.f32.mrb[0].mxu0
      %v1192 = vadd.f32 0.0, %v1191
      %v1193 = vpop.f32.mrb[0].mxu0
      %v1194 = vpop.f32.mrb[0].mxu0
      %v1195 = vadd.f32 0.0, %v1194
      %v1196 = vpop.f32.mrb[0].mxu0
      %1197 = vmatprep.mubr.bf16.mxu0 0
      %1198 = vmatmul.mubr.bf16.gmra.mrb[0].mxu0 %v1052
      %v1199 = vpop.f32.mrb[0].mxu0
      %v1200 = vadd.f32 0.0, %v1199
      %v1201 = vpop.f32.mrb[0].mxu0
      %v1202 = vpop.f32.mrb[0].mxu0
      %v1203 = vadd.f32 0.0, %v1202
      %v1204 = vpop.f32.mrb[0].mxu0
      %1205 = vmatprep.mubr.bf16.mxu0 0
      %1206 = vmatmul.mubr.bf16.gmra.mrb[0].mxu0 %v1054
      %v1207 = vpop.f32.mrb[0].mxu0
      %v1208 = vadd.f32 0.0, %v1207
      %v1209 = vpop.f32.mrb[0].mxu0
      %v1210 = vpop.f32.mrb[0].mxu0
      %v1211 = vadd.f32 0.0, %v1210
      %v1212 = vpop.f32.mrb[0].mxu0
      %1213 = vmatprep.mubr.bf16.mxu0 0
      %1214 = vmatmul.mubr.bf16.gmra.mrb[0].mxu0 %v1056
      %v1215 = vpop.f32.mrb[0].mxu0
      %v1216 = vadd.f32 0.0, %v1215
      %v1217 = vpop.f32.mrb[0].mxu0
      %v1218 = vpop.f32.mrb[0].mxu0
      %v1219 = vadd.f32 0.0, %v1218
      %v1220 = vpop.f32.mrb[0].mxu0
      %1221 = vmatprep.mubr.bf16.mxu0 0
      %1222 = vmatmul.mubr.bf16.gmra.mrb[0].mxu0 %v1058
      %v1223 = vpop.f32.mrb[0].mxu0
      %v1224 = vadd.f32 0.0, %v1223
      %v1225 = vpop.f32.mrb[0].mxu0
      %v1226 = vpop.f32.mrb[0].mxu0
      %v1227 = vadd.f32 0.0, %v1226
      %v1228 = vpop.f32.mrb[0].mxu0
      %1229 = vmatprep.mubr.bf16.mxu0 0
      %1230 = vmatmul.mubr.bf16.gmra.mrb[0].mxu0 %v1060
      %v1231 = vpop.f32.mrb[0].mxu0
      %v1232 = vadd.f32 0.0, %v1231
      %v1233 = vpop.f32.mrb[0].mxu0
      %v1234 = vpop.f32.mrb[0].mxu0
      %v1235 = vadd.f32 0.0, %v1234
      %v1236 = vpop.f32.mrb[0].mxu0
      %1237 = vmatprep.mubr.bf16.mxu0 0
      %1238 = vmatmul.mubr.bf16.gmra.mrb[0].mxu0 %v1062
      %v1239 = vpop.f32.mrb[0].mxu0
      %v1240 = vadd.f32 0.0, %v1239
      %v1241 = vpop.f32.mrb[0].mxu0
      %v1242 = vpop.f32.mrb[0].mxu0
      %v1243 = vadd.f32 0.0, %v1242
      %v1244 = vpop.f32.mrb[0].mxu0
      %1245 = vmatprep.mubr.bf16.mxu0 0
      %1246 = vmatmul.mubr.bf16.gmra.mrb[0].mxu0 %v1064
      %v1247 = vpop.f32.mrb[0].mxu0
      %v1248 = vadd.f32 0.0, %v1247
      %v1249 = vpop.f32.mrb[0].mxu0
      %v1250 = vpop.f32.mrb[0].mxu0
      %v1251 = vadd.f32 0.0, %v1250
      %v1252 = vpop.f32.mrb[0].mxu0
      %1253 = vmatprep.mubr.bf16.mxu0 0
      %1254 = vmatmul.mubr.bf16.gmra.mrb[0].mxu0 %v1066
      %v1255 = vpop.f32.mrb[0].mxu0
      %v1256 = vadd.f32 0.0, %v1255
      %v1257 = vpop.f32.mrb[0].mxu0
      %v1258 = vpop.f32.mrb[0].mxu0
      %v1259 = vadd.f32 0.0, %v1258
      %v1260 = vpop.f32.mrb[0].mxu0
      %1261 = vmatprep.mubr.bf16.mxu0 0
      %1262 = vmatmul.mubr.bf16.gmra.mrb[0].mxu0 %v1068
      %v1263 = vpop.f32.mrb[0].mxu0
      %v1264 = vadd.f32 0.0, %v1263
      %v1265 = vpop.f32.mrb[0].mxu0
      %v1266 = vpop.f32.mrb[0].mxu0
      %v1267 = vadd.f32 0.0, %v1266
      %v1268 = vpop.f32.mrb[0].mxu0
      %1269 = vmatprep.mubr.bf16.mxu0 0
      %1270 = vmatmul.mubr.bf16.gmra.mrb[0].mxu0 %v1070
      %v1271 = vpop.f32.mrb[0].mxu0
      %v1272 = vadd.f32 0.0, %v1271
      %v1273 = vpop.f32.mrb[0].mxu0
      %v1274 = vpop.f32.mrb[0].mxu0
      %v1275 = vadd.f32 0.0, %v1274
      %v1276 = vpop.f32.mrb[0].mxu0
      %1277 = vmatprep.mubr.bf16.mxu0 0
      %1278 = vmatmul.mubr.bf16.gmra.mrb[0].mxu0 %v1072
      %v1279 = vpop.f32.mrb[0].mxu0
      %v1280 = vadd.f32 0.0, %v1279
      %v1281 = vpop.f32.mrb[0].mxu0
      %v1282 = vpop.f32.mrb[0].mxu0
      %v1283 = vadd.f32 0.0, %v1282
      %v1284 = vpop.f32.mrb[0].mxu0
      %1285 = vmatprep.mubr.bf16.mxu0 0
      %1286 = vmatmul.mubr.bf16.gmra.mrb[0].mxu0 %v1074
      %v1287 = vpop.f32.mrb[0].mxu0
      %v1288 = vadd.f32 0.0, %v1287
      %v1289 = vpop.f32.mrb[0].mxu0
      %v1290 = vpop.f32.mrb[0].mxu0
      %v1291 = vadd.f32 0.0, %v1290
      %v1292 = vpop.f32.mrb[0].mxu0
      %1293 = vmatprep.mubr.bf16.mxu0 0
      %1294 = vmatmul.mubr.bf16.gmra.mrb[0].mxu0 %v1076
      %v1295 = vpop.f32.mrb[0].mxu0
      %v1296 = vadd.f32 0.0, %v1295
      %v1297 = vpop.f32.mrb[0].mxu0
      %v1298 = vpop.f32.mrb[0].mxu0
      %v1299 = vadd.f32 0.0, %v1298
      %v1300 = vpop.f32.mrb[0].mxu0
      %1301 = vmatprep.mubr.bf16.mxu0 0
      %1302 = vmatmul.mubr.bf16.gmra.mrb[0].mxu0 %v1078
      %v1303 = vpop.f32.mrb[0].mxu0
      %v1304 = vadd.f32 0.0, %v1303
      %v1305 = vpop.f32.mrb[0].mxu0
      %v1306 = vpop.f32.mrb[0].mxu0
      %v1307 = vadd.f32 0.0, %v1306
      %v1308 = vpop.f32.mrb[0].mxu0
      %1309 = vmatprep.mubr.bf16.mxu0 0
      %1310 = vmatmul.mubr.bf16.gmra.mrb[0].mxu0 %v1080
      %v1311 = vpop.f32.mrb[0].mxu0
      %v1312 = vadd.f32 0.0, %v1311
      %v1313 = vpop.f32.mrb[0].mxu0
      %v1314 = vpop.f32.mrb[0].mxu0
      %v1315 = vadd.f32 0.0, %v1314
      %v1316 = vpop.f32.mrb[0].mxu0
      %1317 = vmatprep.mubr.bf16.mxu0 0
      %1318 = vmatmul.mubr.bf16.gmra.mrb[0].mxu0 %v1082
      %v1319 = vpop.f32.mrb[0].mxu0
      %v1320 = vadd.f32 0.0, %v1319
      %v1321 = vpop.f32.mrb[0].mxu0
      %v1322 = vpop.f32.mrb[0].mxu0
      %v1323 = vadd.f32 0.0, %v1322
      %v1324 = vpop.f32.mrb[0].mxu0
      %1325 = vdwg.mxu0
      %v1326 = vadd.f32 %v882, %v1184
      %v1327 = vadd.f32 %v885, %v1187
      %v1328 = vadd.f32 %v890, %v1192
      %v1329 = vadd.f32 %v893, %v1195
      %v1330 = vadd.f32 %v898, %v1200
      %v1331 = vadd.f32 %v901, %v1203
      %v1332 = vadd.f32 %v906, %v1208
      %v1333 = vadd.f32 %v909, %v1211
      %v1334 = vadd.f32 %v914, %v1216
      %v1335 = vadd.f32 %v917, %v1219
      %v1336 = vadd.f32 %v922, %v1224
      %v1337 = vadd.f32 %v925, %v1227
      %v1338 = vadd.f32 %v930, %v1232
      %v1339 = vadd.f32 %v933, %v1235
      %v1340 = vadd.f32 %v938, %v1240
      %v1341 = vadd.f32 %v941, %v1243
      %v1342 = vadd.f32 %v946, %v1248
      %v1343 = vadd.f32 %v949, %v1251
      %v1344 = vadd.f32 %v954, %v1256
      %v1345 = vadd.f32 %v957, %v1259
      %v1346 = vadd.f32 %v962, %v1264
      %v1347 = vadd.f32 %v965, %v1267
      %v1348 = vadd.f32 %v970, %v1272
      %v1349 = vadd.f32 %v973, %v1275
      %v1350 = vadd.f32 %v978, %v1280
      %v1351 = vadd.f32 %v981, %v1283
      %v1352 = vadd.f32 %v986, %v1288
      %v1353 = vadd.f32 %v989, %v1291
      %v1354 = vadd.f32 %v994, %v1296
      %v1355 = vadd.f32 %v997, %v1299
      %v1356 = vadd.f32 %v1002, %v1304
      %v1357 = vadd.f32 %v1005, %v1307
      %v1358 = vadd.f32 %v1010, %v1312
      %v1359 = vadd.f32 %v1013, %v1315
      %v1360 = vadd.f32 %v1018, %v1320
      %v1361 = vadd.f32 %v1021, %v1323
      %v1362 = vld [vmem:[%s219 + $0x8] sm:$0xe]
      %v1363 = vld [vmem:[%s219 + $0xc] sm:$0xf]
      %v1364 = vld [vmem:[%s219 + $0x10] sm:$0xf]
      %v1365 = vld [vmem:[%s219 + $0x14] sm:$0xf]
      %v1366 = vld [vmem:[%s219 + $0x18] sm:$0xf]
      %v1367 = vld [vmem:[%s219 + $0x1c] sm:$0xf]
      %v1368 = vld [vmem:[%s219 + $0x20] sm:$0xf]
      %v1369 = vld [vmem:[%s219 + $0x24] sm:$0xf]
      %v1370 = vld [vmem:[%s219 + $0x28] sm:$0xf]
      %v1371 = vld [vmem:[%s219 + $0x2c] sm:$0xf]
      %v1372 = vld [vmem:[%s219 + $0x30] sm:$0xf]
      %v1373 = vld [vmem:[%s219 + $0x34] sm:$0xf]
      %v1374 = vld [vmem:[%s219 + $0x38] sm:$0xf]
      %v1375 = vld [vmem:[%s219 + $0x3c] sm:$0xf]
      %v1376 = vld [vmem:[%s219 + $0x40] sm:$0xf]
      %v1377 = vld [vmem:[%s219 + $0x44] sm:$0xf]
      %v1378 = vld [vmem:[%s219 + $0x48] sm:$0xf]
      %v1379 = vld [vmem:[%s219 + $0x4c] sm:$0xf]
      %v1380 = vld [vmem:[%s219 + $0x50] sm:$0xf]
      %v1381 = vld [vmem:[%s219 + $0x54] sm:$0xf]
      %v1382 = vld [vmem:[%s219 + $0x58] sm:$0xf]
      %v1383 = vld [vmem:[%s219 + $0x5c] sm:$0xf]
      %v1384 = vld [vmem:[%s219 + $0x60] sm:$0xf]
      %v1385 = vld [vmem:[%s219 + $0x64] sm:$0xf]
      %v1386 = vld [vmem:[%s219 + $0x68] sm:$0xf]
      %v1387 = vld [vmem:[%s219 + $0x6c] sm:$0xf]
      %v1388 = vld [vmem:[%s219 + $0x70] sm:$0xf]
      %v1389 = vld [vmem:[%s219 + $0x74] sm:$0xf]
      %v1390 = vld [vmem:[%s219 + $0x78] sm:$0xf]
      %v1391 = vld [vmem:[%s219 + $0x7c] sm:$0xf]
      %v1392 = vld [vmem:[%s219 + $0x80] sm:$0xf]
      %v1393 = vld [vmem:[%s219 + $0x84] sm:$0xf]
      %v1394 = vld [vmem:[%s219 + $0x88] sm:$0xf]
      %v1395 = vld [vmem:[%s219 + $0x8c] sm:$0xf]
      %v1396 = vld [vmem:[%s219 + $0x90] sm:$0xf]
      %v1397 = vld [vmem:[%s219 + $0x94] sm:$0xf]
      %v1398 = vld [vmem:[%s219 + $0x98] sm:$0x1]
      %s1399 = scalar_lea.vmem %s1, 192
      %v1400 = vld [vmem:[%s1399] sm:$0xf]
      %v1401 = vld [vmem:[%s1399 + $0x4] sm:$0xf]
      %v1402 = vld [vmem:[%s1399 + $0x8] sm:$0xf]
      %v1403 = vld [vmem:[%s1399 + $0xc] sm:$0xf]
      %v1404 = vld [vmem:[%s1399 + $0x10] sm:$0xf]
      %v1405 = vld [vmem:[%s1399 + $0x14] sm:$0xf]
      %v1406 = vld [vmem:[%s1399 + $0x18] sm:$0xf]
      %v1407 = vld [vmem:[%s1399 + $0x1c] sm:$0xf]
      %v1408 = vld [vmem:[%s1399 + $0x20] sm:$0xf]
      %v1409 = vld [vmem:[%s1399 + $0x24] sm:$0xf]
      %v1410 = vld [vmem:[%s1399 + $0x28] sm:$0xf]
      %v1411 = vld [vmem:[%s1399 + $0x2c] sm:$0xf]
      %v1412 = vld [vmem:[%s1399 + $0x30] sm:$0xf]
      %v1413 = vld [vmem:[%s1399 + $0x34] sm:$0xf]
      %v1414 = vld [vmem:[%s1399 + $0x38] sm:$0xf]
      %v1415 = vld [vmem:[%s1399 + $0x3c] sm:$0xf]
      %v1453 = vunpack.c.l.b16 %v1362
      %v1454 = vunpack.c.l.b16 %v1363
      %v1455 = vunpack.c.l.b16 %v1364
      %v1456 = vunpack.c.l.b16 %v1365
      %v1457 = vunpack.c.l.b16 %v1366
      %v1458 = vunpack.c.l.b16 %v1367
      %v1459 = vunpack.c.l.b16 %v1368
      %v1460 = vunpack.c.l.b16 %v1369
      %v1461 = vunpack.c.l.b16 %v1370
      %v1462 = vunpack.c.l.b16 %v1371
      %v1463 = vunpack.c.l.b16 %v1372
      %v1464 = vunpack.c.l.b16 %v1373
      %v1465 = vunpack.c.l.b16 %v1374
      %v1466 = vunpack.c.l.b16 %v1375
      %v1467 = vunpack.c.l.b16 %v1376
      %v1468 = vunpack.c.l.b16 %v1377
      %v1469 = vunpack.c.l.b16 %v1378
      %v1470 = vunpack.c.l.b16 %v1379
      %v1471 = vunpack.c.l.b16 %v1380
      %v1472 = vunpack.c.l.b16 %v1381
      %v1473 = vunpack.c.l.b16 %v1382
      %v1474 = vunpack.c.l.b16 %v1383
      %v1475 = vunpack.c.l.b16 %v1384
      %v1476 = vunpack.c.l.b16 %v1385
      %v1477 = vunpack.c.l.b16 %v1386
      %v1478 = vunpack.c.l.b16 %v1387
      %v1479 = vunpack.c.l.b16 %v1388
      %v1480 = vunpack.c.l.b16 %v1389
      %v1481 = vunpack.c.l.b16 %v1390
      %v1482 = vunpack.c.l.b16 %v1391
      %v1483 = vunpack.c.l.b16 %v1392
      %v1484 = vunpack.c.l.b16 %v1393
      %v1485 = vunpack.c.l.b16 %v1394
      %v1486 = vunpack.c.l.b16 %v1395
      %v1487 = vunpack.c.l.b16 %v1396
      %v1488 = vunpack.c.l.b16 %v1397
      %v1489 = vunpack.c.l.b16 %v1398
      %v1490 = vpack.c.b16 %v1454, %v1453
      %v1491 = vpack.c.b16 %v1456, %v1455
      %v1492 = vpack.c.b16 %v1458, %v1457
      %v1493 = vpack.c.b16 %v1460, %v1459
      %v1494 = vpack.c.b16 %v1462, %v1461
      %v1495 = vpack.c.b16 %v1464, %v1463
      %v1496 = vpack.c.b16 %v1466, %v1465
      %v1497 = vpack.c.b16 %v1468, %v1467
      %v1498 = vpack.c.b16 %v1470, %v1469
      %v1499 = vpack.c.b16 %v1472, %v1471
      %v1500 = vpack.c.b16 %v1474, %v1473
      %v1501 = vpack.c.b16 %v1476, %v1475
      %v1502 = vpack.c.b16 %v1478, %v1477
      %v1503 = vpack.c.b16 %v1480, %v1479
      %v1504 = vpack.c.b16 %v1482, %v1481
      %v1505 = vpack.c.b16 %v1484, %v1483
      %v1506 = vpack.c.b16 %v1486, %v1485
      %v1507 = vpack.c.b16 %v1488, %v1487
      %v1508 = vpack.c.b16 %v1489, %v1489
      %v1509 = vrot.slane %v1490, 1
      %v1510 = vrot.slane %v1491, 1
      %v1511 = vsel %vm1045, %v1509, %v1510
      %v1512 = vrot.slane %v1492, 1
      %v1513 = vsel %vm1045, %v1510, %v1512
      %v1514 = vrot.slane %v1493, 1
      %v1515 = vsel %vm1045, %v1512, %v1514
      %v1516 = vrot.slane %v1494, 1
      %v1517 = vsel %vm1045, %v1514, %v1516
      %v1518 = vrot.slane %v1495, 1
      %v1519 = vsel %vm1045, %v1516, %v1518
      %v1520 = vrot.slane %v1496, 1
      %v1521 = vsel %vm1045, %v1518, %v1520
      %v1522 = vrot.slane %v1497, 1
      %v1523 = vsel %vm1045, %v1520, %v1522
      %v1524 = vrot.slane %v1498, 1
      %v1525 = vsel %vm1045, %v1522, %v1524
      %v1526 = vrot.slane %v1499, 1
      %v1527 = vsel %vm1045, %v1524, %v1526
      %v1528 = vrot.slane %v1500, 1
      %v1529 = vsel %vm1045, %v1526, %v1528
      %v1530 = vrot.slane %v1501, 1
      %v1531 = vsel %vm1045, %v1528, %v1530
      %v1532 = vrot.slane %v1502, 1
      %v1533 = vsel %vm1045, %v1530, %v1532
      %v1534 = vrot.slane %v1503, 1
      %v1535 = vsel %vm1045, %v1532, %v1534
      %v1536 = vrot.slane %v1504, 1
      %v1537 = vsel %vm1045, %v1534, %v1536
      %v1538 = vrot.slane %v1505, 1
      %v1539 = vsel %vm1045, %v1536, %v1538
      %v1540 = vrot.slane %v1506, 1
      %v1541 = vsel %vm1045, %v1538, %v1540
      %v1542 = vrot.slane %v1507, 1
      %v1543 = vsel %vm1045, %v1540, %v1542
      %v1544 = vrot.slane %v1508, 1
      %v1545 = vsel %vm1045, %v1542, %v1544
      %v1580 = vunpack.c.l.b16 %v1400
      %v1581 = vunpack.c.l.b16 %v1401
      %v1582 = vunpack.c.l.b16 %v1402
      %v1583 = vunpack.c.l.b16 %v1403
      %v1584 = vunpack.c.l.b16 %v1404
      %v1585 = vunpack.c.l.b16 %v1405
      %v1586 = vunpack.c.l.b16 %v1406
      %v1587 = vunpack.c.l.b16 %v1407
      %v1588 = vunpack.c.l.b16 %v1408
      %v1589 = vunpack.c.l.b16 %v1409
      %v1590 = vunpack.c.l.b16 %v1410
      %v1591 = vunpack.c.l.b16 %v1411
      %v1592 = vunpack.c.l.b16 %v1412
      %v1593 = vunpack.c.l.b16 %v1413
      %v1594 = vunpack.c.l.b16 %v1414
      %v1595 = vunpack.c.l.b16 %v1415
      %v1596 = vpack.c.b16 %v1581, %v1580
      %v1597 = vpack.c.b16 %v1583, %v1582
      %v1598 = vpack.c.b16 %v1585, %v1584
      %v1599 = vpack.c.b16 %v1587, %v1586
      %v1600 = vpack.c.b16 %v1589, %v1588
      %v1601 = vpack.c.b16 %v1591, %v1590
      %v1602 = vpack.c.b16 %v1593, %v1592
      %v1603 = vpack.c.b16 %v1595, %v1594
      %1612 = vmatprep.subr.bf16.mxu0 0
      %1613 = vmatpush1.bf16.msra.mxu0 %v1596
      %1614 = vmatprep.subr.bf16.mxu0 0
      %1615 = vmatpush1.bf16.msra.mxu0 %v1597
      %1616 = vmatprep.subr.bf16.mxu0 0
      %1617 = vmatpush1.bf16.msra.mxu0 %v1598
      %1618 = vmatprep.subr.bf16.mxu0 0
      %1619 = vmatpush1.bf16.msra.mxu0 %v1599
      %1620 = vmatprep.subr.bf16.mxu0 0
      %1621 = vmatpush1.bf16.msra.mxu0 %v1600
      %1622 = vmatprep.subr.bf16.mxu0 0
      %1623 = vmatpush1.bf16.msra.mxu0 %v1601
      %1624 = vmatprep.subr.bf16.mxu0 0
      %1625 = vmatpush1.bf16.msra.mxu0 %v1602
      %1626 = vmatprep.subr.bf16.mxu0 0
      %1627 = vmatpush1.bf16.msra.mxu0 %v1603
      %1628 = vmatprep.subr.bf16.mxu0 0
      %1629 = vmatpush1.bf16.msra.mxu0 0
      %1630 = vmatprep.subr.bf16.mxu0 0
      %1631 = vmatpush1.bf16.msra.mxu0 0
      %1632 = vmatprep.subr.bf16.mxu0 0
      %1633 = vmatpush1.bf16.msra.mxu0 0
      %1634 = vmatprep.subr.bf16.mxu0 0
      %1635 = vmatpush1.bf16.msra.mxu0 0
      %1636 = vmatprep.subr.bf16.mxu0 0
      %1637 = vmatpush1.bf16.msra.mxu0 0
      %1638 = vmatprep.subr.bf16.mxu0 0
      %1639 = vmatpush1.bf16.msra.mxu0 0
      %1640 = vmatprep.subr.bf16.mxu0 0
      %1641 = vmatpush1.bf16.msra.mxu0 0
      %1642 = vmatprep.subr.bf16.mxu0 0
      %1643 = vmatpush1.bf16.msra.mxu0 0
      %1644 = vmatprep.mubr.bf16.mxu0 0
      %1645 = vmatmul.mubr.bf16.gmra.mrb[0].mxu0 %v1511
      %v1646 = vpop.f32.mrb[0].mxu0
      %v1647 = vadd.f32 0.0, %v1646
      %v1648 = vpop.f32.mrb[0].mxu0
      %v1649 = vpop.f32.mrb[0].mxu0
      %v1650 = vadd.f32 0.0, %v1649
      %v1651 = vpop.f32.mrb[0].mxu0
      %1652 = vmatprep.mubr.bf16.mxu0 0
      %1653 = vmatmul.mubr.bf16.gmra.mrb[0].mxu0 %v1513
      %v1654 = vpop.f32.mrb[0].mxu0
      %v1655 = vadd.f32 0.0, %v1654
      %v1656 = vpop.f32.mrb[0].mxu0
      %v1657 = vpop.f32.mrb[0].mxu0
      %v1658 = vadd.f32 0.0, %v1657
      %v1659 = vpop.f32.mrb[0].mxu0
      %1660 = vmatprep.mubr.bf16.mxu0 0
      %1661 = vmatmul.mubr.bf16.gmra.mrb[0].mxu0 %v1515
      %v1662 = vpop.f32.mrb[0].mxu0
      %v1663 = vadd.f32 0.0, %v1662
      %v1664 = vpop.f32.mrb[0].mxu0
      %v1665 = vpop.f32.mrb[0].mxu0
      %v1666 = vadd.f32 0.0, %v1665
      %v1667 = vpop.f32.mrb[0].mxu0
      %1668 = vmatprep.mubr.bf16.mxu0 0
      %1669 = vmatmul.mubr.bf16.gmra.mrb[0].mxu0 %v1517
      %v1670 = vpop.f32.mrb[0].mxu0
      %v1671 = vadd.f32 0.0, %v1670
      %v1672 = vpop.f32.mrb[0].mxu0
      %v1673 = vpop.f32.mrb[0].mxu0
      %v1674 = vadd.f32 0.0, %v1673
      %v1675 = vpop.f32.mrb[0].mxu0
      %1676 = vmatprep.mubr.bf16.mxu0 0
      %1677 = vmatmul.mubr.bf16.gmra.mrb[0].mxu0 %v1519
      %v1678 = vpop.f32.mrb[0].mxu0
      %v1679 = vadd.f32 0.0, %v1678
      %v1680 = vpop.f32.mrb[0].mxu0
      %v1681 = vpop.f32.mrb[0].mxu0
      %v1682 = vadd.f32 0.0, %v1681
      %v1683 = vpop.f32.mrb[0].mxu0
      %1684 = vmatprep.mubr.bf16.mxu0 0
      %1685 = vmatmul.mubr.bf16.gmra.mrb[0].mxu0 %v1521
      %v1686 = vpop.f32.mrb[0].mxu0
      %v1687 = vadd.f32 0.0, %v1686
      %v1688 = vpop.f32.mrb[0].mxu0
      %v1689 = vpop.f32.mrb[0].mxu0
      %v1690 = vadd.f32 0.0, %v1689
      %v1691 = vpop.f32.mrb[0].mxu0
      %1692 = vmatprep.mubr.bf16.mxu0 0
      %1693 = vmatmul.mubr.bf16.gmra.mrb[0].mxu0 %v1523
      %v1694 = vpop.f32.mrb[0].mxu0
      %v1695 = vadd.f32 0.0, %v1694
      %v1696 = vpop.f32.mrb[0].mxu0
      %v1697 = vpop.f32.mrb[0].mxu0
      %v1698 = vadd.f32 0.0, %v1697
      %v1699 = vpop.f32.mrb[0].mxu0
      %1700 = vmatprep.mubr.bf16.mxu0 0
      %1701 = vmatmul.mubr.bf16.gmra.mrb[0].mxu0 %v1525
      %v1702 = vpop.f32.mrb[0].mxu0
      %v1703 = vadd.f32 0.0, %v1702
      %v1704 = vpop.f32.mrb[0].mxu0
      %v1705 = vpop.f32.mrb[0].mxu0
      %v1706 = vadd.f32 0.0, %v1705
      %v1707 = vpop.f32.mrb[0].mxu0
      %1708 = vmatprep.mubr.bf16.mxu0 0
      %1709 = vmatmul.mubr.bf16.gmra.mrb[0].mxu0 %v1527
      %v1710 = vpop.f32.mrb[0].mxu0
      %v1711 = vadd.f32 0.0, %v1710
      %v1712 = vpop.f32.mrb[0].mxu0
      %v1713 = vpop.f32.mrb[0].mxu0
      %v1714 = vadd.f32 0.0, %v1713
      %v1715 = vpop.f32.mrb[0].mxu0
      %1716 = vmatprep.mubr.bf16.mxu0 0
      %1717 = vmatmul.mubr.bf16.gmra.mrb[0].mxu0 %v1529
      %v1718 = vpop.f32.mrb[0].mxu0
      %v1719 = vadd.f32 0.0, %v1718
      %v1720 = vpop.f32.mrb[0].mxu0
      %v1721 = vpop.f32.mrb[0].mxu0
      %v1722 = vadd.f32 0.0, %v1721
      %v1723 = vpop.f32.mrb[0].mxu0
      %1724 = vmatprep.mubr.bf16.mxu0 0
      %1725 = vmatmul.mubr.bf16.gmra.mrb[0].mxu0 %v1531
      %v1726 = vpop.f32.mrb[0].mxu0
      %v1727 = vadd.f32 0.0, %v1726
      %v1728 = vpop.f32.mrb[0].mxu0
      %v1729 = vpop.f32.mrb[0].mxu0
      %v1730 = vadd.f32 0.0, %v1729
      %v1731 = vpop.f32.mrb[0].mxu0
      %1732 = vmatprep.mubr.bf16.mxu0 0
      %1733 = vmatmul.mubr.bf16.gmra.mrb[0].mxu0 %v1533
      %v1734 = vpop.f32.mrb[0].mxu0
      %v1735 = vadd.f32 0.0, %v1734
      %v1736 = vpop.f32.mrb[0].mxu0
      %v1737 = vpop.f32.mrb[0].mxu0
      %v1738 = vadd.f32 0.0, %v1737
      %v1739 = vpop.f32.mrb[0].mxu0
      %1740 = vmatprep.mubr.bf16.mxu0 0
      %1741 = vmatmul.mubr.bf16.gmra.mrb[0].mxu0 %v1535
      %v1742 = vpop.f32.mrb[0].mxu0
      %v1743 = vadd.f32 0.0, %v1742
      %v1744 = vpop.f32.mrb[0].mxu0
      %v1745 = vpop.f32.mrb[0].mxu0
      %v1746 = vadd.f32 0.0, %v1745
      %v1747 = vpop.f32.mrb[0].mxu0
      %1748 = vmatprep.mubr.bf16.mxu0 0
      %1749 = vmatmul.mubr.bf16.gmra.mrb[0].mxu0 %v1537
      %v1750 = vpop.f32.mrb[0].mxu0
      %v1751 = vadd.f32 0.0, %v1750
      %v1752 = vpop.f32.mrb[0].mxu0
      %v1753 = vpop.f32.mrb[0].mxu0
      %v1754 = vadd.f32 0.0, %v1753
      %v1755 = vpop.f32.mrb[0].mxu0
      %1756 = vmatprep.mubr.bf16.mxu0 0
      %1757 = vmatmul.mubr.bf16.gmra.mrb[0].mxu0 %v1539
      %v1758 = vpop.f32.mrb[0].mxu0
      %v1759 = vadd.f32 0.0, %v1758
      %v1760 = vpop.f32.mrb[0].mxu0
      %v1761 = vpop.f32.mrb[0].mxu0
      %v1762 = vadd.f32 0.0, %v1761
      %v1763 = vpop.f32.mrb[0].mxu0
      %1764 = vmatprep.mubr.bf16.mxu0 0
      %1765 = vmatmul.mubr.bf16.gmra.mrb[0].mxu0 %v1541
      %v1766 = vpop.f32.mrb[0].mxu0
      %v1767 = vadd.f32 0.0, %v1766
      %v1768 = vpop.f32.mrb[0].mxu0
      %v1769 = vpop.f32.mrb[0].mxu0
      %v1770 = vadd.f32 0.0, %v1769
      %v1771 = vpop.f32.mrb[0].mxu0
      %1772 = vmatprep.mubr.bf16.mxu0 0
      %1773 = vmatmul.mubr.bf16.gmra.mrb[0].mxu0 %v1543
      %v1774 = vpop.f32.mrb[0].mxu0
      %v1775 = vadd.f32 0.0, %v1774
      %v1776 = vpop.f32.mrb[0].mxu0
      %v1777 = vpop.f32.mrb[0].mxu0
      %v1778 = vadd.f32 0.0, %v1777
      %v1779 = vpop.f32.mrb[0].mxu0
      %1780 = vmatprep.mubr.bf16.mxu0 0
      %1781 = vmatmul.mubr.bf16.gmra.mrb[0].mxu0 %v1545
      %v1782 = vpop.f32.mrb[0].mxu0
      %v1783 = vadd.f32 0.0, %v1782
      %v1784 = vpop.f32.mrb[0].mxu0
      %v1785 = vpop.f32.mrb[0].mxu0
      %v1786 = vadd.f32 0.0, %v1785
      %v1787 = vpop.f32.mrb[0].mxu0
      %1788 = vdwg.mxu0
      %v1789 = vadd.f32 %v1326, %v1647
      %v1790 = vadd.f32 %v1327, %v1650
      %v1791 = vadd.f32 %v1328, %v1655
      %v1792 = vadd.f32 %v1329, %v1658
      %v1793 = vadd.f32 %v1330, %v1663
      %v1794 = vadd.f32 %v1331, %v1666
      %v1795 = vadd.f32 %v1332, %v1671
      %v1796 = vadd.f32 %v1333, %v1674
      %v1797 = vadd.f32 %v1334, %v1679
      %v1798 = vadd.f32 %v1335, %v1682
      %v1799 = vadd.f32 %v1336, %v1687
      %v1800 = vadd.f32 %v1337, %v1690
      %v1801 = vadd.f32 %v1338, %v1695
      %v1802 = vadd.f32 %v1339, %v1698
      %v1803 = vadd.f32 %v1340, %v1703
      %v1804 = vadd.f32 %v1341, %v1706
      %v1805 = vadd.f32 %v1342, %v1711
      %v1806 = vadd.f32 %v1343, %v1714
      %v1807 = vadd.f32 %v1344, %v1719
      %v1808 = vadd.f32 %v1345, %v1722
      %v1809 = vadd.f32 %v1346, %v1727
      %v1810 = vadd.f32 %v1347, %v1730
      %v1811 = vadd.f32 %v1348, %v1735
      %v1812 = vadd.f32 %v1349, %v1738
      %v1813 = vadd.f32 %v1350, %v1743
      %v1814 = vadd.f32 %v1351, %v1746
      %v1815 = vadd.f32 %v1352, %v1751
      %v1816 = vadd.f32 %v1353, %v1754
      %v1817 = vadd.f32 %v1354, %v1759
      %v1818 = vadd.f32 %v1355, %v1762
      %v1819 = vadd.f32 %v1356, %v1767
      %v1820 = vadd.f32 %v1357, %v1770
      %v1821 = vadd.f32 %v1358, %v1775
      %v1822 = vadd.f32 %v1359, %v1778
      %v1823 = vadd.f32 %v1360, %v1783
      %v1824 = vadd.f32 %v1361, %v1786
      %v1825 = vld [vmem:[%s219 + $0x98] sm:$0x3]
      %s1826 = scalar_lea.vmem %s1, 256
      %v1827 = vld [vmem:[%s1826] sm:$0xf]
      %v1828 = vld [vmem:[%s1826 + $0x4] sm:$0xf]
      %v1829 = vld [vmem:[%s1826 + $0x8] sm:$0xf]
      %v1830 = vld [vmem:[%s1826 + $0xc] sm:$0xf]
      %v1831 = vld [vmem:[%s1826 + $0x10] sm:$0xf]
      %v1832 = vld [vmem:[%s1826 + $0x14] sm:$0xf]
      %v1833 = vld [vmem:[%s1826 + $0x18] sm:$0xf]
      %v1834 = vld [vmem:[%s1826 + $0x1c] sm:$0xf]
      %v1835 = vld [vmem:[%s1826 + $0x20] sm:$0xf]
      %v1836 = vld [vmem:[%s1826 + $0x24] sm:$0xf]
      %v1837 = vld [vmem:[%s1826 + $0x28] sm:$0xf]
      %v1838 = vld [vmem:[%s1826 + $0x2c] sm:$0xf]
      %v1839 = vld [vmem:[%s1826 + $0x30] sm:$0xf]
      %v1840 = vld [vmem:[%s1826 + $0x34] sm:$0xf]
      %v1841 = vld [vmem:[%s1826 + $0x38] sm:$0xf]
      %v1842 = vld [vmem:[%s1826 + $0x3c] sm:$0xf]
      %v1844 = vunpack.c.l.b16 %v1825
      %v1845 = vpack.c.b16 %v1844, %v1844
      %vm1846 = vsmask.f32 6400
      %v1848 = vshrl.u32 %v1490, 16
      %v1850 = vrot.slane %v1848, 1
      %v1851 = vshll.u32 %v1490, 16
      %v1853 = vrot.slane %v1851, 2
      %v1854 = vor.u32 %v1850, %v1853
      %v1856 = vshrl.u32 %v1491, 16
      %v1858 = vrot.slane %v1856, 1
      %v1859 = vshll.u32 %v1491, 16
      %v1861 = vrot.slane %v1859, 2
      %v1862 = vor.u32 %v1858, %v1861
      %v1863 = vsel %vm1846, %v1854, %v1862
      %v1865 = vshrl.u32 %v1492, 16
      %v1867 = vrot.slane %v1865, 1
      %v1868 = vshll.u32 %v1492, 16
      %v1870 = vrot.slane %v1868, 2
      %v1871 = vor.u32 %v1867, %v1870
      %v1872 = vsel %vm1846, %v1862, %v1871
      %v1874 = vshrl.u32 %v1493, 16
      %v1876 = vrot.slane %v1874, 1
      %v1877 = vshll.u32 %v1493, 16
      %v1879 = vrot.slane %v1877, 2
      %v1880 = vor.u32 %v1876, %v1879
      %v1881 = vsel %vm1846, %v1871, %v1880
      %v1883 = vshrl.u32 %v1494, 16
      %v1885 = vrot.slane %v1883, 1
      %v1886 = vshll.u32 %v1494, 16
      %v1888 = vrot.slane %v1886, 2
      %v1889 = vor.u32 %v1885, %v1888
      %v1890 = vsel %vm1846, %v1880, %v1889
      %v1892 = vshrl.u32 %v1495, 16
      %v1894 = vrot.slane %v1892, 1
      %v1895 = vshll.u32 %v1495, 16
      %v1897 = vrot.slane %v1895, 2
      %v1898 = vor.u32 %v1894, %v1897
      %v1899 = vsel %vm1846, %v1889, %v1898
      %v1901 = vshrl.u32 %v1496, 16
      %v1903 = vrot.slane %v1901, 1
      %v1904 = vshll.u32 %v1496, 16
      %v1906 = vrot.slane %v1904, 2
      %v1907 = vor.u32 %v1903, %v1906
      %v1908 = vsel %vm1846, %v1898, %v1907
      %v1910 = vshrl.u32 %v1497, 16
      %v1912 = vrot.slane %v1910, 1
      %v1913 = vshll.u32 %v1497, 16
      %v1915 = vrot.slane %v1913, 2
      %v1916 = vor.u32 %v1912, %v1915
      %v1917 = vsel %vm1846, %v1907, %v1916
      %v1919 = vshrl.u32 %v1498, 16
      %v1921 = vrot.slane %v1919, 1
      %v1922 = vshll.u32 %v1498, 16
      %v1924 = vrot.slane %v1922, 2
      %v1925 = vor.u32 %v1921, %v1924
      %v1926 = vsel %vm1846, %v1916, %v1925
      %v1928 = vshrl.u32 %v1499, 16
      %v1930 = vrot.slane %v1928, 1
      %v1931 = vshll.u32 %v1499, 16
      %v1933 = vrot.slane %v1931, 2
      %v1934 = vor.u32 %v1930, %v1933
      %v1935 = vsel %vm1846, %v1925, %v1934
      %v1937 = vshrl.u32 %v1500, 16
      %v1939 = vrot.slane %v1937, 1
      %v1940 = vshll.u32 %v1500, 16
      %v1942 = vrot.slane %v1940, 2
      %v1943 = vor.u32 %v1939, %v1942
      %v1944 = vsel %vm1846, %v1934, %v1943
      %v1946 = vshrl.u32 %v1501, 16
      %v1948 = vrot.slane %v1946, 1
      %v1949 = vshll.u32 %v1501, 16
      %v1951 = vrot.slane %v1949, 2
      %v1952 = vor.u32 %v1948, %v1951
      %v1953 = vsel %vm1846, %v1943, %v1952
      %v1955 = vshrl.u32 %v1502, 16
      %v1957 = vrot.slane %v1955, 1
      %v1958 = vshll.u32 %v1502, 16
      %v1960 = vrot.slane %v1958, 2
      %v1961 = vor.u32 %v1957, %v1960
      %v1962 = vsel %vm1846, %v1952, %v1961
      %v1964 = vshrl.u32 %v1503, 16
      %v1966 = vrot.slane %v1964, 1
      %v1967 = vshll.u32 %v1503, 16
      %v1969 = vrot.slane %v1967, 2
      %v1970 = vor.u32 %v1966, %v1969
      %v1971 = vsel %vm1846, %v1961, %v1970
      %v1973 = vshrl.u32 %v1504, 16
      %v1975 = vrot.slane %v1973, 1
      %v1976 = vshll.u32 %v1504, 16
      %v1978 = vrot.slane %v1976, 2
      %v1979 = vor.u32 %v1975, %v1978
      %v1980 = vsel %vm1846, %v1970, %v1979
      %v1982 = vshrl.u32 %v1505, 16
      %v1984 = vrot.slane %v1982, 1
      %v1985 = vshll.u32 %v1505, 16
      %v1987 = vrot.slane %v1985, 2
      %v1988 = vor.u32 %v1984, %v1987
      %v1989 = vsel %vm1846, %v1979, %v1988
      %v1991 = vshrl.u32 %v1506, 16
      %v1993 = vrot.slane %v1991, 1
      %v1994 = vshll.u32 %v1506, 16
      %v1996 = vrot.slane %v1994, 2
      %v1997 = vor.u32 %v1993, %v1996
      %v1998 = vsel %vm1846, %v1988, %v1997
      %v2000 = vshrl.u32 %v1507, 16
      %v2002 = vrot.slane %v2000, 1
      %v2003 = vshll.u32 %v1507, 16
      %v2005 = vrot.slane %v2003, 2
      %v2006 = vor.u32 %v2002, %v2005
      %v2007 = vsel %vm1846, %v1997, %v2006
      %v2009 = vshrl.u32 %v1845, 16
      %v2011 = vrot.slane %v2009, 1
      %v2012 = vshll.u32 %v1845, 16
      %v2014 = vrot.slane %v2012, 2
      %v2015 = vor.u32 %v2011, %v2014
      %v2016 = vsel %vm1846, %v2006, %v2015
      %v2051 = vunpack.c.l.b16 %v1827
      %v2052 = vunpack.c.l.b16 %v1828
      %v2053 = vunpack.c.l.b16 %v1829
      %v2054 = vunpack.c.l.b16 %v1830
      %v2055 = vunpack.c.l.b16 %v1831
      %v2056 = vunpack.c.l.b16 %v1832
      %v2057 = vunpack.c.l.b16 %v1833
      %v2058 = vunpack.c.l.b16 %v1834
      %v2059 = vunpack.c.l.b16 %v1835
      %v2060 = vunpack.c.l.b16 %v1836
      %v2061 = vunpack.c.l.b16 %v1837
      %v2062 = vunpack.c.l.b16 %v1838
      %v2063 = vunpack.c.l.b16 %v1839
      %v2064 = vunpack.c.l.b16 %v1840
      %v2065 = vunpack.c.l.b16 %v1841
      %v2066 = vunpack.c.l.b16 %v1842
      %v2067 = vpack.c.b16 %v2052, %v2051
      %v2068 = vpack.c.b16 %v2054, %v2053
      %v2069 = vpack.c.b16 %v2056, %v2055
      %v2070 = vpack.c.b16 %v2058, %v2057
      %v2071 = vpack.c.b16 %v2060, %v2059
      %v2072 = vpack.c.b16 %v2062, %v2061
      %v2073 = vpack.c.b16 %v2064, %v2063
      %v2074 = vpack.c.b16 %v2066, %v2065
      %2083 = vmatprep.subr.bf16.mxu0 0
      %2084 = vmatpush1.bf16.msra.mxu0 %v2067
      %2085 = vmatprep.subr.bf16.mxu0 0
      %2086 = vmatpush1.bf16.msra.mxu0 %v2068
      %2087 = vmatprep.subr.bf16.mxu0 0
      %2088 = vmatpush1.bf16.msra.mxu0 %v2069
      %2089 = vmatprep.subr.bf16.mxu0 0
      %2090 = vmatpush1.bf16.msra.mxu0 %v2070
      %2091 = vmatprep.subr.bf16.mxu0 0
      %2092 = vmatpush1.bf16.msra.mxu0 %v2071
      %2093 = vmatprep.subr.bf16.mxu0 0
      %2094 = vmatpush1.bf16.msra.mxu0 %v2072
      %2095 = vmatprep.subr.bf16.mxu0 0
      %2096 = vmatpush1.bf16.msra.mxu0 %v2073
      %2097 = vmatprep.subr.bf16.mxu0 0
      %2098 = vmatpush1.bf16.msra.mxu0 %v2074
      %2099 = vmatprep.subr.bf16.mxu0 0
      %2100 = vmatpush1.bf16.msra.mxu0 0
      %2101 = vmatprep.subr.bf16.mxu0 0
      %2102 = vmatpush1.bf16.msra.mxu0 0
      %2103 = vmatprep.subr.bf16.mxu0 0
      %2104 = vmatpush1.bf16.msra.mxu0 0
      %2105 = vmatprep.subr.bf16.mxu0 0
      %2106 = vmatpush1.bf16.msra.mxu0 0
      %2107 = vmatprep.subr.bf16.mxu0 0
      %2108 = vmatpush1.bf16.msra.mxu0 0
      %2109 = vmatprep.subr.bf16.mxu0 0
      %2110 = vmatpush1.bf16.msra.mxu0 0
      %2111 = vmatprep.subr.bf16.mxu0 0
      %2112 = vmatpush1.bf16.msra.mxu0 0
      %2113 = vmatprep.subr.bf16.mxu0 0
      %2114 = vmatpush1.bf16.msra.mxu0 0
      %2115 = vmatprep.mubr.bf16.mxu0 0
      %2116 = vmatmul.mubr.bf16.gmra.mrb[0].mxu0 %v1863
      %v2117 = vpop.f32.mrb[0].mxu0
      %v2118 = vadd.f32 0.0, %v2117
      %v2119 = vpop.f32.mrb[0].mxu0
      %v2120 = vpop.f32.mrb[0].mxu0
      %v2121 = vadd.f32 0.0, %v2120
      %v2122 = vpop.f32.mrb[0].mxu0
      %2123 = vmatprep.mubr.bf16.mxu0 0
      %2124 = vmatmul.mubr.bf16.gmra.mrb[0].mxu0 %v1872
      %v2125 = vpop.f32.mrb[0].mxu0
      %v2126 = vadd.f32 0.0, %v2125
      %v2127 = vpop.f32.mrb[0].mxu0
      %v2128 = vpop.f32.mrb[0].mxu0
      %v2129 = vadd.f32 0.0, %v2128
      %v2130 = vpop.f32.mrb[0].mxu0
      %2131 = vmatprep.mubr.bf16.mxu0 0
      %2132 = vmatmul.mubr.bf16.gmra.mrb[0].mxu0 %v1881
      %v2133 = vpop.f32.mrb[0].mxu0
      %v2134 = vadd.f32 0.0, %v2133
      %v2135 = vpop.f32.mrb[0].mxu0
      %v2136 = vpop.f32.mrb[0].mxu0
      %v2137 = vadd.f32 0.0, %v2136
      %v2138 = vpop.f32.mrb[0].mxu0
      %2139 = vmatprep.mubr.bf16.mxu0 0
      %2140 = vmatmul.mubr.bf16.gmra.mrb[0].mxu0 %v1890
      %v2141 = vpop.f32.mrb[0].mxu0
      %v2142 = vadd.f32 0.0, %v2141
      %v2143 = vpop.f32.mrb[0].mxu0
      %v2144 = vpop.f32.mrb[0].mxu0
      %v2145 = vadd.f32 0.0, %v2144
      %v2146 = vpop.f32.mrb[0].mxu0
      %2147 = vmatprep.mubr.bf16.mxu0 0
      %2148 = vmatmul.mubr.bf16.gmra.mrb[0].mxu0 %v1899
      %v2149 = vpop.f32.mrb[0].mxu0
      %v2150 = vadd.f32 0.0, %v2149
      %v2151 = vpop.f32.mrb[0].mxu0
      %v2152 = vpop.f32.mrb[0].mxu0
      %v2153 = vadd.f32 0.0, %v2152
      %v2154 = vpop.f32.mrb[0].mxu0
      %2155 = vmatprep.mubr.bf16.mxu0 0
      %2156 = vmatmul.mubr.bf16.gmra.mrb[0].mxu0 %v1908
      %v2157 = vpop.f32.mrb[0].mxu0
      %v2158 = vadd.f32 0.0, %v2157
      %v2159 = vpop.f32.mrb[0].mxu0
      %v2160 = vpop.f32.mrb[0].mxu0
      %v2161 = vadd.f32 0.0, %v2160
      %v2162 = vpop.f32.mrb[0].mxu0
      %2163 = vmatprep.mubr.bf16.mxu0 0
      %2164 = vmatmul.mubr.bf16.gmra.mrb[0].mxu0 %v1917
      %v2165 = vpop.f32.mrb[0].mxu0
      %v2166 = vadd.f32 0.0, %v2165
      %v2167 = vpop.f32.mrb[0].mxu0
      %v2168 = vpop.f32.mrb[0].mxu0
      %v2169 = vadd.f32 0.0, %v2168
      %v2170 = vpop.f32.mrb[0].mxu0
      %2171 = vmatprep.mubr.bf16.mxu0 0
      %2172 = vmatmul.mubr.bf16.gmra.mrb[0].mxu0 %v1926
      %v2173 = vpop.f32.mrb[0].mxu0
      %v2174 = vadd.f32 0.0, %v2173
      %v2175 = vpop.f32.mrb[0].mxu0
      %v2176 = vpop.f32.mrb[0].mxu0
      %v2177 = vadd.f32 0.0, %v2176
      %v2178 = vpop.f32.mrb[0].mxu0
      %2179 = vmatprep.mubr.bf16.mxu0 0
      %2180 = vmatmul.mubr.bf16.gmra.mrb[0].mxu0 %v1935
      %v2181 = vpop.f32.mrb[0].mxu0
      %v2182 = vadd.f32 0.0, %v2181
      %v2183 = vpop.f32.mrb[0].mxu0
      %v2184 = vpop.f32.mrb[0].mxu0
      %v2185 = vadd.f32 0.0, %v2184
      %v2186 = vpop.f32.mrb[0].mxu0
      %2187 = vmatprep.mubr.bf16.mxu0 0
      %2188 = vmatmul.mubr.bf16.gmra.mrb[0].mxu0 %v1944
      %v2189 = vpop.f32.mrb[0].mxu0
      %v2190 = vadd.f32 0.0, %v2189
      %v2191 = vpop.f32.mrb[0].mxu0
      %v2192 = vpop.f32.mrb[0].mxu0
      %v2193 = vadd.f32 0.0, %v2192
      %v2194 = vpop.f32.mrb[0].mxu0
      %2195 = vmatprep.mubr.bf16.mxu0 0
      %2196 = vmatmul.mubr.bf16.gmra.mrb[0].mxu0 %v1953
      %v2197 = vpop.f32.mrb[0].mxu0
      %v2198 = vadd.f32 0.0, %v2197
      %v2199 = vpop.f32.mrb[0].mxu0
      %v2200 = vpop.f32.mrb[0].mxu0
      %v2201 = vadd.f32 0.0, %v2200
      %v2202 = vpop.f32.mrb[0].mxu0
      %2203 = vmatprep.mubr.bf16.mxu0 0
      %2204 = vmatmul.mubr.bf16.gmra.mrb[0].mxu0 %v1962
      %v2205 = vpop.f32.mrb[0].mxu0
      %v2206 = vadd.f32 0.0, %v2205
      %v2207 = vpop.f32.mrb[0].mxu0
      %v2208 = vpop.f32.mrb[0].mxu0
      %v2209 = vadd.f32 0.0, %v2208
      %v2210 = vpop.f32.mrb[0].mxu0
      %2211 = vmatprep.mubr.bf16.mxu0 0
      %2212 = vmatmul.mubr.bf16.gmra.mrb[0].mxu0 %v1971
      %v2213 = vpop.f32.mrb[0].mxu0
      %v2214 = vadd.f32 0.0, %v2213
      %v2215 = vpop.f32.mrb[0].mxu0
      %v2216 = vpop.f32.mrb[0].mxu0
      %v2217 = vadd.f32 0.0, %v2216
      %v2218 = vpop.f32.mrb[0].mxu0
      %2219 = vmatprep.mubr.bf16.mxu0 0
      %2220 = vmatmul.mubr.bf16.gmra.mrb[0].mxu0 %v1980
      %v2221 = vpop.f32.mrb[0].mxu0
      %v2222 = vadd.f32 0.0, %v2221
      %v2223 = vpop.f32.mrb[0].mxu0
      %v2224 = vpop.f32.mrb[0].mxu0
      %v2225 = vadd.f32 0.0, %v2224
      %v2226 = vpop.f32.mrb[0].mxu0
      %2227 = vmatprep.mubr.bf16.mxu0 0
      %2228 = vmatmul.mubr.bf16.gmra.mrb[0].mxu0 %v1989
      %v2229 = vpop.f32.mrb[0].mxu0
      %v2230 = vadd.f32 0.0, %v2229
      %v2231 = vpop.f32.mrb[0].mxu0
      %v2232 = vpop.f32.mrb[0].mxu0
      %v2233 = vadd.f32 0.0, %v2232
      %v2234 = vpop.f32.mrb[0].mxu0
      %2235 = vmatprep.mubr.bf16.mxu0 0
      %2236 = vmatmul.mubr.bf16.gmra.mrb[0].mxu0 %v1998
      %v2237 = vpop.f32.mrb[0].mxu0
      %v2238 = vadd.f32 0.0, %v2237
      %v2239 = vpop.f32.mrb[0].mxu0
      %v2240 = vpop.f32.mrb[0].mxu0
      %v2241 = vadd.f32 0.0, %v2240
      %v2242 = vpop.f32.mrb[0].mxu0
      %2243 = vmatprep.mubr.bf16.mxu0 0
      %2244 = vmatmul.mubr.bf16.gmra.mrb[0].mxu0 %v2007
      %v2245 = vpop.f32.mrb[0].mxu0
      %v2246 = vadd.f32 0.0, %v2245
      %v2247 = vpop.f32.mrb[0].mxu0
      %v2248 = vpop.f32.mrb[0].mxu0
      %v2249 = vadd.f32 0.0, %v2248
      %v2250 = vpop.f32.mrb[0].mxu0
      %2251 = vmatprep.mubr.bf16.mxu0 0
      %2252 = vmatmul.mubr.bf16.gmra.mrb[0].mxu0 %v2016
      %v2253 = vpop.f32.mrb[0].mxu0
      %v2254 = vadd.f32 0.0, %v2253
      %v2255 = vpop.f32.mrb[0].mxu0
      %v2256 = vpop.f32.mrb[0].mxu0
      %v2257 = vadd.f32 0.0, %v2256
      %v2258 = vpop.f32.mrb[0].mxu0
      %2259 = vdwg.mxu0
      %v2260 = vadd.f32 %v1789, %v2118
      %v2261 = vadd.f32 %v1790, %v2121
      %v2262 = vadd.f32 %v1791, %v2126
      %v2263 = vadd.f32 %v1792, %v2129
      %v2264 = vadd.f32 %v1793, %v2134
      %v2265 = vadd.f32 %v1794, %v2137
      %v2266 = vadd.f32 %v1795, %v2142
      %v2267 = vadd.f32 %v1796, %v2145
      %v2268 = vadd.f32 %v1797, %v2150
      %v2269 = vadd.f32 %v1798, %v2153
      %v2270 = vadd.f32 %v1799, %v2158
      %v2271 = vadd.f32 %v1800, %v2161
      %v2272 = vadd.f32 %v1801, %v2166
      %v2273 = vadd.f32 %v1802, %v2169
      %v2274 = vadd.f32 %v1803, %v2174
      %v2275 = vadd.f32 %v1804, %v2177
      %v2276 = vadd.f32 %v1805, %v2182
      %v2277 = vadd.f32 %v1806, %v2185
      %v2278 = vadd.f32 %v1807, %v2190
      %v2279 = vadd.f32 %v1808, %v2193
      %v2280 = vadd.f32 %v1809, %v2198
      %v2281 = vadd.f32 %v1810, %v2201
      %v2282 = vadd.f32 %v1811, %v2206
      %v2283 = vadd.f32 %v1812, %v2209
      %v2284 = vadd.f32 %v1813, %v2214
      %v2285 = vadd.f32 %v1814, %v2217
      %v2286 = vadd.f32 %v1815, %v2222
      %v2287 = vadd.f32 %v1816, %v2225
      %v2288 = vadd.f32 %v1817, %v2230
      %v2289 = vadd.f32 %v1818, %v2233
      %v2290 = vadd.f32 %v1819, %v2238
      %v2291 = vadd.f32 %v1820, %v2241
      %v2292 = vadd.f32 %v1821, %v2246
      %v2293 = vadd.f32 %v1822, %v2249
      %v2294 = vadd.f32 %v1823, %v2254
      %v2295 = vadd.f32 %v1824, %v2257
      %v2296 = vld [vmem:[%s219 + $0x8] sm:$0xc]
      %s2297 = scalar_lea.vmem %s1, 320
      %v2298 = vld [vmem:[%s2297] sm:$0xf]
      %v2299 = vld [vmem:[%s2297 + $0x4] sm:$0xf]
      %v2300 = vld [vmem:[%s2297 + $0x8] sm:$0xf]
      %v2301 = vld [vmem:[%s2297 + $0xc] sm:$0xf]
      %v2302 = vld [vmem:[%s2297 + $0x10] sm:$0xf]
      %v2303 = vld [vmem:[%s2297 + $0x14] sm:$0xf]
      %v2304 = vld [vmem:[%s2297 + $0x18] sm:$0xf]
      %v2305 = vld [vmem:[%s2297 + $0x1c] sm:$0xf]
      %v2306 = vld [vmem:[%s2297 + $0x20] sm:$0xf]
      %v2307 = vld [vmem:[%s2297 + $0x24] sm:$0xf]
      %v2308 = vld [vmem:[%s2297 + $0x28] sm:$0xf]
      %v2309 = vld [vmem:[%s2297 + $0x2c] sm:$0xf]
      %v2310 = vld [vmem:[%s2297 + $0x30] sm:$0xf]
      %v2311 = vld [vmem:[%s2297 + $0x34] sm:$0xf]
      %v2312 = vld [vmem:[%s2297 + $0x38] sm:$0xf]
      %v2313 = vld [vmem:[%s2297 + $0x3c] sm:$0xf]
      %v2315 = vunpack.c.l.b16 %v2296
      %v2316 = vpack.c.b16 %v1454, %v2315
      %vm2317 = vcmask 1045504
      %v2318 = vrot.slane %v2316, 2
      %v2319 = vrot.slane %v1491, 2
      %v2320 = vsel %vm2317, %v2318, %v2319
      %v2321 = vrot.slane %v1492, 2
      %v2322 = vsel %vm2317, %v2319, %v2321
      %v2323 = vrot.slane %v1493, 2
      %v2324 = vsel %vm2317, %v2321, %v2323
      %v2325 = vrot.slane %v1494, 2
      %v2326 = vsel %vm2317, %v2323, %v2325
      %v2327 = vrot.slane %v1495, 2
      %v2328 = vsel %vm2317, %v2325, %v2327
      %v2329 = vrot.slane %v1496, 2
      %v2330 = vsel %vm2317, %v2327, %v2329
      %v2331 = vrot.slane %v1497, 2
      %v2332 = vsel %vm2317, %v2329, %v2331
      %v2333 = vrot.slane %v1498, 2
      %v2334 = vsel %vm2317, %v2331, %v2333
      %v2335 = vrot.slane %v1499, 2
      %v2336 = vsel %vm2317, %v2333, %v2335
      %v2337 = vrot.slane %v1500, 2
      %v2338 = vsel %vm2317, %v2335, %v2337
      %v2339 = vrot.slane %v1501, 2
      %v2340 = vsel %vm2317, %v2337, %v2339
      %v2341 = vrot.slane %v1502, 2
      %v2342 = vsel %vm2317, %v2339, %v2341
      %v2343 = vrot.slane %v1503, 2
      %v2344 = vsel %vm2317, %v2341, %v2343
      %v2345 = vrot.slane %v1504, 2
      %v2346 = vsel %vm2317, %v2343, %v2345
      %v2347 = vrot.slane %v1505, 2
      %v2348 = vsel %vm2317, %v2345, %v2347
      %v2349 = vrot.slane %v1506, 2
      %v2350 = vsel %vm2317, %v2347, %v2349
      %v2351 = vrot.slane %v1507, 2
      %v2352 = vsel %vm2317, %v2349, %v2351
      %v2353 = vrot.slane %v1845, 2
      %v2354 = vsel %vm2317, %v2351, %v2353
      %v2389 = vunpack.c.l.b16 %v2298
      %v2390 = vunpack.c.l.b16 %v2299
      %v2391 = vunpack.c.l.b16 %v2300
      %v2392 = vunpack.c.l.b16 %v2301
      %v2393 = vunpack.c.l.b16 %v2302
      %v2394 = vunpack.c.l.b16 %v2303
      %v2395 = vunpack.c.l.b16 %v2304
      %v2396 = vunpack.c.l.b16 %v2305
      %v2397 = vunpack.c.l.b16 %v2306
      %v2398 = vunpack.c.l.b16 %v2307
      %v2399 = vunpack.c.l.b16 %v2308
      %v2400 = vunpack.c.l.b16 %v2309
      %v2401 = vunpack.c.l.b16 %v2310
      %v2402 = vunpack.c.l.b16 %v2311
      %v2403 = vunpack.c.l.b16 %v2312
      %v2404 = vunpack.c.l.b16 %v2313
      %v2405 = vpack.c.b16 %v2390, %v2389
      %v2406 = vpack.c.b16 %v2392, %v2391
      %v2407 = vpack.c.b16 %v2394, %v2393
      %v2408 = vpack.c.b16 %v2396, %v2395
      %v2409 = vpack.c.b16 %v2398, %v2397
      %v2410 = vpack.c.b16 %v2400, %v2399
      %v2411 = vpack.c.b16 %v2402, %v2401
      %v2412 = vpack.c.b16 %v2404, %v2403
      %2421 = vmatprep.subr.bf16.mxu0 0
      %2422 = vmatpush1.bf16.msra.mxu0 %v2405
      %2423 = vmatprep.subr.bf16.mxu0 0
      %2424 = vmatpush1.bf16.msra.mxu0 %v2406
      %2425 = vmatprep.subr.bf16.mxu0 0
      %2426 = vmatpush1.bf16.msra.mxu0 %v2407
      %2427 = vmatprep.subr.bf16.mxu0 0
      %2428 = vmatpush1.bf16.msra.mxu0 %v2408
      %2429 = vmatprep.subr.bf16.mxu0 0
      %2430 = vmatpush1.bf16.msra.mxu0 %v2409
      %2431 = vmatprep.subr.bf16.mxu0 0
      %2432 = vmatpush1.bf16.msra.mxu0 %v2410
      %2433 = vmatprep.subr.bf16.mxu0 0
      %2434 = vmatpush1.bf16.msra.mxu0 %v2411
      %2435 = vmatprep.subr.bf16.mxu0 0
      %2436 = vmatpush1.bf16.msra.mxu0 %v2412
      %2437 = vmatprep.subr.bf16.mxu0 0
      %2438 = vmatpush1.bf16.msra.mxu0 0
      %2439 = vmatprep.subr.bf16.mxu0 0
      %2440 = vmatpush1.bf16.msra.mxu0 0
      %2441 = vmatprep.subr.bf16.mxu0 0
      %2442 = vmatpush1.bf16.msra.mxu0 0
      %2443 = vmatprep.subr.bf16.mxu0 0
      %2444 = vmatpush1.bf16.msra.mxu0 0
      %2445 = vmatprep.subr.bf16.mxu0 0
      %2446 = vmatpush1.bf16.msra.mxu0 0
      %2447 = vmatprep.subr.bf16.mxu0 0
      %2448 = vmatpush1.bf16.msra.mxu0 0
      %2449 = vmatprep.subr.bf16.mxu0 0
      %2450 = vmatpush1.bf16.msra.mxu0 0
      %2451 = vmatprep.subr.bf16.mxu0 0
      %2452 = vmatpush1.bf16.msra.mxu0 0
      %2453 = vmatprep.mubr.bf16.mxu0 0
      %2454 = vmatmul.mubr.bf16.gmra.mrb[0].mxu0 %v2320
      %v2455 = vpop.f32.mrb[0].mxu0
      %v2456 = vadd.f32 0.0, %v2455
      %v2457 = vpop.f32.mrb[0].mxu0
      %v2458 = vpop.f32.mrb[0].mxu0
      %v2459 = vadd.f32 0.0, %v2458
      %v2460 = vpop.f32.mrb[0].mxu0
      %2461 = vmatprep.mubr.bf16.mxu0 0
      %2462 = vmatmul.mubr.bf16.gmra.mrb[0].mxu0 %v2322
      %v2463 = vpop.f32.mrb[0].mxu0
      %v2464 = vadd.f32 0.0, %v2463
      %v2465 = vpop.f32.mrb[0].mxu0
      %v2466 = vpop.f32.mrb[0].mxu0
      %v2467 = vadd.f32 0.0, %v2466
      %v2468 = vpop.f32.mrb[0].mxu0
      %2469 = vmatprep.mubr.bf16.mxu0 0
      %2470 = vmatmul.mubr.bf16.gmra.mrb[0].mxu0 %v2324
      %v2471 = vpop.f32.mrb[0].mxu0
      %v2472 = vadd.f32 0.0, %v2471
      %v2473 = vpop.f32.mrb[0].mxu0
      %v2474 = vpop.f32.mrb[0].mxu0
      %v2475 = vadd.f32 0.0, %v2474
      %v2476 = vpop.f32.mrb[0].mxu0
      %2477 = vmatprep.mubr.bf16.mxu0 0
      %2478 = vmatmul.mubr.bf16.gmra.mrb[0].mxu0 %v2326
      %v2479 = vpop.f32.mrb[0].mxu0
      %v2480 = vadd.f32 0.0, %v2479
      %v2481 = vpop.f32.mrb[0].mxu0
      %v2482 = vpop.f32.mrb[0].mxu0
      %v2483 = vadd.f32 0.0, %v2482
      %v2484 = vpop.f32.mrb[0].mxu0
      %2485 = vmatprep.mubr.bf16.mxu0 0
      %2486 = vmatmul.mubr.bf16.gmra.mrb[0].mxu0 %v2328
      %v2487 = vpop.f32.mrb[0].mxu0
      %v2488 = vadd.f32 0.0, %v2487
      %v2489 = vpop.f32.mrb[0].mxu0
      %v2490 = vpop.f32.mrb[0].mxu0
      %v2491 = vadd.f32 0.0, %v2490
      %v2492 = vpop.f32.mrb[0].mxu0
      %2493 = vmatprep.mubr.bf16.mxu0 0
      %2494 = vmatmul.mubr.bf16.gmra.mrb[0].mxu0 %v2330
      %v2495 = vpop.f32.mrb[0].mxu0
      %v2496 = vadd.f32 0.0, %v2495
      %v2497 = vpop.f32.mrb[0].mxu0
      %v2498 = vpop.f32.mrb[0].mxu0
      %v2499 = vadd.f32 0.0, %v2498
      %v2500 = vpop.f32.mrb[0].mxu0
      %2501 = vmatprep.mubr.bf16.mxu0 0
      %2502 = vmatmul.mubr.bf16.gmra.mrb[0].mxu0 %v2332
      %v2503 = vpop.f32.mrb[0].mxu0
      %v2504 = vadd.f32 0.0, %v2503
      %v2505 = vpop.f32.mrb[0].mxu0
      %v2506 = vpop.f32.mrb[0].mxu0
      %v2507 = vadd.f32 0.0, %v2506
      %v2508 = vpop.f32.mrb[0].mxu0
      %2509 = vmatprep.mubr.bf16.mxu0 0
      %2510 = vmatmul.mubr.bf16.gmra.mrb[0].mxu0 %v2334
      %v2511 = vpop.f32.mrb[0].mxu0
      %v2512 = vadd.f32 0.0, %v2511
      %v2513 = vpop.f32.mrb[0].mxu0
      %v2514 = vpop.f32.mrb[0].mxu0
      %v2515 = vadd.f32 0.0, %v2514
      %v2516 = vpop.f32.mrb[0].mxu0
      %2517 = vmatprep.mubr.bf16.mxu0 0
      %2518 = vmatmul.mubr.bf16.gmra.mrb[0].mxu0 %v2336
      %v2519 = vpop.f32.mrb[0].mxu0
      %v2520 = vadd.f32 0.0, %v2519
      %v2521 = vpop.f32.mrb[0].mxu0
      %v2522 = vpop.f32.mrb[0].mxu0
      %v2523 = vadd.f32 0.0, %v2522
      %v2524 = vpop.f32.mrb[0].mxu0
      %2525 = vmatprep.mubr.bf16.mxu0 0
      %2526 = vmatmul.mubr.bf16.gmra.mrb[0].mxu0 %v2338
      %v2527 = vpop.f32.mrb[0].mxu0
      %v2528 = vadd.f32 0.0, %v2527
      %v2529 = vpop.f32.mrb[0].mxu0
      %v2530 = vpop.f32.mrb[0].mxu0
      %v2531 = vadd.f32 0.0, %v2530
      %v2532 = vpop.f32.mrb[0].mxu0
      %2533 = vmatprep.mubr.bf16.mxu0 0
      %2534 = vmatmul.mubr.bf16.gmra.mrb[0].mxu0 %v2340
      %v2535 = vpop.f32.mrb[0].mxu0
      %v2536 = vadd.f32 0.0, %v2535
      %v2537 = vpop.f32.mrb[0].mxu0
      %v2538 = vpop.f32.mrb[0].mxu0
      %v2539 = vadd.f32 0.0, %v2538
      %v2540 = vpop.f32.mrb[0].mxu0
      %2541 = vmatprep.mubr.bf16.mxu0 0
      %2542 = vmatmul.mubr.bf16.gmra.mrb[0].mxu0 %v2342
      %v2543 = vpop.f32.mrb[0].mxu0
      %v2544 = vadd.f32 0.0, %v2543
      %v2545 = vpop.f32.mrb[0].mxu0
      %v2546 = vpop.f32.mrb[0].mxu0
      %v2547 = vadd.f32 0.0, %v2546
      %v2548 = vpop.f32.mrb[0].mxu0
      %2549 = vmatprep.mubr.bf16.mxu0 0
      %2550 = vmatmul.mubr.bf16.gmra.mrb[0].mxu0 %v2344
      %v2551 = vpop.f32.mrb[0].mxu0
      %v2552 = vadd.f32 0.0, %v2551
      %v2553 = vpop.f32.mrb[0].mxu0
      %v2554 = vpop.f32.mrb[0].mxu0
      %v2555 = vadd.f32 0.0, %v2554
      %v2556 = vpop.f32.mrb[0].mxu0
      %2557 = vmatprep.mubr.bf16.mxu0 0
      %2558 = vmatmul.mubr.bf16.gmra.mrb[0].mxu0 %v2346
      %v2559 = vpop.f32.mrb[0].mxu0
      %v2560 = vadd.f32 0.0, %v2559
      %v2561 = vpop.f32.mrb[0].mxu0
      %v2562 = vpop.f32.mrb[0].mxu0
      %v2563 = vadd.f32 0.0, %v2562
      %v2564 = vpop.f32.mrb[0].mxu0
      %2565 = vmatprep.mubr.bf16.mxu0 0
      %2566 = vmatmul.mubr.bf16.gmra.mrb[0].mxu0 %v2348
      %v2567 = vpop.f32.mrb[0].mxu0
      %v2568 = vadd.f32 0.0, %v2567
      %v2569 = vpop.f32.mrb[0].mxu0
      %v2570 = vpop.f32.mrb[0].mxu0
      %v2571 = vadd.f32 0.0, %v2570
      %v2572 = vpop.f32.mrb[0].mxu0
      %2573 = vmatprep.mubr.bf16.mxu0 0
      %2574 = vmatmul.mubr.bf16.gmra.mrb[0].mxu0 %v2350
      %v2575 = vpop.f32.mrb[0].mxu0
      %v2576 = vadd.f32 0.0, %v2575
      %v2577 = vpop.f32.mrb[0].mxu0
      %v2578 = vpop.f32.mrb[0].mxu0
      %v2579 = vadd.f32 0.0, %v2578
      %v2580 = vpop.f32.mrb[0].mxu0
      %2581 = vmatprep.mubr.bf16.mxu0 0
      %2582 = vmatmul.mubr.bf16.gmra.mrb[0].mxu0 %v2352
      %v2583 = vpop.f32.mrb[0].mxu0
      %v2584 = vadd.f32 0.0, %v2583
      %v2585 = vpop.f32.mrb[0].mxu0
      %v2586 = vpop.f32.mrb[0].mxu0
      %v2587 = vadd.f32 0.0, %v2586
      %v2588 = vpop.f32.mrb[0].mxu0
      %2589 = vmatprep.mubr.bf16.mxu0 0
      %2590 = vmatmul.mubr.bf16.gmra.mrb[0].mxu0 %v2354
      %v2591 = vpop.f32.mrb[0].mxu0
      %v2592 = vadd.f32 0.0, %v2591
      %v2593 = vpop.f32.mrb[0].mxu0
      %v2594 = vpop.f32.mrb[0].mxu0
      %v2595 = vadd.f32 0.0, %v2594
      %v2596 = vpop.f32.mrb[0].mxu0
      %2597 = vdwg.mxu0
      %v2598 = vadd.f32 %v2260, %v2456
      %v2599 = vadd.f32 %v2261, %v2459
      %v2600 = vadd.f32 %v2262, %v2464
      %v2601 = vadd.f32 %v2263, %v2467
      %v2602 = vadd.f32 %v2264, %v2472
      %v2603 = vadd.f32 %v2265, %v2475
      %v2604 = vadd.f32 %v2266, %v2480
      %v2605 = vadd.f32 %v2267, %v2483
      %v2606 = vadd.f32 %v2268, %v2488
      %v2607 = vadd.f32 %v2269, %v2491
      %v2608 = vadd.f32 %v2270, %v2496
      %v2609 = vadd.f32 %v2271, %v2499
      %v2610 = vadd.f32 %v2272, %v2504
      %v2611 = vadd.f32 %v2273, %v2507
      %v2612 = vadd.f32 %v2274, %v2512
      %v2613 = vadd.f32 %v2275, %v2515
      %v2614 = vadd.f32 %v2276, %v2520
      %v2615 = vadd.f32 %v2277, %v2523
      %v2616 = vadd.f32 %v2278, %v2528
      %v2617 = vadd.f32 %v2279, %v2531
      %v2618 = vadd.f32 %v2280, %v2536
      %v2619 = vadd.f32 %v2281, %v2539
      %v2620 = vadd.f32 %v2282, %v2544
      %v2621 = vadd.f32 %v2283, %v2547
      %v2622 = vadd.f32 %v2284, %v2552
      %v2623 = vadd.f32 %v2285, %v2555
      %v2624 = vadd.f32 %v2286, %v2560
      %v2625 = vadd.f32 %v2287, %v2563
      %v2626 = vadd.f32 %v2288, %v2568
      %v2627 = vadd.f32 %v2289, %v2571
      %v2628 = vadd.f32 %v2290, %v2576
      %v2629 = vadd.f32 %v2291, %v2579
      %v2630 = vadd.f32 %v2292, %v2584
      %v2631 = vadd.f32 %v2293, %v2587
      %v2632 = vadd.f32 %v2294, %v2592
      %v2633 = vadd.f32 %v2295, %v2595
      %v2634 = vld [vmem:[%s219 + $0x10] sm:$0xc]
      %v2635 = vld [vmem:[%s219 + $0x14] sm:$0xf]
      %v2636 = vld [vmem:[%s219 + $0x18] sm:$0xf]
      %v2637 = vld [vmem:[%s219 + $0x1c] sm:$0xf]
      %v2638 = vld [vmem:[%s219 + $0x20] sm:$0xf]
      %v2639 = vld [vmem:[%s219 + $0x24] sm:$0xf]
      %v2640 = vld [vmem:[%s219 + $0x28] sm:$0xf]
      %v2641 = vld [vmem:[%s219 + $0x2c] sm:$0xf]
      %v2642 = vld [vmem:[%s219 + $0x30] sm:$0xf]
      %v2643 = vld [vmem:[%s219 + $0x34] sm:$0xf]
      %v2644 = vld [vmem:[%s219 + $0x38] sm:$0xf]
      %v2645 = vld [vmem:[%s219 + $0x3c] sm:$0xf]
      %v2646 = vld [vmem:[%s219 + $0x40] sm:$0xf]
      %v2647 = vld [vmem:[%s219 + $0x44] sm:$0xf]
      %v2648 = vld [vmem:[%s219 + $0x48] sm:$0xf]
      %v2649 = vld [vmem:[%s219 + $0x4c] sm:$0xf]
      %v2650 = vld [vmem:[%s219 + $0x50] sm:$0xf]
      %v2651 = vld [vmem:[%s219 + $0x54] sm:$0xf]
      %v2652 = vld [vmem:[%s219 + $0x58] sm:$0xf]
      %v2653 = vld [vmem:[%s219 + $0x5c] sm:$0xf]
      %v2654 = vld [vmem:[%s219 + $0x60] sm:$0xf]
      %v2655 = vld [vmem:[%s219 + $0x64] sm:$0xf]
      %v2656 = vld [vmem:[%s219 + $0x68] sm:$0xf]
      %v2657 = vld [vmem:[%s219 + $0x6c] sm:$0xf]
      %v2658 = vld [vmem:[%s219 + $0x70] sm:$0xf]
      %v2659 = vld [vmem:[%s219 + $0x74] sm:$0xf]
      %v2660 = vld [vmem:[%s219 + $0x78] sm:$0xf]
      %v2661 = vld [vmem:[%s219 + $0x7c] sm:$0xf]
      %v2662 = vld [vmem:[%s219 + $0x80] sm:$0xf]
      %v2663 = vld [vmem:[%s219 + $0x84] sm:$0xf]
      %v2664 = vld [vmem:[%s219 + $0x88] sm:$0xf]
      %v2665 = vld [vmem:[%s219 + $0x8c] sm:$0xf]
      %v2666 = vld [vmem:[%s219 + $0x90] sm:$0xf]
      %v2667 = vld [vmem:[%s219 + $0x94] sm:$0xf]
      %v2668 = vld [vmem:[%s219 + $0x98] sm:$0xf]
      %v2669 = vld [vmem:[%s219 + $0x9c] sm:$0xf]
      %v2670 = vld [vmem:[%s219 + $0xa0] sm:$0x3]
      %s2671 = scalar_lea.vmem %s1, 384
      %v2672 = vld [vmem:[%s2671] sm:$0xf]
      %v2673 = vld [vmem:[%s2671 + $0x4] sm:$0xf]
      %v2674 = vld [vmem:[%s2671 + $0x8] sm:$0xf]
      %v2675 = vld [vmem:[%s2671 + $0xc] sm:$0xf]
      %v2676 = vld [vmem:[%s2671 + $0x10] sm:$0xf]
      %v2677 = vld [vmem:[%s2671 + $0x14] sm:$0xf]
      %v2678 = vld [vmem:[%s2671 + $0x18] sm:$0xf]
      %v2679 = vld [vmem:[%s2671 + $0x1c] sm:$0xf]
      %v2680 = vld [vmem:[%s2671 + $0x20] sm:$0xf]
      %v2681 = vld [vmem:[%s2671 + $0x24] sm:$0xf]
      %v2682 = vld [vmem:[%s2671 + $0x28] sm:$0xf]
      %v2683 = vld [vmem:[%s2671 + $0x2c] sm:$0xf]
      %v2684 = vld [vmem:[%s2671 + $0x30] sm:$0xf]
      %v2685 = vld [vmem:[%s2671 + $0x34] sm:$0xf]
      %v2686 = vld [vmem:[%s2671 + $0x38] sm:$0xf]
      %v2687 = vld [vmem:[%s2671 + $0x3c] sm:$0xf]
      %v2725 = vunpack.c.l.b16 %v2634
      %v2726 = vunpack.c.l.b16 %v2635
      %v2727 = vunpack.c.l.b16 %v2636
      %v2728 = vunpack.c.l.b16 %v2637
      %v2729 = vunpack.c.l.b16 %v2638
      %v2730 = vunpack.c.l.b16 %v2639
      %v2731 = vunpack.c.l.b16 %v2640
      %v2732 = vunpack.c.l.b16 %v2641
      %v2733 = vunpack.c.l.b16 %v2642
      %v2734 = vunpack.c.l.b16 %v2643
      %v2735 = vunpack.c.l.b16 %v2644
      %v2736 = vunpack.c.l.b16 %v2645
      %v2737 = vunpack.c.l.b16 %v2646
      %v2738 = vunpack.c.l.b16 %v2647
      %v2739 = vunpack.c.l.b16 %v2648
      %v2740 = vunpack.c.l.b16 %v2649
      %v2741 = vunpack.c.l.b16 %v2650
      %v2742 = vunpack.c.l.b16 %v2651
      %v2743 = vunpack.c.l.b16 %v2652
      %v2744 = vunpack.c.l.b16 %v2653
      %v2745 = vunpack.c.l.b16 %v2654
      %v2746 = vunpack.c.l.b16 %v2655
      %v2747 = vunpack.c.l.b16 %v2656
      %v2748 = vunpack.c.l.b16 %v2657
      %v2749 = vunpack.c.l.b16 %v2658
      %v2750 = vunpack.c.l.b16 %v2659
      %v2751 = vunpack.c.l.b16 %v2660
      %v2752 = vunpack.c.l.b16 %v2661
      %v2753 = vunpack.c.l.b16 %v2662
      %v2754 = vunpack.c.l.b16 %v2663
      %v2755 = vunpack.c.l.b16 %v2664
      %v2756 = vunpack.c.l.b16 %v2665
      %v2757 = vunpack.c.l.b16 %v2666
      %v2758 = vunpack.c.l.b16 %v2667
      %v2759 = vunpack.c.l.b16 %v2668
      %v2760 = vunpack.c.l.b16 %v2669
      %v2761 = vunpack.c.l.b16 %v2670
      %v2762 = vpack.c.b16 %v2726, %v2725
      %v2763 = vpack.c.b16 %v2728, %v2727
      %v2764 = vpack.c.b16 %v2730, %v2729
      %v2765 = vpack.c.b16 %v2732, %v2731
      %v2766 = vpack.c.b16 %v2734, %v2733
      %v2767 = vpack.c.b16 %v2736, %v2735
      %v2768 = vpack.c.b16 %v2738, %v2737
      %v2769 = vpack.c.b16 %v2740, %v2739
      %v2770 = vpack.c.b16 %v2742, %v2741
      %v2771 = vpack.c.b16 %v2744, %v2743
      %v2772 = vpack.c.b16 %v2746, %v2745
      %v2773 = vpack.c.b16 %v2748, %v2747
      %v2774 = vpack.c.b16 %v2750, %v2749
      %v2775 = vpack.c.b16 %v2752, %v2751
      %v2776 = vpack.c.b16 %v2754, %v2753
      %v2777 = vpack.c.b16 %v2756, %v2755
      %v2778 = vpack.c.b16 %v2758, %v2757
      %v2779 = vpack.c.b16 %v2760, %v2759
      %v2780 = vpack.c.b16 %v2761, %v2761
      %v2781 = vrot.slane %v2762, 2
      %v2782 = vrot.slane %v2763, 2
      %v2783 = vsel %vm2317, %v2781, %v2782
      %v2784 = vrot.slane %v2764, 2
      %v2785 = vsel %vm2317, %v2782, %v2784
      %v2786 = vrot.slane %v2765, 2
      %v2787 = vsel %vm2317, %v2784, %v2786
      %v2788 = vrot.slane %v2766, 2
      %v2789 = vsel %vm2317, %v2786, %v2788
      %v2790 = vrot.slane %v2767, 2
      %v2791 = vsel %vm2317, %v2788, %v2790
      %v2792 = vrot.slane %v2768, 2
      %v2793 = vsel %vm2317, %v2790, %v2792
      %v2794 = vrot.slane %v2769, 2
      %v2795 = vsel %vm2317, %v2792, %v2794
      %v2796 = vrot.slane %v2770, 2
      %v2797 = vsel %vm2317, %v2794, %v2796
      %v2798 = vrot.slane %v2771, 2
      %v2799 = vsel %vm2317, %v2796, %v2798
      %v2800 = vrot.slane %v2772, 2
      %v2801 = vsel %vm2317, %v2798, %v2800
      %v2802 = vrot.slane %v2773, 2
      %v2803 = vsel %vm2317, %v2800, %v2802
      %v2804 = vrot.slane %v2774, 2
      %v2805 = vsel %vm2317, %v2802, %v2804
      %v2806 = vrot.slane %v2775, 2
      %v2807 = vsel %vm2317, %v2804, %v2806
      %v2808 = vrot.slane %v2776, 2
      %v2809 = vsel %vm2317, %v2806, %v2808
      %v2810 = vrot.slane %v2777, 2
      %v2811 = vsel %vm2317, %v2808, %v2810
      %v2812 = vrot.slane %v2778, 2
      %v2813 = vsel %vm2317, %v2810, %v2812
      %v2814 = vrot.slane %v2779, 2
      %v2815 = vsel %vm2317, %v2812, %v2814
      %v2816 = vrot.slane %v2780, 2
      %v2817 = vsel %vm2317, %v2814, %v2816
      %v2852 = vunpack.c.l.b16 %v2672
      %v2853 = vunpack.c.l.b16 %v2673
      %v2854 = vunpack.c.l.b16 %v2674
      %v2855 = vunpack.c.l.b16 %v2675
      %v2856 = vunpack.c.l.b16 %v2676
      %v2857 = vunpack.c.l.b16 %v2677
      %v2858 = vunpack.c.l.b16 %v2678
      %v2859 = vunpack.c.l.b16 %v2679
      %v2860 = vunpack.c.l.b16 %v2680
      %v2861 = vunpack.c.l.b16 %v2681
      %v2862 = vunpack.c.l.b16 %v2682
      %v2863 = vunpack.c.l.b16 %v2683
      %v2864 = vunpack.c.l.b16 %v2684
      %v2865 = vunpack.c.l.b16 %v2685
      %v2866 = vunpack.c.l.b16 %v2686
      %v2867 = vunpack.c.l.b16 %v2687
      %v2868 = vpack.c.b16 %v2853, %v2852
      %v2869 = vpack.c.b16 %v2855, %v2854
      %v2870 = vpack.c.b16 %v2857, %v2856
      %v2871 = vpack.c.b16 %v2859, %v2858
      %v2872 = vpack.c.b16 %v2861, %v2860
      %v2873 = vpack.c.b16 %v2863, %v2862
      %v2874 = vpack.c.b16 %v2865, %v2864
      %v2875 = vpack.c.b16 %v2867, %v2866
      %2884 = vmatprep.subr.bf16.mxu0 0
      %2885 = vmatpush1.bf16.msra.mxu0 %v2868
      %2886 = vmatprep.subr.bf16.mxu0 0
      %2887 = vmatpush1.bf16.msra.mxu0 %v2869
      %2888 = vmatprep.subr.bf16.mxu0 0
      %2889 = vmatpush1.bf16.msra.mxu0 %v2870
      %2890 = vmatprep.subr.bf16.mxu0 0
      %2891 = vmatpush1.bf16.msra.mxu0 %v2871
      %2892 = vmatprep.subr.bf16.mxu0 0
      %2893 = vmatpush1.bf16.msra.mxu0 %v2872
      %2894 = vmatprep.subr.bf16.mxu0 0
      %2895 = vmatpush1.bf16.msra.mxu0 %v2873
      %2896 = vmatprep.subr.bf16.mxu0 0
      %2897 = vmatpush1.bf16.msra.mxu0 %v2874
      %2898 = vmatprep.subr.bf16.mxu0 0
      %2899 = vmatpush1.bf16.msra.mxu0 %v2875
      %2900 = vmatprep.subr.bf16.mxu0 0
      %2901 = vmatpush1.bf16.msra.mxu0 0
      %2902 = vmatprep.subr.bf16.mxu0 0
      %2903 = vmatpush1.bf16.msra.mxu0 0
      %2904 = vmatprep.subr.bf16.mxu0 0
      %2905 = vmatpush1.bf16.msra.mxu0 0
      %2906 = vmatprep.subr.bf16.mxu0 0
      %2907 = vmatpush1.bf16.msra.mxu0 0
      %2908 = vmatprep.subr.bf16.mxu0 0
      %2909 = vmatpush1.bf16.msra.mxu0 0
      %2910 = vmatprep.subr.bf16.mxu0 0
      %2911 = vmatpush1.bf16.msra.mxu0 0
      %2912 = vmatprep.subr.bf16.mxu0 0
      %2913 = vmatpush1.bf16.msra.mxu0 0
      %2914 = vmatprep.subr.bf16.mxu0 0
      %2915 = vmatpush1.bf16.msra.mxu0 0
      %2916 = vmatprep.mubr.bf16.mxu0 0
      %2917 = vmatmul.mubr.bf16.gmra.mrb[0].mxu0 %v2783
      %v2918 = vpop.f32.mrb[0].mxu0
      %v2919 = vadd.f32 0.0, %v2918
      %v2920 = vpop.f32.mrb[0].mxu0
      %v2921 = vpop.f32.mrb[0].mxu0
      %v2922 = vadd.f32 0.0, %v2921
      %v2923 = vpop.f32.mrb[0].mxu0
      %2924 = vmatprep.mubr.bf16.mxu0 0
      %2925 = vmatmul.mubr.bf16.gmra.mrb[0].mxu0 %v2785
      %v2926 = vpop.f32.mrb[0].mxu0
      %v2927 = vadd.f32 0.0, %v2926
      %v2928 = vpop.f32.mrb[0].mxu0
      %v2929 = vpop.f32.mrb[0].mxu0
      %v2930 = vadd.f32 0.0, %v2929
      %v2931 = vpop.f32.mrb[0].mxu0
      %2932 = vmatprep.mubr.bf16.mxu0 0
      %2933 = vmatmul.mubr.bf16.gmra.mrb[0].mxu0 %v2787
      %v2934 = vpop.f32.mrb[0].mxu0
      %v2935 = vadd.f32 0.0, %v2934
      %v2936 = vpop.f32.mrb[0].mxu0
      %v2937 = vpop.f32.mrb[0].mxu0
      %v2938 = vadd.f32 0.0, %v2937
      %v2939 = vpop.f32.mrb[0].mxu0
      %2940 = vmatprep.mubr.bf16.mxu0 0
      %2941 = vmatmul.mubr.bf16.gmra.mrb[0].mxu0 %v2789
      %v2942 = vpop.f32.mrb[0].mxu0
      %v2943 = vadd.f32 0.0, %v2942
      %v2944 = vpop.f32.mrb[0].mxu0
      %v2945 = vpop.f32.mrb[0].mxu0
      %v2946 = vadd.f32 0.0, %v2945
      %v2947 = vpop.f32.mrb[0].mxu0
      %2948 = vmatprep.mubr.bf16.mxu0 0
      %2949 = vmatmul.mubr.bf16.gmra.mrb[0].mxu0 %v2791
      %v2950 = vpop.f32.mrb[0].mxu0
      %v2951 = vadd.f32 0.0, %v2950
      %v2952 = vpop.f32.mrb[0].mxu0
      %v2953 = vpop.f32.mrb[0].mxu0
      %v2954 = vadd.f32 0.0, %v2953
      %v2955 = vpop.f32.mrb[0].mxu0
      %2956 = vmatprep.mubr.bf16.mxu0 0
      %2957 = vmatmul.mubr.bf16.gmra.mrb[0].mxu0 %v2793
      %v2958 = vpop.f32.mrb[0].mxu0
      %v2959 = vadd.f32 0.0, %v2958
      %v2960 = vpop.f32.mrb[0].mxu0
      %v2961 = vpop.f32.mrb[0].mxu0
      %v2962 = vadd.f32 0.0, %v2961
      %v2963 = vpop.f32.mrb[0].mxu0
      %2964 = vmatprep.mubr.bf16.mxu0 0
      %2965 = vmatmul.mubr.bf16.gmra.mrb[0].mxu0 %v2795
      %v2966 = vpop.f32.mrb[0].mxu0
      %v2967 = vadd.f32 0.0, %v2966
      %v2968 = vpop.f32.mrb[0].mxu0
      %v2969 = vpop.f32.mrb[0].mxu0
      %v2970 = vadd.f32 0.0, %v2969
      %v2971 = vpop.f32.mrb[0].mxu0
      %2972 = vmatprep.mubr.bf16.mxu0 0
      %2973 = vmatmul.mubr.bf16.gmra.mrb[0].mxu0 %v2797
      %v2974 = vpop.f32.mrb[0].mxu0
      %v2975 = vadd.f32 0.0, %v2974
      %v2976 = vpop.f32.mrb[0].mxu0
      %v2977 = vpop.f32.mrb[0].mxu0
      %v2978 = vadd.f32 0.0, %v2977
      %v2979 = vpop.f32.mrb[0].mxu0
      %2980 = vmatprep.mubr.bf16.mxu0 0
      %2981 = vmatmul.mubr.bf16.gmra.mrb[0].mxu0 %v2799
      %v2982 = vpop.f32.mrb[0].mxu0
      %v2983 = vadd.f32 0.0, %v2982
      %v2984 = vpop.f32.mrb[0].mxu0
      %v2985 = vpop.f32.mrb[0].mxu0
      %v2986 = vadd.f32 0.0, %v2985
      %v2987 = vpop.f32.mrb[0].mxu0
      %2988 = vmatprep.mubr.bf16.mxu0 0
      %2989 = vmatmul.mubr.bf16.gmra.mrb[0].mxu0 %v2801
      %v2990 = vpop.f32.mrb[0].mxu0
      %v2991 = vadd.f32 0.0, %v2990
      %v2992 = vpop.f32.mrb[0].mxu0
      %v2993 = vpop.f32.mrb[0].mxu0
      %v2994 = vadd.f32 0.0, %v2993
      %v2995 = vpop.f32.mrb[0].mxu0
      %2996 = vmatprep.mubr.bf16.mxu0 0
      %2997 = vmatmul.mubr.bf16.gmra.mrb[0].mxu0 %v2803
      %v2998 = vpop.f32.mrb[0].mxu0
      %v2999 = vadd.f32 0.0, %v2998
      %v3000 = vpop.f32.mrb[0].mxu0
      %v3001 = vpop.f32.mrb[0].mxu0
      %v3002 = vadd.f32 0.0, %v3001
      %v3003 = vpop.f32.mrb[0].mxu0
      %3004 = vmatprep.mubr.bf16.mxu0 0
      %3005 = vmatmul.mubr.bf16.gmra.mrb[0].mxu0 %v2805
      %v3006 = vpop.f32.mrb[0].mxu0
      %v3007 = vadd.f32 0.0, %v3006
      %v3008 = vpop.f32.mrb[0].mxu0
      %v3009 = vpop.f32.mrb[0].mxu0
      %v3010 = vadd.f32 0.0, %v3009
      %v3011 = vpop.f32.mrb[0].mxu0
      %3012 = vmatprep.mubr.bf16.mxu0 0
      %3013 = vmatmul.mubr.bf16.gmra.mrb[0].mxu0 %v2807
      %v3014 = vpop.f32.mrb[0].mxu0
      %v3015 = vadd.f32 0.0, %v3014
      %v3016 = vpop.f32.mrb[0].mxu0
      %v3017 = vpop.f32.mrb[0].mxu0
      %v3018 = vadd.f32 0.0, %v3017
      %v3019 = vpop.f32.mrb[0].mxu0
      %3020 = vmatprep.mubr.bf16.mxu0 0
      %3021 = vmatmul.mubr.bf16.gmra.mrb[0].mxu0 %v2809
      %v3022 = vpop.f32.mrb[0].mxu0
      %v3023 = vadd.f32 0.0, %v3022
      %v3024 = vpop.f32.mrb[0].mxu0
      %v3025 = vpop.f32.mrb[0].mxu0
      %v3026 = vadd.f32 0.0, %v3025
      %v3027 = vpop.f32.mrb[0].mxu0
      %3028 = vmatprep.mubr.bf16.mxu0 0
      %3029 = vmatmul.mubr.bf16.gmra.mrb[0].mxu0 %v2811
      %v3030 = vpop.f32.mrb[0].mxu0
      %v3031 = vadd.f32 0.0, %v3030
      %v3032 = vpop.f32.mrb[0].mxu0
      %v3033 = vpop.f32.mrb[0].mxu0
      %v3034 = vadd.f32 0.0, %v3033
      %v3035 = vpop.f32.mrb[0].mxu0
      %3036 = vmatprep.mubr.bf16.mxu0 0
      %3037 = vmatmul.mubr.bf16.gmra.mrb[0].mxu0 %v2813
      %v3038 = vpop.f32.mrb[0].mxu0
      %v3039 = vadd.f32 0.0, %v3038
      %v3040 = vpop.f32.mrb[0].mxu0
      %v3041 = vpop.f32.mrb[0].mxu0
      %v3042 = vadd.f32 0.0, %v3041
      %v3043 = vpop.f32.mrb[0].mxu0
      %3044 = vmatprep.mubr.bf16.mxu0 0
      %3045 = vmatmul.mubr.bf16.gmra.mrb[0].mxu0 %v2815
      %v3046 = vpop.f32.mrb[0].mxu0
      %v3047 = vadd.f32 0.0, %v3046
      %v3048 = vpop.f32.mrb[0].mxu0
      %v3049 = vpop.f32.mrb[0].mxu0
      %v3050 = vadd.f32 0.0, %v3049
      %v3051 = vpop.f32.mrb[0].mxu0
      %3052 = vmatprep.mubr.bf16.mxu0 0
      %3053 = vmatmul.mubr.bf16.gmra.mrb[0].mxu0 %v2817
      %v3054 = vpop.f32.mrb[0].mxu0
      %v3055 = vadd.f32 0.0, %v3054
      %v3056 = vpop.f32.mrb[0].mxu0
      %v3057 = vpop.f32.mrb[0].mxu0
      %v3058 = vadd.f32 0.0, %v3057
      %v3059 = vpop.f32.mrb[0].mxu0
      %3060 = vdwg.mxu0
      %v3061 = vadd.f32 %v2598, %v2919
      %v3062 = vadd.f32 %v2599, %v2922
      %v3063 = vadd.f32 %v2600, %v2927
      %v3064 = vadd.f32 %v2601, %v2930
      %v3065 = vadd.f32 %v2602, %v2935
      %v3066 = vadd.f32 %v2603, %v2938
      %v3067 = vadd.f32 %v2604, %v2943
      %v3068 = vadd.f32 %v2605, %v2946
      %v3069 = vadd.f32 %v2606, %v2951
      %v3070 = vadd.f32 %v2607, %v2954
      %v3071 = vadd.f32 %v2608, %v2959
      %v3072 = vadd.f32 %v2609, %v2962
      %v3073 = vadd.f32 %v2610, %v2967
      %v3074 = vadd.f32 %v2611, %v2970
      %v3075 = vadd.f32 %v2612, %v2975
      %v3076 = vadd.f32 %v2613, %v2978
      %v3077 = vadd.f32 %v2614, %v2983
      %v3078 = vadd.f32 %v2615, %v2986
      %v3079 = vadd.f32 %v2616, %v2991
      %v3080 = vadd.f32 %v2617, %v2994
      %v3081 = vadd.f32 %v2618, %v2999
      %v3082 = vadd.f32 %v2619, %v3002
      %v3083 = vadd.f32 %v2620, %v3007
      %v3084 = vadd.f32 %v2621, %v3010
      %v3085 = vadd.f32 %v2622, %v3015
      %v3086 = vadd.f32 %v2623, %v3018
      %v3087 = vadd.f32 %v2624, %v3023
      %v3088 = vadd.f32 %v2625, %v3026
      %v3089 = vadd.f32 %v2626, %v3031
      %v3090 = vadd.f32 %v2627, %v3034
      %v3091 = vadd.f32 %v2628, %v3039
      %v3092 = vadd.f32 %v2629, %v3042
      %v3093 = vadd.f32 %v2630, %v3047
      %v3094 = vadd.f32 %v2631, %v3050
      %v3095 = vadd.f32 %v2632, %v3055
      %v3096 = vadd.f32 %v2633, %v3058
      %v3097 = vld [vmem:[%s219 + $0xa0] sm:$0x7]
      %s3098 = scalar_lea.vmem %s1, 448
      %v3099 = vld [vmem:[%s3098] sm:$0xf]
      %v3100 = vld [vmem:[%s3098 + $0x4] sm:$0xf]
      %v3101 = vld [vmem:[%s3098 + $0x8] sm:$0xf]
      %v3102 = vld [vmem:[%s3098 + $0xc] sm:$0xf]
      %v3103 = vld [vmem:[%s3098 + $0x10] sm:$0xf]
      %v3104 = vld [vmem:[%s3098 + $0x14] sm:$0xf]
      %v3105 = vld [vmem:[%s3098 + $0x18] sm:$0xf]
      %v3106 = vld [vmem:[%s3098 + $0x1c] sm:$0xf]
      %v3107 = vld [vmem:[%s3098 + $0x20] sm:$0xf]
      %v3108 = vld [vmem:[%s3098 + $0x24] sm:$0xf]
      %v3109 = vld [vmem:[%s3098 + $0x28] sm:$0xf]
      %v3110 = vld [vmem:[%s3098 + $0x2c] sm:$0xf]
      %v3111 = vld [vmem:[%s3098 + $0x30] sm:$0xf]
      %v3112 = vld [vmem:[%s3098 + $0x34] sm:$0xf]
      %v3113 = vld [vmem:[%s3098 + $0x38] sm:$0xf]
      %v3114 = vld [vmem:[%s3098 + $0x3c] sm:$0xf]
      %v3116 = vunpack.c.l.b16 %v3097
      %v3117 = vpack.c.b16 %v3116, %v3116
      %vm3118 = vsmask.f32 5376
      %v3120 = vshrl.u32 %v2762, 16
      %v3122 = vrot.slane %v3120, 2
      %v3123 = vshll.u32 %v2762, 16
      %v3125 = vrot.slane %v3123, 3
      %v3126 = vor.u32 %v3122, %v3125
      %v3128 = vshrl.u32 %v2763, 16
      %v3130 = vrot.slane %v3128, 2
      %v3131 = vshll.u32 %v2763, 16
      %v3133 = vrot.slane %v3131, 3
      %v3134 = vor.u32 %v3130, %v3133
      %v3135 = vsel %vm3118, %v3126, %v3134
      %v3137 = vshrl.u32 %v2764, 16
      %v3139 = vrot.slane %v3137, 2
      %v3140 = vshll.u32 %v2764, 16
      %v3142 = vrot.slane %v3140, 3
      %v3143 = vor.u32 %v3139, %v3142
      %v3144 = vsel %vm3118, %v3134, %v3143
      %v3146 = vshrl.u32 %v2765, 16
      %v3148 = vrot.slane %v3146, 2
      %v3149 = vshll.u32 %v2765, 16
      %v3151 = vrot.slane %v3149, 3
      %v3152 = vor.u32 %v3148, %v3151
      %v3153 = vsel %vm3118, %v3143, %v3152
      %v3155 = vshrl.u32 %v2766, 16
      %v3157 = vrot.slane %v3155, 2
      %v3158 = vshll.u32 %v2766, 16
      %v3160 = vrot.slane %v3158, 3
      %v3161 = vor.u32 %v3157, %v3160
      %v3162 = vsel %vm3118, %v3152, %v3161
      %v3164 = vshrl.u32 %v2767, 16
      %v3166 = vrot.slane %v3164, 2
      %v3167 = vshll.u32 %v2767, 16
      %v3169 = vrot.slane %v3167, 3
      %v3170 = vor.u32 %v3166, %v3169
      %v3171 = vsel %vm3118, %v3161, %v3170
      %v3173 = vshrl.u32 %v2768, 16
      %v3175 = vrot.slane %v3173, 2
      %v3176 = vshll.u32 %v2768, 16
      %v3178 = vrot.slane %v3176, 3
      %v3179 = vor.u32 %v3175, %v3178
      %v3180 = vsel %vm3118, %v3170, %v3179
      %v3182 = vshrl.u32 %v2769, 16
      %v3184 = vrot.slane %v3182, 2
      %v3185 = vshll.u32 %v2769, 16
      %v3187 = vrot.slane %v3185, 3
      %v3188 = vor.u32 %v3184, %v3187
      %v3189 = vsel %vm3118, %v3179, %v3188
      %v3191 = vshrl.u32 %v2770, 16
      %v3193 = vrot.slane %v3191, 2
      %v3194 = vshll.u32 %v2770, 16
      %v3196 = vrot.slane %v3194, 3
      %v3197 = vor.u32 %v3193, %v3196
      %v3198 = vsel %vm3118, %v3188, %v3197
      %v3200 = vshrl.u32 %v2771, 16
      %v3202 = vrot.slane %v3200, 2
      %v3203 = vshll.u32 %v2771, 16
      %v3205 = vrot.slane %v3203, 3
      %v3206 = vor.u32 %v3202, %v3205
      %v3207 = vsel %vm3118, %v3197, %v3206
      %v3209 = vshrl.u32 %v2772, 16
      %v3211 = vrot.slane %v3209, 2
      %v3212 = vshll.u32 %v2772, 16
      %v3214 = vrot.slane %v3212, 3
      %v3215 = vor.u32 %v3211, %v3214
      %v3216 = vsel %vm3118, %v3206, %v3215
      %v3218 = vshrl.u32 %v2773, 16
      %v3220 = vrot.slane %v3218, 2
      %v3221 = vshll.u32 %v2773, 16
      %v3223 = vrot.slane %v3221, 3
      %v3224 = vor.u32 %v3220, %v3223
      %v3225 = vsel %vm3118, %v3215, %v3224
      %v3227 = vshrl.u32 %v2774, 16
      %v3229 = vrot.slane %v3227, 2
      %v3230 = vshll.u32 %v2774, 16
      %v3232 = vrot.slane %v3230, 3
      %v3233 = vor.u32 %v3229, %v3232
      %v3234 = vsel %vm3118, %v3224, %v3233
      %v3236 = vshrl.u32 %v2775, 16
      %v3238 = vrot.slane %v3236, 2
      %v3239 = vshll.u32 %v2775, 16
      %v3241 = vrot.slane %v3239, 3
      %v3242 = vor.u32 %v3238, %v3241
      %v3243 = vsel %vm3118, %v3233, %v3242
      %v3245 = vshrl.u32 %v2776, 16
      %v3247 = vrot.slane %v3245, 2
      %v3248 = vshll.u32 %v2776, 16
      %v3250 = vrot.slane %v3248, 3
      %v3251 = vor.u32 %v3247, %v3250
      %v3252 = vsel %vm3118, %v3242, %v3251
      %v3254 = vshrl.u32 %v2777, 16
      %v3256 = vrot.slane %v3254, 2
      %v3257 = vshll.u32 %v2777, 16
      %v3259 = vrot.slane %v3257, 3
      %v3260 = vor.u32 %v3256, %v3259
      %v3261 = vsel %vm3118, %v3251, %v3260
      %v3263 = vshrl.u32 %v2778, 16
      %v3265 = vrot.slane %v3263, 2
      %v3266 = vshll.u32 %v2778, 16
      %v3268 = vrot.slane %v3266, 3
      %v3269 = vor.u32 %v3265, %v3268
      %v3270 = vsel %vm3118, %v3260, %v3269
      %v3272 = vshrl.u32 %v2779, 16
      %v3274 = vrot.slane %v3272, 2
      %v3275 = vshll.u32 %v2779, 16
      %v3277 = vrot.slane %v3275, 3
      %v3278 = vor.u32 %v3274, %v3277
      %v3279 = vsel %vm3118, %v3269, %v3278
      %v3281 = vshrl.u32 %v3117, 16
      %v3283 = vrot.slane %v3281, 2
      %v3284 = vshll.u32 %v3117, 16
      %v3286 = vrot.slane %v3284, 3
      %v3287 = vor.u32 %v3283, %v3286
      %v3288 = vsel %vm3118, %v3278, %v3287
      %v3323 = vunpack.c.l.b16 %v3099
      %v3324 = vunpack.c.l.b16 %v3100
      %v3325 = vunpack.c.l.b16 %v3101
      %v3326 = vunpack.c.l.b16 %v3102
      %v3327 = vunpack.c.l.b16 %v3103
      %v3328 = vunpack.c.l.b16 %v3104
      %v3329 = vunpack.c.l.b16 %v3105
      %v3330 = vunpack.c.l.b16 %v3106
      %v3331 = vunpack.c.l.b16 %v3107
      %v3332 = vunpack.c.l.b16 %v3108
      %v3333 = vunpack.c.l.b16 %v3109
      %v3334 = vunpack.c.l.b16 %v3110
      %v3335 = vunpack.c.l.b16 %v3111
      %v3336 = vunpack.c.l.b16 %v3112
      %v3337 = vunpack.c.l.b16 %v3113
      %v3338 = vunpack.c.l.b16 %v3114
      %v3339 = vpack.c.b16 %v3324, %v3323
      %v3340 = vpack.c.b16 %v3326, %v3325
      %v3341 = vpack.c.b16 %v3328, %v3327
      %v3342 = vpack.c.b16 %v3330, %v3329
      %v3343 = vpack.c.b16 %v3332, %v3331
      %v3344 = vpack.c.b16 %v3334, %v3333
      %v3345 = vpack.c.b16 %v3336, %v3335
      %v3346 = vpack.c.b16 %v3338, %v3337
      %3355 = vmatprep.subr.bf16.mxu0 0
      %3356 = vmatpush1.bf16.msra.mxu0 %v3339
      %3357 = vmatprep.subr.bf16.mxu0 0
      %3358 = vmatpush1.bf16.msra.mxu0 %v3340
      %3359 = vmatprep.subr.bf16.mxu0 0
      %3360 = vmatpush1.bf16.msra.mxu0 %v3341
      %3361 = vmatprep.subr.bf16.mxu0 0
      %3362 = vmatpush1.bf16.msra.mxu0 %v3342
      %3363 = vmatprep.subr.bf16.mxu0 0
      %3364 = vmatpush1.bf16.msra.mxu0 %v3343
      %3365 = vmatprep.subr.bf16.mxu0 0
      %3366 = vmatpush1.bf16.msra.mxu0 %v3344
      %3367 = vmatprep.subr.bf16.mxu0 0
      %3368 = vmatpush1.bf16.msra.mxu0 %v3345
      %3369 = vmatprep.subr.bf16.mxu0 0
      %3370 = vmatpush1.bf16.msra.mxu0 %v3346
      %3371 = vmatprep.subr.bf16.mxu0 0
      %3372 = vmatpush1.bf16.msra.mxu0 0
      %3373 = vmatprep.subr.bf16.mxu0 0
      %3374 = vmatpush1.bf16.msra.mxu0 0
      %3375 = vmatprep.subr.bf16.mxu0 0
      %3376 = vmatpush1.bf16.msra.mxu0 0
      %3377 = vmatprep.subr.bf16.mxu0 0
      %3378 = vmatpush1.bf16.msra.mxu0 0
      %3379 = vmatprep.subr.bf16.mxu0 0
      %3380 = vmatpush1.bf16.msra.mxu0 0
      %3381 = vmatprep.subr.bf16.mxu0 0
      %3382 = vmatpush1.bf16.msra.mxu0 0
      %3383 = vmatprep.subr.bf16.mxu0 0
      %3384 = vmatpush1.bf16.msra.mxu0 0
      %3385 = vmatprep.subr.bf16.mxu0 0
      %3386 = vmatpush1.bf16.msra.mxu0 0
      %3387 = vmatprep.mubr.bf16.mxu0 0
      %3388 = vmatmul.mubr.bf16.gmra.mrb[0].mxu0 %v3135
      %v3389 = vpop.f32.mrb[0].mxu0
      %v3390 = vadd.f32 0.0, %v3389
      %v3391 = vpop.f32.mrb[0].mxu0
      %v3392 = vpop.f32.mrb[0].mxu0
      %v3393 = vadd.f32 0.0, %v3392
      %v3394 = vpop.f32.mrb[0].mxu0
      %3395 = vmatprep.mubr.bf16.mxu0 0
      %3396 = vmatmul.mubr.bf16.gmra.mrb[0].mxu0 %v3144
      %v3397 = vpop.f32.mrb[0].mxu0
      %v3398 = vadd.f32 0.0, %v3397
      %v3399 = vpop.f32.mrb[0].mxu0
      %v3400 = vpop.f32.mrb[0].mxu0
      %v3401 = vadd.f32 0.0, %v3400
      %v3402 = vpop.f32.mrb[0].mxu0
      %3403 = vmatprep.mubr.bf16.mxu0 0
      %3404 = vmatmul.mubr.bf16.gmra.mrb[0].mxu0 %v3153
      %v3405 = vpop.f32.mrb[0].mxu0
      %v3406 = vadd.f32 0.0, %v3405
      %v3407 = vpop.f32.mrb[0].mxu0
      %v3408 = vpop.f32.mrb[0].mxu0
      %v3409 = vadd.f32 0.0, %v3408
      %v3410 = vpop.f32.mrb[0].mxu0
      %3411 = vmatprep.mubr.bf16.mxu0 0
      %3412 = vmatmul.mubr.bf16.gmra.mrb[0].mxu0 %v3162
      %v3413 = vpop.f32.mrb[0].mxu0
      %v3414 = vadd.f32 0.0, %v3413
      %v3415 = vpop.f32.mrb[0].mxu0
      %v3416 = vpop.f32.mrb[0].mxu0
      %v3417 = vadd.f32 0.0, %v3416
      %v3418 = vpop.f32.mrb[0].mxu0
      %3419 = vmatprep.mubr.bf16.mxu0 0
      %3420 = vmatmul.mubr.bf16.gmra.mrb[0].mxu0 %v3171
      %v3421 = vpop.f32.mrb[0].mxu0
      %v3422 = vadd.f32 0.0, %v3421
      %v3423 = vpop.f32.mrb[0].mxu0
      %v3424 = vpop.f32.mrb[0].mxu0
      %v3425 = vadd.f32 0.0, %v3424
      %v3426 = vpop.f32.mrb[0].mxu0
      %3427 = vmatprep.mubr.bf16.mxu0 0
      %3428 = vmatmul.mubr.bf16.gmra.mrb[0].mxu0 %v3180
      %v3429 = vpop.f32.mrb[0].mxu0
      %v3430 = vadd.f32 0.0, %v3429
      %v3431 = vpop.f32.mrb[0].mxu0
      %v3432 = vpop.f32.mrb[0].mxu0
      %v3433 = vadd.f32 0.0, %v3432
      %v3434 = vpop.f32.mrb[0].mxu0
      %3435 = vmatprep.mubr.bf16.mxu0 0
      %3436 = vmatmul.mubr.bf16.gmra.mrb[0].mxu0 %v3189
      %v3437 = vpop.f32.mrb[0].mxu0
      %v3438 = vadd.f32 0.0, %v3437
      %v3439 = vpop.f32.mrb[0].mxu0
      %v3440 = vpop.f32.mrb[0].mxu0
      %v3441 = vadd.f32 0.0, %v3440
      %v3442 = vpop.f32.mrb[0].mxu0
      %3443 = vmatprep.mubr.bf16.mxu0 0
      %3444 = vmatmul.mubr.bf16.gmra.mrb[0].mxu0 %v3198
      %v3445 = vpop.f32.mrb[0].mxu0
      %v3446 = vadd.f32 0.0, %v3445
      %v3447 = vpop.f32.mrb[0].mxu0
      %v3448 = vpop.f32.mrb[0].mxu0
      %v3449 = vadd.f32 0.0, %v3448
      %v3450 = vpop.f32.mrb[0].mxu0
      %3451 = vmatprep.mubr.bf16.mxu0 0
      %3452 = vmatmul.mubr.bf16.gmra.mrb[0].mxu0 %v3207
      %v3453 = vpop.f32.mrb[0].mxu0
      %v3454 = vadd.f32 0.0, %v3453
      %v3455 = vpop.f32.mrb[0].mxu0
      %v3456 = vpop.f32.mrb[0].mxu0
      %v3457 = vadd.f32 0.0, %v3456
      %v3458 = vpop.f32.mrb[0].mxu0
      %3459 = vmatprep.mubr.bf16.mxu0 0
      %3460 = vmatmul.mubr.bf16.gmra.mrb[0].mxu0 %v3216
      %v3461 = vpop.f32.mrb[0].mxu0
      %v3462 = vadd.f32 0.0, %v3461
      %v3463 = vpop.f32.mrb[0].mxu0
      %v3464 = vpop.f32.mrb[0].mxu0
      %v3465 = vadd.f32 0.0, %v3464
      %v3466 = vpop.f32.mrb[0].mxu0
      %3467 = vmatprep.mubr.bf16.mxu0 0
      %3468 = vmatmul.mubr.bf16.gmra.mrb[0].mxu0 %v3225
      %v3469 = vpop.f32.mrb[0].mxu0
      %v3470 = vadd.f32 0.0, %v3469
      %v3471 = vpop.f32.mrb[0].mxu0
      %v3472 = vpop.f32.mrb[0].mxu0
      %v3473 = vadd.f32 0.0, %v3472
      %v3474 = vpop.f32.mrb[0].mxu0
      %3475 = vmatprep.mubr.bf16.mxu0 0
      %3476 = vmatmul.mubr.bf16.gmra.mrb[0].mxu0 %v3234
      %v3477 = vpop.f32.mrb[0].mxu0
      %v3478 = vadd.f32 0.0, %v3477
      %v3479 = vpop.f32.mrb[0].mxu0
      %v3480 = vpop.f32.mrb[0].mxu0
      %v3481 = vadd.f32 0.0, %v3480
      %v3482 = vpop.f32.mrb[0].mxu0
      %3483 = vmatprep.mubr.bf16.mxu0 0
      %3484 = vmatmul.mubr.bf16.gmra.mrb[0].mxu0 %v3243
      %v3485 = vpop.f32.mrb[0].mxu0
      %v3486 = vadd.f32 0.0, %v3485
      %v3487 = vpop.f32.mrb[0].mxu0
      %v3488 = vpop.f32.mrb[0].mxu0
      %v3489 = vadd.f32 0.0, %v3488
      %v3490 = vpop.f32.mrb[0].mxu0
      %3491 = vmatprep.mubr.bf16.mxu0 0
      %3492 = vmatmul.mubr.bf16.gmra.mrb[0].mxu0 %v3252
      %v3493 = vpop.f32.mrb[0].mxu0
      %v3494 = vadd.f32 0.0, %v3493
      %v3495 = vpop.f32.mrb[0].mxu0
      %v3496 = vpop.f32.mrb[0].mxu0
      %v3497 = vadd.f32 0.0, %v3496
      %v3498 = vpop.f32.mrb[0].mxu0
      %3499 = vmatprep.mubr.bf16.mxu0 0
      %3500 = vmatmul.mubr.bf16.gmra.mrb[0].mxu0 %v3261
      %v3501 = vpop.f32.mrb[0].mxu0
      %v3502 = vadd.f32 0.0, %v3501
      %v3503 = vpop.f32.mrb[0].mxu0
      %v3504 = vpop.f32.mrb[0].mxu0
      %v3505 = vadd.f32 0.0, %v3504
      %v3506 = vpop.f32.mrb[0].mxu0
      %3507 = vmatprep.mubr.bf16.mxu0 0
      %3508 = vmatmul.mubr.bf16.gmra.mrb[0].mxu0 %v3270
      %v3509 = vpop.f32.mrb[0].mxu0
      %v3510 = vadd.f32 0.0, %v3509
      %v3511 = vpop.f32.mrb[0].mxu0
      %v3512 = vpop.f32.mrb[0].mxu0
      %v3513 = vadd.f32 0.0, %v3512
      %v3514 = vpop.f32.mrb[0].mxu0
      %3515 = vmatprep.mubr.bf16.mxu0 0
      %3516 = vmatmul.mubr.bf16.gmra.mrb[0].mxu0 %v3279
      %v3517 = vpop.f32.mrb[0].mxu0
      %v3518 = vadd.f32 0.0, %v3517
      %v3519 = vpop.f32.mrb[0].mxu0
      %v3520 = vpop.f32.mrb[0].mxu0
      %v3521 = vadd.f32 0.0, %v3520
      %v3522 = vpop.f32.mrb[0].mxu0
      %3523 = vmatprep.mubr.bf16.mxu0 0
      %3524 = vmatmul.mubr.bf16.gmra.mrb[0].mxu0 %v3288
      %v3525 = vpop.f32.mrb[0].mxu0
      %v3526 = vadd.f32 0.0, %v3525
      %v3527 = vpop.f32.mrb[0].mxu0
      %v3528 = vpop.f32.mrb[0].mxu0
      %v3529 = vadd.f32 0.0, %v3528
      %v3530 = vpop.f32.mrb[0].mxu0
      %3531 = vdwg.mxu0
      %v3532 = vadd.f32 %v3061, %v3390
      %v3533 = vadd.f32 %v3062, %v3393
      %v3534 = vadd.f32 %v3063, %v3398
      %v3535 = vadd.f32 %v3064, %v3401
      %v3536 = vadd.f32 %v3065, %v3406
      %v3537 = vadd.f32 %v3066, %v3409
      %v3538 = vadd.f32 %v3067, %v3414
      %v3539 = vadd.f32 %v3068, %v3417
      %v3540 = vadd.f32 %v3069, %v3422
      %v3541 = vadd.f32 %v3070, %v3425
      %v3542 = vadd.f32 %v3071, %v3430
      %v3543 = vadd.f32 %v3072, %v3433
      %v3544 = vadd.f32 %v3073, %v3438
      %v3545 = vadd.f32 %v3074, %v3441
      %v3546 = vadd.f32 %v3075, %v3446
      %v3547 = vadd.f32 %v3076, %v3449
      %v3548 = vadd.f32 %v3077, %v3454
      %v3549 = vadd.f32 %v3078, %v3457
      %v3550 = vadd.f32 %v3079, %v3462
      %v3551 = vadd.f32 %v3080, %v3465
      %v3552 = vadd.f32 %v3081, %v3470
      %v3553 = vadd.f32 %v3082, %v3473
      %v3554 = vadd.f32 %v3083, %v3478
      %v3555 = vadd.f32 %v3084, %v3481
      %v3556 = vadd.f32 %v3085, %v3486
      %v3557 = vadd.f32 %v3086, %v3489
      %v3558 = vadd.f32 %v3087, %v3494
      %v3559 = vadd.f32 %v3088, %v3497
      %v3560 = vadd.f32 %v3089, %v3502
      %v3561 = vadd.f32 %v3090, %v3505
      %v3562 = vadd.f32 %v3091, %v3510
      %v3563 = vadd.f32 %v3092, %v3513
      %v3564 = vadd.f32 %v3093, %v3518
      %v3565 = vadd.f32 %v3094, %v3521
      %v3566 = vadd.f32 %v3095, %v3526
      %v3567 = vadd.f32 %v3096, %v3529
      %v3568 = vld [vmem:[%s219 + $0x10] sm:$0x8]
      %s3569 = scalar_lea.vmem %s1, 512
      %v3570 = vld [vmem:[%s3569] sm:$0xf]
      %v3571 = vld [vmem:[%s3569 + $0x4] sm:$0xf]
      %v3572 = vld [vmem:[%s3569 + $0x8] sm:$0xf]
      %v3573 = vld [vmem:[%s3569 + $0xc] sm:$0xf]
      %v3574 = vld [vmem:[%s3569 + $0x10] sm:$0xf]
      %v3575 = vld [vmem:[%s3569 + $0x14] sm:$0xf]
      %v3576 = vld [vmem:[%s3569 + $0x18] sm:$0xf]
      %v3577 = vld [vmem:[%s3569 + $0x1c] sm:$0xf]
      %v3578 = vld [vmem:[%s3569 + $0x20] sm:$0xf]
      %v3579 = vld [vmem:[%s3569 + $0x24] sm:$0xf]
      %v3580 = vld [vmem:[%s3569 + $0x28] sm:$0xf]
      %v3581 = vld [vmem:[%s3569 + $0x2c] sm:$0xf]
      %v3582 = vld [vmem:[%s3569 + $0x30] sm:$0xf]
      %v3583 = vld [vmem:[%s3569 + $0x34] sm:$0xf]
      %v3584 = vld [vmem:[%s3569 + $0x38] sm:$0xf]
      %v3585 = vld [vmem:[%s3569 + $0x3c] sm:$0xf]
      %v3587 = vunpack.c.l.b16 %v3568
      %v3588 = vpack.c.b16 %v2726, %v3587
      %vm3589 = vcmask 1044480
      %v3590 = vrot.slane %v3588, 3
      %v3591 = vrot.slane %v2763, 3
      %v3592 = vsel %vm3589, %v3590, %v3591
      %v3593 = vrot.slane %v2764, 3
      %v3594 = vsel %vm3589, %v3591, %v3593
      %v3595 = vrot.slane %v2765, 3
      %v3596 = vsel %vm3589, %v3593, %v3595
      %v3597 = vrot.slane %v2766, 3
      %v3598 = vsel %vm3589, %v3595, %v3597
      %v3599 = vrot.slane %v2767, 3
      %v3600 = vsel %vm3589, %v3597, %v3599
      %v3601 = vrot.slane %v2768, 3
      %v3602 = vsel %vm3589, %v3599, %v3601
      %v3603 = vrot.slane %v2769, 3
      %v3604 = vsel %vm3589, %v3601, %v3603
      %v3605 = vrot.slane %v2770, 3
      %v3606 = vsel %vm3589, %v3603, %v3605
      %v3607 = vrot.slane %v2771, 3
      %v3608 = vsel %vm3589, %v3605, %v3607
      %v3609 = vrot.slane %v2772, 3
      %v3610 = vsel %vm3589, %v3607, %v3609
      %v3611 = vrot.slane %v2773, 3
      %v3612 = vsel %vm3589, %v3609, %v3611
      %v3613 = vrot.slane %v2774, 3
      %v3614 = vsel %vm3589, %v3611, %v3613
      %v3615 = vrot.slane %v2775, 3
      %v3616 = vsel %vm3589, %v3613, %v3615
      %v3617 = vrot.slane %v2776, 3
      %v3618 = vsel %vm3589, %v3615, %v3617
      %v3619 = vrot.slane %v2777, 3
      %v3620 = vsel %vm3589, %v3617, %v3619
      %v3621 = vrot.slane %v2778, 3
      %v3622 = vsel %vm3589, %v3619, %v3621
      %v3623 = vrot.slane %v2779, 3
      %v3624 = vsel %vm3589, %v3621, %v3623
      %v3625 = vrot.slane %v3117, 3
      %v3626 = vsel %vm3589, %v3623, %v3625
      %v3661 = vunpack.c.l.b16 %v3570
      %v3662 = vunpack.c.l.b16 %v3571
      %v3663 = vunpack.c.l.b16 %v3572
      %v3664 = vunpack.c.l.b16 %v3573
      %v3665 = vunpack.c.l.b16 %v3574
      %v3666 = vunpack.c.l.b16 %v3575
      %v3667 = vunpack.c.l.b16 %v3576
      %v3668 = vunpack.c.l.b16 %v3577
      %v3669 = vunpack.c.l.b16 %v3578
      %v3670 = vunpack.c.l.b16 %v3579
      %v3671 = vunpack.c.l.b16 %v3580
      %v3672 = vunpack.c.l.b16 %v3581
      %v3673 = vunpack.c.l.b16 %v3582
      %v3674 = vunpack.c.l.b16 %v3583
      %v3675 = vunpack.c.l.b16 %v3584
      %v3676 = vunpack.c.l.b16 %v3585
      %v3677 = vpack.c.b16 %v3662, %v3661
      %v3678 = vpack.c.b16 %v3664, %v3663
      %v3679 = vpack.c.b16 %v3666, %v3665
      %v3680 = vpack.c.b16 %v3668, %v3667
      %v3681 = vpack.c.b16 %v3670, %v3669
      %v3682 = vpack.c.b16 %v3672, %v3671
      %v3683 = vpack.c.b16 %v3674, %v3673
      %v3684 = vpack.c.b16 %v3676, %v3675
      %3693 = vmatprep.subr.bf16.mxu0 0
      %3694 = vmatpush1.bf16.msra.mxu0 %v3677
      %3695 = vmatprep.subr.bf16.mxu0 0
      %3696 = vmatpush1.bf16.msra.mxu0 %v3678
      %3697 = vmatprep.subr.bf16.mxu0 0
      %3698 = vmatpush1.bf16.msra.mxu0 %v3679
      %3699 = vmatprep.subr.bf16.mxu0 0
      %3700 = vmatpush1.bf16.msra.mxu0 %v3680
      %3701 = vmatprep.subr.bf16.mxu0 0
      %3702 = vmatpush1.bf16.msra.mxu0 %v3681
      %3703 = vmatprep.subr.bf16.mxu0 0
      %3704 = vmatpush1.bf16.msra.mxu0 %v3682
      %3705 = vmatprep.subr.bf16.mxu0 0
      %3706 = vmatpush1.bf16.msra.mxu0 %v3683
      %3707 = vmatprep.subr.bf16.mxu0 0
      %3708 = vmatpush1.bf16.msra.mxu0 %v3684
      %3709 = vmatprep.subr.bf16.mxu0 0
      %3710 = vmatpush1.bf16.msra.mxu0 0
      %3711 = vmatprep.subr.bf16.mxu0 0
      %3712 = vmatpush1.bf16.msra.mxu0 0
      %3713 = vmatprep.subr.bf16.mxu0 0
      %3714 = vmatpush1.bf16.msra.mxu0 0
      %3715 = vmatprep.subr.bf16.mxu0 0
      %3716 = vmatpush1.bf16.msra.mxu0 0
      %3717 = vmatprep.subr.bf16.mxu0 0
      %3718 = vmatpush1.bf16.msra.mxu0 0
      %3719 = vmatprep.subr.bf16.mxu0 0
      %3720 = vmatpush1.bf16.msra.mxu0 0
      %3721 = vmatprep.subr.bf16.mxu0 0
      %3722 = vmatpush1.bf16.msra.mxu0 0
      %3723 = vmatprep.subr.bf16.mxu0 0
      %3724 = vmatpush1.bf16.msra.mxu0 0
      %3725 = vmatprep.mubr.bf16.mxu0 0
      %3726 = vmatmul.mubr.bf16.gmra.mrb[0].mxu0 %v3592
      %v3727 = vpop.f32.mrb[0].mxu0
      %v3728 = vadd.f32 0.0, %v3727
      %v3729 = vpop.f32.mrb[0].mxu0
      %v3730 = vpop.f32.mrb[0].mxu0
      %v3731 = vadd.f32 0.0, %v3730
      %v3732 = vpop.f32.mrb[0].mxu0
      %3733 = vmatprep.mubr.bf16.mxu0 0
      %3734 = vmatmul.mubr.bf16.gmra.mrb[0].mxu0 %v3594
      %v3735 = vpop.f32.mrb[0].mxu0
      %v3736 = vadd.f32 0.0, %v3735
      %v3737 = vpop.f32.mrb[0].mxu0
      %v3738 = vpop.f32.mrb[0].mxu0
      %v3739 = vadd.f32 0.0, %v3738
      %v3740 = vpop.f32.mrb[0].mxu0
      %3741 = vmatprep.mubr.bf16.mxu0 0
      %3742 = vmatmul.mubr.bf16.gmra.mrb[0].mxu0 %v3596
      %v3743 = vpop.f32.mrb[0].mxu0
      %v3744 = vadd.f32 0.0, %v3743
      %v3745 = vpop.f32.mrb[0].mxu0
      %v3746 = vpop.f32.mrb[0].mxu0
      %v3747 = vadd.f32 0.0, %v3746
      %v3748 = vpop.f32.mrb[0].mxu0
      %3749 = vmatprep.mubr.bf16.mxu0 0
      %3750 = vmatmul.mubr.bf16.gmra.mrb[0].mxu0 %v3598
      %v3751 = vpop.f32.mrb[0].mxu0
      %v3752 = vadd.f32 0.0, %v3751
      %v3753 = vpop.f32.mrb[0].mxu0
      %v3754 = vpop.f32.mrb[0].mxu0
      %v3755 = vadd.f32 0.0, %v3754
      %v3756 = vpop.f32.mrb[0].mxu0
      %3757 = vmatprep.mubr.bf16.mxu0 0
      %3758 = vmatmul.mubr.bf16.gmra.mrb[0].mxu0 %v3600
      %v3759 = vpop.f32.mrb[0].mxu0
      %v3760 = vadd.f32 0.0, %v3759
      %v3761 = vpop.f32.mrb[0].mxu0
      %v3762 = vpop.f32.mrb[0].mxu0
      %v3763 = vadd.f32 0.0, %v3762
      %v3764 = vpop.f32.mrb[0].mxu0
      %3765 = vmatprep.mubr.bf16.mxu0 0
      %3766 = vmatmul.mubr.bf16.gmra.mrb[0].mxu0 %v3602
      %v3767 = vpop.f32.mrb[0].mxu0
      %v3768 = vadd.f32 0.0, %v3767
      %v3769 = vpop.f32.mrb[0].mxu0
      %v3770 = vpop.f32.mrb[0].mxu0
      %v3771 = vadd.f32 0.0, %v3770
      %v3772 = vpop.f32.mrb[0].mxu0
      %3773 = vmatprep.mubr.bf16.mxu0 0
      %3774 = vmatmul.mubr.bf16.gmra.mrb[0].mxu0 %v3604
      %v3775 = vpop.f32.mrb[0].mxu0
      %v3776 = vadd.f32 0.0, %v3775
      %v3777 = vpop.f32.mrb[0].mxu0
      %v3778 = vpop.f32.mrb[0].mxu0
      %v3779 = vadd.f32 0.0, %v3778
      %v3780 = vpop.f32.mrb[0].mxu0
      %3781 = vmatprep.mubr.bf16.mxu0 0
      %3782 = vmatmul.mubr.bf16.gmra.mrb[0].mxu0 %v3606
      %v3783 = vpop.f32.mrb[0].mxu0
      %v3784 = vadd.f32 0.0, %v3783
      %v3785 = vpop.f32.mrb[0].mxu0
      %v3786 = vpop.f32.mrb[0].mxu0
      %v3787 = vadd.f32 0.0, %v3786
      %v3788 = vpop.f32.mrb[0].mxu0
      %3789 = vmatprep.mubr.bf16.mxu0 0
      %3790 = vmatmul.mubr.bf16.gmra.mrb[0].mxu0 %v3608
      %v3791 = vpop.f32.mrb[0].mxu0
      %v3792 = vadd.f32 0.0, %v3791
      %v3793 = vpop.f32.mrb[0].mxu0
      %v3794 = vpop.f32.mrb[0].mxu0
      %v3795 = vadd.f32 0.0, %v3794
      %v3796 = vpop.f32.mrb[0].mxu0
      %3797 = vmatprep.mubr.bf16.mxu0 0
      %3798 = vmatmul.mubr.bf16.gmra.mrb[0].mxu0 %v3610
      %v3799 = vpop.f32.mrb[0].mxu0
      %v3800 = vadd.f32 0.0, %v3799
      %v3801 = vpop.f32.mrb[0].mxu0
      %v3802 = vpop.f32.mrb[0].mxu0
      %v3803 = vadd.f32 0.0, %v3802
      %v3804 = vpop.f32.mrb[0].mxu0
      %3805 = vmatprep.mubr.bf16.mxu0 0
      %3806 = vmatmul.mubr.bf16.gmra.mrb[0].mxu0 %v3612
      %v3807 = vpop.f32.mrb[0].mxu0
      %v3808 = vadd.f32 0.0, %v3807
      %v3809 = vpop.f32.mrb[0].mxu0
      %v3810 = vpop.f32.mrb[0].mxu0
      %v3811 = vadd.f32 0.0, %v3810
      %v3812 = vpop.f32.mrb[0].mxu0
      %3813 = vmatprep.mubr.bf16.mxu0 0
      %3814 = vmatmul.mubr.bf16.gmra.mrb[0].mxu0 %v3614
      %v3815 = vpop.f32.mrb[0].mxu0
      %v3816 = vadd.f32 0.0, %v3815
      %v3817 = vpop.f32.mrb[0].mxu0
      %v3818 = vpop.f32.mrb[0].mxu0
      %v3819 = vadd.f32 0.0, %v3818
      %v3820 = vpop.f32.mrb[0].mxu0
      %3821 = vmatprep.mubr.bf16.mxu0 0
      %3822 = vmatmul.mubr.bf16.gmra.mrb[0].mxu0 %v3616
      %v3823 = vpop.f32.mrb[0].mxu0
      %v3824 = vadd.f32 0.0, %v3823
      %v3825 = vpop.f32.mrb[0].mxu0
      %v3826 = vpop.f32.mrb[0].mxu0
      %v3827 = vadd.f32 0.0, %v3826
      %v3828 = vpop.f32.mrb[0].mxu0
      %3829 = vmatprep.mubr.bf16.mxu0 0
      %3830 = vmatmul.mubr.bf16.gmra.mrb[0].mxu0 %v3618
      %v3831 = vpop.f32.mrb[0].mxu0
      %v3832 = vadd.f32 0.0, %v3831
      %v3833 = vpop.f32.mrb[0].mxu0
      %v3834 = vpop.f32.mrb[0].mxu0
      %v3835 = vadd.f32 0.0, %v3834
      %v3836 = vpop.f32.mrb[0].mxu0
      %3837 = vmatprep.mubr.bf16.mxu0 0
      %3838 = vmatmul.mubr.bf16.gmra.mrb[0].mxu0 %v3620
      %v3839 = vpop.f32.mrb[0].mxu0
      %v3840 = vadd.f32 0.0, %v3839
      %v3841 = vpop.f32.mrb[0].mxu0
      %v3842 = vpop.f32.mrb[0].mxu0
      %v3843 = vadd.f32 0.0, %v3842
      %v3844 = vpop.f32.mrb[0].mxu0
      %3845 = vmatprep.mubr.bf16.mxu0 0
      %3846 = vmatmul.mubr.bf16.gmra.mrb[0].mxu0 %v3622
      %v3847 = vpop.f32.mrb[0].mxu0
      %v3848 = vadd.f32 0.0, %v3847
      %v3849 = vpop.f32.mrb[0].mxu0
      %v3850 = vpop.f32.mrb[0].mxu0
      %v3851 = vadd.f32 0.0, %v3850
      %v3852 = vpop.f32.mrb[0].mxu0
      %3853 = vmatprep.mubr.bf16.mxu0 0
      %3854 = vmatmul.mubr.bf16.gmra.mrb[0].mxu0 %v3624
      %v3855 = vpop.f32.mrb[0].mxu0
      %v3856 = vadd.f32 0.0, %v3855
      %v3857 = vpop.f32.mrb[0].mxu0
      %v3858 = vpop.f32.mrb[0].mxu0
      %v3859 = vadd.f32 0.0, %v3858
      %v3860 = vpop.f32.mrb[0].mxu0
      %3861 = vmatprep.mubr.bf16.mxu0 0
      %3862 = vmatmul.mubr.bf16.gmra.mrb[0].mxu0 %v3626
      %v3863 = vpop.f32.mrb[0].mxu0
      %v3864 = vadd.f32 0.0, %v3863
      %v3865 = vpop.f32.mrb[0].mxu0
      %v3866 = vpop.f32.mrb[0].mxu0
      %v3867 = vadd.f32 0.0, %v3866
      %v3868 = vpop.f32.mrb[0].mxu0
      %3869 = vdwg.mxu0
      %v3870 = vadd.f32 %v3532, %v3728
      %v3871 = vadd.f32 %v3533, %v3731
      %v3872 = vadd.f32 %v3534, %v3736
      %v3873 = vadd.f32 %v3535, %v3739
      %v3874 = vadd.f32 %v3536, %v3744
      %v3875 = vadd.f32 %v3537, %v3747
      %v3876 = vadd.f32 %v3538, %v3752
      %v3877 = vadd.f32 %v3539, %v3755
      %v3878 = vadd.f32 %v3540, %v3760
      %v3879 = vadd.f32 %v3541, %v3763
      %v3880 = vadd.f32 %v3542, %v3768
      %v3881 = vadd.f32 %v3543, %v3771
      %v3882 = vadd.f32 %v3544, %v3776
      %v3883 = vadd.f32 %v3545, %v3779
      %v3884 = vadd.f32 %v3546, %v3784
      %v3885 = vadd.f32 %v3547, %v3787
      %v3886 = vadd.f32 %v3548, %v3792
      %v3887 = vadd.f32 %v3549, %v3795
      %v3888 = vadd.f32 %v3550, %v3800
      %v3889 = vadd.f32 %v3551, %v3803
      %v3890 = vadd.f32 %v3552, %v3808
      %v3891 = vadd.f32 %v3553, %v3811
      %v3892 = vadd.f32 %v3554, %v3816
      %v3893 = vadd.f32 %v3555, %v3819
      %v3894 = vadd.f32 %v3556, %v3824
      %v3895 = vadd.f32 %v3557, %v3827
      %v3896 = vadd.f32 %v3558, %v3832
      %v3897 = vadd.f32 %v3559, %v3835
      %v3898 = vadd.f32 %v3560, %v3840
      %v3899 = vadd.f32 %v3561, %v3843
      %v3900 = vadd.f32 %v3562, %v3848
      %v3901 = vadd.f32 %v3563, %v3851
      %v3902 = vadd.f32 %v3564, %v3856
      %v3903 = vadd.f32 %v3565, %v3859
      %v3904 = vadd.f32 %v3566, %v3864
      %v3905 = vadd.f32 %v3567, %v3867
      %v3906 = vld [vmem:[%s2] sm:$0x1]
      %v3908 = vlaneseq
      %v3909 = vshrl.u32 %v3908, 7
      %v3910 = vsub.s32 0, %v3909
      %v3911 = vrot.slane %v3906, %v3910
      %v3913 = vadd.f32 %v3870, %v3911
      %v3914 = vadd.f32 %v3871, %v3911
      %v3915 = vadd.f32 %v3872, %v3911
      %v3916 = vadd.f32 %v3873, %v3911
      %v3917 = vadd.f32 %v3874, %v3911
      %v3918 = vadd.f32 %v3875, %v3911
      %v3919 = vadd.f32 %v3876, %v3911
      %v3920 = vadd.f32 %v3877, %v3911
      %v3921 = vadd.f32 %v3878, %v3911
      %v3922 = vadd.f32 %v3879, %v3911
      %v3923 = vadd.f32 %v3880, %v3911
      %v3924 = vadd.f32 %v3881, %v3911
      %v3925 = vadd.f32 %v3882, %v3911
      %v3926 = vadd.f32 %v3883, %v3911
      %v3927 = vadd.f32 %v3884, %v3911
      %v3928 = vadd.f32 %v3885, %v3911
      %v3929 = vadd.f32 %v3886, %v3911
      %v3930 = vadd.f32 %v3887, %v3911
      %v3931 = vadd.f32 %v3888, %v3911
      %v3932 = vadd.f32 %v3889, %v3911
      %v3933 = vadd.f32 %v3890, %v3911
      %v3934 = vadd.f32 %v3891, %v3911
      %v3935 = vadd.f32 %v3892, %v3911
      %v3936 = vadd.f32 %v3893, %v3911
      %v3937 = vadd.f32 %v3894, %v3911
      %v3938 = vadd.f32 %v3895, %v3911
      %v3939 = vadd.f32 %v3896, %v3911
      %v3940 = vadd.f32 %v3897, %v3911
      %v3941 = vadd.f32 %v3898, %v3911
      %v3942 = vadd.f32 %v3899, %v3911
      %v3943 = vadd.f32 %v3900, %v3911
      %v3944 = vadd.f32 %v3901, %v3911
      %v3945 = vadd.f32 %v3902, %v3911
      %v3946 = vadd.f32 %v3903, %v3911
      %v3947 = vadd.f32 %v3904, %v3911
      %v3948 = vadd.f32 %v3905, %v3911
      %v3949 = vmax.f32 %v3913, 0.0
      %v3950 = vmax.f32 %v3914, 0.0
      %v3951 = vmax.f32 %v3915, 0.0
      %v3952 = vmax.f32 %v3916, 0.0
      %v3953 = vmax.f32 %v3917, 0.0
      %v3954 = vmax.f32 %v3918, 0.0
      %v3955 = vmax.f32 %v3919, 0.0
      %v3956 = vmax.f32 %v3920, 0.0
      %v3957 = vmax.f32 %v3921, 0.0
      %v3958 = vmax.f32 %v3922, 0.0
      %v3959 = vmax.f32 %v3923, 0.0
      %v3960 = vmax.f32 %v3924, 0.0
      %v3961 = vmax.f32 %v3925, 0.0
      %v3962 = vmax.f32 %v3926, 0.0
      %v3963 = vmax.f32 %v3927, 0.0
      %v3964 = vmax.f32 %v3928, 0.0
      %v3965 = vmax.f32 %v3929, 0.0
      %v3966 = vmax.f32 %v3930, 0.0
      %v3967 = vmax.f32 %v3931, 0.0
      %v3968 = vmax.f32 %v3932, 0.0
      %v3969 = vmax.f32 %v3933, 0.0
      %v3970 = vmax.f32 %v3934, 0.0
      %v3971 = vmax.f32 %v3935, 0.0
      %v3972 = vmax.f32 %v3936, 0.0
      %v3973 = vmax.f32 %v3937, 0.0
      %v3974 = vmax.f32 %v3938, 0.0
      %v3975 = vmax.f32 %v3939, 0.0
      %v3976 = vmax.f32 %v3940, 0.0
      %v3977 = vmax.f32 %v3941, 0.0
      %v3978 = vmax.f32 %v3942, 0.0
      %v3979 = vmax.f32 %v3943, 0.0
      %v3980 = vmax.f32 %v3944, 0.0
      %v3981 = vmax.f32 %v3945, 0.0
      %v3982 = vmax.f32 %v3946, 0.0
      %v3983 = vmax.f32 %v3947, 0.0
      %v3984 = vmax.f32 %v3948, 0.0
      %v3985 = vpack.c.bf16 %v3950, %v3949
      %v3986 = vpack.c.bf16 %v3952, %v3951
      %v3987 = vpack.c.bf16 %v3954, %v3953
      %v3988 = vpack.c.bf16 %v3956, %v3955
      %v3989 = vpack.c.bf16 %v3958, %v3957
      %v3990 = vpack.c.bf16 %v3960, %v3959
      %v3991 = vpack.c.bf16 %v3962, %v3961
      %v3992 = vpack.c.bf16 %v3964, %v3963
      %v3993 = vpack.c.bf16 %v3966, %v3965
      %v3994 = vpack.c.bf16 %v3968, %v3967
      %v3995 = vpack.c.bf16 %v3970, %v3969
      %v3996 = vpack.c.bf16 %v3972, %v3971
      %v3997 = vpack.c.bf16 %v3974, %v3973
      %v3998 = vpack.c.bf16 %v3976, %v3975
      %v3999 = vpack.c.bf16 %v3978, %v3977
      %v4000 = vpack.c.bf16 %v3980, %v3979
      %v4001 = vpack.c.bf16 %v3982, %v3981
      %v4002 = vpack.c.bf16 %v3984, %v3983
      %v4003 = vld [vmem:[%s3] sm:$0xf]
      %v4004 = vld [vmem:[%s3 + $0x4] sm:$0xf]
      %v4005 = vld [vmem:[%s3 + $0x8] sm:$0xf]
      %v4006 = vld [vmem:[%s3 + $0xc] sm:$0xf]
      %v4007 = vld [vmem:[%s3 + $0x10] sm:$0xf]
      %v4008 = vld [vmem:[%s3 + $0x14] sm:$0xf]
      %v4009 = vld [vmem:[%s3 + $0x18] sm:$0xf]
      %v4010 = vld [vmem:[%s3 + $0x1c] sm:$0xf]
      %v4011 = vld [vmem:[%s3 + $0x20] sm:$0xf]
      %v4012 = vld [vmem:[%s3 + $0x24] sm:$0xf]
      %v4013 = vld [vmem:[%s3 + $0x28] sm:$0xf]
      %v4014 = vld [vmem:[%s3 + $0x2c] sm:$0xf]
      %v4015 = vld [vmem:[%s3 + $0x30] sm:$0xf]
      %v4016 = vld [vmem:[%s3 + $0x34] sm:$0xf]
      %v4017 = vld [vmem:[%s3 + $0x38] sm:$0xf]
      %v4018 = vld [vmem:[%s3 + $0x3c] sm:$0xf]
      %v4019 = vld [vmem:[%s4] sm:$0x1]
      %v4021 = vlaneseq
      %v4022 = vshrl.u32 %v4021, 7
      %v4023 = vsub.s32 0, %v4022
      %v4024 = vrot.slane %v4019, %v4023
      %v4042 = vunpack.c.l.b16 %v4003
      %v4043 = vunpack.c.l.b16 %v4004
      %v4044 = vunpack.c.l.b16 %v4005
      %v4045 = vunpack.c.l.b16 %v4006
      %v4046 = vunpack.c.l.b16 %v4007
      %v4047 = vunpack.c.l.b16 %v4008
      %v4048 = vunpack.c.l.b16 %v4009
      %v4049 = vunpack.c.l.b16 %v4010
      %v4050 = vunpack.c.l.b16 %v4011
      %v4051 = vunpack.c.l.b16 %v4012
      %v4052 = vunpack.c.l.b16 %v4013
      %v4053 = vunpack.c.l.b16 %v4014
      %v4054 = vunpack.c.l.b16 %v4015
      %v4055 = vunpack.c.l.b16 %v4016
      %v4056 = vunpack.c.l.b16 %v4017
      %v4057 = vunpack.c.l.b16 %v4018
      %v4058 = vpack.c.b16 %v4043, %v4042
      %v4059 = vpack.c.b16 %v4045, %v4044
      %v4060 = vpack.c.b16 %v4047, %v4046
      %v4061 = vpack.c.b16 %v4049, %v4048
      %v4062 = vpack.c.b16 %v4051, %v4050
      %v4063 = vpack.c.b16 %v4053, %v4052
      %v4064 = vpack.c.b16 %v4055, %v4054
      %v4065 = vpack.c.b16 %v4057, %v4056
      %4074 = vmatprep.subr.bf16.mxu0 0
      %4075 = vmatpush1.bf16.msra.mxu0 %v4058
      %4076 = vmatprep.subr.bf16.mxu0 0
      %4077 = vmatpush1.bf16.msra.mxu0 %v4059
      %4078 = vmatprep.subr.bf16.mxu0 0
      %4079 = vmatpush1.bf16.msra.mxu0 %v4060
      %4080 = vmatprep.subr.bf16.mxu0 0
      %4081 = vmatpush1.bf16.msra.mxu0 %v4061
      %4082 = vmatprep.subr.bf16.mxu0 0
      %4083 = vmatpush1.bf16.msra.mxu0 %v4062
      %4084 = vmatprep.subr.bf16.mxu0 0
      %4085 = vmatpush1.bf16.msra.mxu0 %v4063
      %4086 = vmatprep.subr.bf16.mxu0 0
      %4087 = vmatpush1.bf16.msra.mxu0 %v4064
      %4088 = vmatprep.subr.bf16.mxu0 0
      %4089 = vmatpush1.bf16.msra.mxu0 %v4065
      %4090 = vmatprep.subr.bf16.mxu0 0
      %4091 = vmatpush1.bf16.msra.mxu0 0
      %4092 = vmatprep.subr.bf16.mxu0 0
      %4093 = vmatpush1.bf16.msra.mxu0 0
      %4094 = vmatprep.subr.bf16.mxu0 0
      %4095 = vmatpush1.bf16.msra.mxu0 0
      %4096 = vmatprep.subr.bf16.mxu0 0
      %4097 = vmatpush1.bf16.msra.mxu0 0
      %4098 = vmatprep.subr.bf16.mxu0 0
      %4099 = vmatpush1.bf16.msra.mxu0 0
      %4100 = vmatprep.subr.bf16.mxu0 0
      %4101 = vmatpush1.bf16.msra.mxu0 0
      %4102 = vmatprep.subr.bf16.mxu0 0
      %4103 = vmatpush1.bf16.msra.mxu0 0
      %4104 = vmatprep.subr.bf16.mxu0 0
      %4105 = vmatpush1.bf16.msra.mxu0 0
      %4106 = vmatprep.mubr.bf16.mxu0 0
      %4107 = vmatmul.mubr.bf16.gmra.mrb[0].mxu0 %v3985
      %v4108 = vpop.f32.mrb[0].mxu0
      %v4109 = vadd.f32 %v4024, %v4108
      %v4110 = vpop.f32.mrb[0].mxu0
      %v4111 = vpop.f32.mrb[0].mxu0
      %v4112 = vadd.f32 %v4024, %v4111
      %v4113 = vpop.f32.mrb[0].mxu0
      %4114 = vmatprep.mubr.bf16.mxu0 0
      %4115 = vmatmul.mubr.bf16.gmra.mrb[0].mxu0 %v3986
      %v4116 = vpop.f32.mrb[0].mxu0
      %v4117 = vadd.f32 %v4024, %v4116
      %v4118 = vpop.f32.mrb[0].mxu0
      %v4119 = vpop.f32.mrb[0].mxu0
      %v4120 = vadd.f32 %v4024, %v4119
      %v4121 = vpop.f32.mrb[0].mxu0
      %4122 = vmatprep.mubr.bf16.mxu0 0
      %4123 = vmatmul.mubr.bf16.gmra.mrb[0].mxu0 %v3987
      %v4124 = vpop.f32.mrb[0].mxu0
      %v4125 = vadd.f32 %v4024, %v4124
      %v4126 = vpop.f32.mrb[0].mxu0
      %v4127 = vpop.f32.mrb[0].mxu0
      %v4128 = vadd.f32 %v4024, %v4127
      %v4129 = vpop.f32.mrb[0].mxu0
      %4130 = vmatprep.mubr.bf16.mxu0 0
      %4131 = vmatmul.mubr.bf16.gmra.mrb[0].mxu0 %v3988
      %v4132 = vpop.f32.mrb[0].mxu0
      %v4133 = vadd.f32 %v4024, %v4132
      %v4134 = vpop.f32.mrb[0].mxu0
      %v4135 = vpop.f32.mrb[0].mxu0
      %v4136 = vadd.f32 %v4024, %v4135
      %v4137 = vpop.f32.mrb[0].mxu0
      %4138 = vmatprep.mubr.bf16.mxu0 0
      %4139 = vmatmul.mubr.bf16.gmra.mrb[0].mxu0 %v3989
      %v4140 = vpop.f32.mrb[0].mxu0
      %v4141 = vadd.f32 %v4024, %v4140
      %v4142 = vpop.f32.mrb[0].mxu0
      %v4143 = vpop.f32.mrb[0].mxu0
      %v4144 = vadd.f32 %v4024, %v4143
      %v4145 = vpop.f32.mrb[0].mxu0
      %4146 = vmatprep.mubr.bf16.mxu0 0
      %4147 = vmatmul.mubr.bf16.gmra.mrb[0].mxu0 %v3990
      %v4148 = vpop.f32.mrb[0].mxu0
      %v4149 = vadd.f32 %v4024, %v4148
      %v4150 = vpop.f32.mrb[0].mxu0
      %v4151 = vpop.f32.mrb[0].mxu0
      %v4152 = vadd.f32 %v4024, %v4151
      %v4153 = vpop.f32.mrb[0].mxu0
      %4154 = vmatprep.mubr.bf16.mxu0 0
      %4155 = vmatmul.mubr.bf16.gmra.mrb[0].mxu0 %v3991
      %v4156 = vpop.f32.mrb[0].mxu0
      %v4157 = vadd.f32 %v4024, %v4156
      %v4158 = vpop.f32.mrb[0].mxu0
      %v4159 = vpop.f32.mrb[0].mxu0
      %v4160 = vadd.f32 %v4024, %v4159
      %v4161 = vpop.f32.mrb[0].mxu0
      %4162 = vmatprep.mubr.bf16.mxu0 0
      %4163 = vmatmul.mubr.bf16.gmra.mrb[0].mxu0 %v3992
      %v4164 = vpop.f32.mrb[0].mxu0
      %v4165 = vadd.f32 %v4024, %v4164
      %v4166 = vpop.f32.mrb[0].mxu0
      %v4167 = vpop.f32.mrb[0].mxu0
      %v4168 = vadd.f32 %v4024, %v4167
      %v4169 = vpop.f32.mrb[0].mxu0
      %4170 = vmatprep.mubr.bf16.mxu0 0
      %4171 = vmatmul.mubr.bf16.gmra.mrb[0].mxu0 %v3993
      %v4172 = vpop.f32.mrb[0].mxu0
      %v4173 = vadd.f32 %v4024, %v4172
      %v4174 = vpop.f32.mrb[0].mxu0
      %v4175 = vpop.f32.mrb[0].mxu0
      %v4176 = vadd.f32 %v4024, %v4175
      %v4177 = vpop.f32.mrb[0].mxu0
      %4178 = vmatprep.mubr.bf16.mxu0 0
      %4179 = vmatmul.mubr.bf16.gmra.mrb[0].mxu0 %v3994
      %v4180 = vpop.f32.mrb[0].mxu0
      %v4181 = vadd.f32 %v4024, %v4180
      %v4182 = vpop.f32.mrb[0].mxu0
      %v4183 = vpop.f32.mrb[0].mxu0
      %v4184 = vadd.f32 %v4024, %v4183
      %v4185 = vpop.f32.mrb[0].mxu0
      %4186 = vmatprep.mubr.bf16.mxu0 0
      %4187 = vmatmul.mubr.bf16.gmra.mrb[0].mxu0 %v3995
      %v4188 = vpop.f32.mrb[0].mxu0
      %v4189 = vadd.f32 %v4024, %v4188
      %v4190 = vpop.f32.mrb[0].mxu0
      %v4191 = vpop.f32.mrb[0].mxu0
      %v4192 = vadd.f32 %v4024, %v4191
      %v4193 = vpop.f32.mrb[0].mxu0
      %4194 = vmatprep.mubr.bf16.mxu0 0
      %4195 = vmatmul.mubr.bf16.gmra.mrb[0].mxu0 %v3996
      %v4196 = vpop.f32.mrb[0].mxu0
      %v4197 = vadd.f32 %v4024, %v4196
      %v4198 = vpop.f32.mrb[0].mxu0
      %v4199 = vpop.f32.mrb[0].mxu0
      %v4200 = vadd.f32 %v4024, %v4199
      %v4201 = vpop.f32.mrb[0].mxu0
      %4202 = vmatprep.mubr.bf16.mxu0 0
      %4203 = vmatmul.mubr.bf16.gmra.mrb[0].mxu0 %v3997
      %v4204 = vpop.f32.mrb[0].mxu0
      %v4205 = vadd.f32 %v4024, %v4204
      %v4206 = vpop.f32.mrb[0].mxu0
      %v4207 = vpop.f32.mrb[0].mxu0
      %v4208 = vadd.f32 %v4024, %v4207
      %v4209 = vpop.f32.mrb[0].mxu0
      %4210 = vmatprep.mubr.bf16.mxu0 0
      %4211 = vmatmul.mubr.bf16.gmra.mrb[0].mxu0 %v3998
      %v4212 = vpop.f32.mrb[0].mxu0
      %v4213 = vadd.f32 %v4024, %v4212
      %v4214 = vpop.f32.mrb[0].mxu0
      %v4215 = vpop.f32.mrb[0].mxu0
      %v4216 = vadd.f32 %v4024, %v4215
      %v4217 = vpop.f32.mrb[0].mxu0
      %4218 = vmatprep.mubr.bf16.mxu0 0
      %4219 = vmatmul.mubr.bf16.gmra.mrb[0].mxu0 %v3999
      %v4220 = vpop.f32.mrb[0].mxu0
      %v4221 = vadd.f32 %v4024, %v4220
      %v4222 = vpop.f32.mrb[0].mxu0
      %v4223 = vpop.f32.mrb[0].mxu0
      %v4224 = vadd.f32 %v4024, %v4223
      %v4225 = vpop.f32.mrb[0].mxu0
      %4226 = vmatprep.mubr.bf16.mxu0 0
      %4227 = vmatmul.mubr.bf16.gmra.mrb[0].mxu0 %v4000
      %v4228 = vpop.f32.mrb[0].mxu0
      %v4229 = vadd.f32 %v4024, %v4228
      %v4230 = vpop.f32.mrb[0].mxu0
      %v4231 = vpop.f32.mrb[0].mxu0
      %v4232 = vadd.f32 %v4024, %v4231
      %v4233 = vpop.f32.mrb[0].mxu0
      %4234 = vmatprep.mubr.bf16.mxu0 0
      %4235 = vmatmul.mubr.bf16.gmra.mrb[0].mxu0 %v4001
      %v4236 = vpop.f32.mrb[0].mxu0
      %v4237 = vadd.f32 %v4024, %v4236
      %v4238 = vpop.f32.mrb[0].mxu0
      %v4239 = vpop.f32.mrb[0].mxu0
      %v4240 = vadd.f32 %v4024, %v4239
      %v4241 = vpop.f32.mrb[0].mxu0
      %4242 = vmatprep.mubr.bf16.mxu0 0
      %4243 = vmatmul.mubr.bf16.gmra.mrb[0].mxu0 %v4002
      %v4244 = vpop.f32.mrb[0].mxu0
      %v4245 = vadd.f32 %v4024, %v4244
      %v4246 = vpop.f32.mrb[0].mxu0
      %v4247 = vpop.f32.mrb[0].mxu0
      %v4248 = vadd.f32 %v4024, %v4247
      %v4249 = vpop.f32.mrb[0].mxu0
      %4250 = vdwg.mxu0
      %v4251 = vmax.f32 %v4109, 0.0
      %v4252 = vmax.f32 %v4112, 0.0
      %v4253 = vmax.f32 %v4117, 0.0
      %v4254 = vmax.f32 %v4120, 0.0
      %v4255 = vmax.f32 %v4125, 0.0
      %v4256 = vmax.f32 %v4128, 0.0
      %v4257 = vmax.f32 %v4133, 0.0
      %v4258 = vmax.f32 %v4136, 0.0
      %v4259 = vmax.f32 %v4141, 0.0
      %v4260 = vmax.f32 %v4144, 0.0
      %v4261 = vmax.f32 %v4149, 0.0
      %v4262 = vmax.f32 %v4152, 0.0
      %v4263 = vmax.f32 %v4157, 0.0
      %v4264 = vmax.f32 %v4160, 0.0
      %v4265 = vmax.f32 %v4165, 0.0
      %v4266 = vmax.f32 %v4168, 0.0
      %v4267 = vmax.f32 %v4173, 0.0
      %v4268 = vmax.f32 %v4176, 0.0
      %v4269 = vmax.f32 %v4181, 0.0
      %v4270 = vmax.f32 %v4184, 0.0
      %v4271 = vmax.f32 %v4189, 0.0
      %v4272 = vmax.f32 %v4192, 0.0
      %v4273 = vmax.f32 %v4197, 0.0
      %v4274 = vmax.f32 %v4200, 0.0
      %v4275 = vmax.f32 %v4205, 0.0
      %v4276 = vmax.f32 %v4208, 0.0
      %v4277 = vmax.f32 %v4213, 0.0
      %v4278 = vmax.f32 %v4216, 0.0
      %v4279 = vmax.f32 %v4221, 0.0
      %v4280 = vmax.f32 %v4224, 0.0
      %v4281 = vmax.f32 %v4229, 0.0
      %v4282 = vmax.f32 %v4232, 0.0
      %v4283 = vmax.f32 %v4237, 0.0
      %v4284 = vmax.f32 %v4240, 0.0
      %v4285 = vmax.f32 %v4245, 0.0
      %v4286 = vmax.f32 %v4248, 0.0
      %4287 = vst [vmem:[%s224] sm:$0xff] %v4251
      %4288 = vst [vmem:[%s224 + $0x8] sm:$0xff] %v4252
      %4289 = vst [vmem:[%s224 + $0x10] sm:$0xff] %v4253
      %4290 = vst [vmem:[%s224 + $0x18] sm:$0xff] %v4254
      %4291 = vst [vmem:[%s224 + $0x20] sm:$0xff] %v4255
      %4292 = vst [vmem:[%s224 + $0x28] sm:$0xff] %v4256
      %4293 = vst [vmem:[%s224 + $0x30] sm:$0xff] %v4257
      %4294 = vst [vmem:[%s224 + $0x38] sm:$0xff] %v4258
      %4295 = vst [vmem:[%s224 + $0x40] sm:$0xff] %v4259
      %4296 = vst [vmem:[%s224 + $0x48] sm:$0xff] %v4260
      %4297 = vst [vmem:[%s224 + $0x50] sm:$0xff] %v4261
      %4298 = vst [vmem:[%s224 + $0x58] sm:$0xff] %v4262
      %4299 = vst [vmem:[%s224 + $0x60] sm:$0xff] %v4263
      %4300 = vst [vmem:[%s224 + $0x68] sm:$0xff] %v4264
      %4301 = vst [vmem:[%s224 + $0x70] sm:$0xff] %v4265
      %4302 = vst [vmem:[%s224 + $0x78] sm:$0xff] %v4266
      %4303 = vst [vmem:[%s224 + $0x80] sm:$0xff] %v4267
      %4304 = vst [vmem:[%s224 + $0x88] sm:$0xff] %v4268
      %4305 = vst [vmem:[%s224 + $0x90] sm:$0xff] %v4269
      %4306 = vst [vmem:[%s224 + $0x98] sm:$0xff] %v4270
      %4307 = vst [vmem:[%s224 + $0xa0] sm:$0xff] %v4271
      %4308 = vst [vmem:[%s224 + $0xa8] sm:$0xff] %v4272
      %4309 = vst [vmem:[%s224 + $0xb0] sm:$0xff] %v4273
      %4310 = vst [vmem:[%s224 + $0xb8] sm:$0xff] %v4274
      %4311 = vst [vmem:[%s224 + $0xc0] sm:$0xff] %v4275
      %4312 = vst [vmem:[%s224 + $0xc8] sm:$0xff] %v4276
      %4313 = vst [vmem:[%s224 + $0xd0] sm:$0xff] %v4277
      %4314 = vst [vmem:[%s224 + $0xd8] sm:$0xff] %v4278
      %4315 = vst [vmem:[%s224 + $0xe0] sm:$0xff] %v4279
      %4316 = vst [vmem:[%s224 + $0xe8] sm:$0xff] %v4280
      %4317 = vst [vmem:[%s224 + $0xf0] sm:$0xff] %v4281
      %4318 = vst [vmem:[%s224 + $0xf8] sm:$0xff] %v4282
      %4319 = vst [vmem:[%s224 + $0x100] sm:$0xff] %v4283
      %4320 = vst [vmem:[%s224 + $0x108] sm:$0xff] %v4284
      %4321 = vst [vmem:[%s224 + $0x110] sm:$0xff] %v4285
      %4322 = vst [vmem:[%s224 + $0x118] sm:$0xff] %v4286
      %p4323 = scmp.lt.s32.totalorder %s16, 1
      %s4324 = scalar_select %p4323, %s16, 1
      %s4325 = smul.addr %s4324, 36
      %s4326 = smul.addr %s4325, 8
      %s4327 = scalar_lea.vmem %s5, %s4326
      // Predicated region
      $region41: #{self_attention_block.4} parent=39 // pred_check
        %p4328 = pneg %p144
      $region42: #{self_attention_block.4} parent=39 // pred_check_branch
        %4330 = sbr.rel (%p4328) target = $region44
      $region43: #{self_attention_block.4} parent=39 // pred_region
        _
      $region44: #{self_attention_block.4} parent=39 // pred_fallthru
        _
    $region40: #{self_attention_block.4} parent=5 // pred_fallthru
      _
    %p4331 = scmp.le.s32.totalorder 2, %s11
    // Predicated region
    $region45: #{self_attention_block.4} parent=5 // pred_check
      %p4332 = pneg %p4331
    $region46: #{self_attention_block.4} parent=5 // pred_check_branch
      %4334 = sbr.rel (%p4332) target = $region48
    $region47: #{self_attention_block.4} parent=5 // pred_region
      %s4335 = ssub.s32 %s11, 2
      // Predicated region
      $region49: #{self_attention_block.4} parent=47 // pred_check
        %p4336 = pneg %p150
      $region50: #{self_attention_block.4} parent=47 // pred_check_branch
        %4338 = sbr.rel (%p4336) target = $region52
      $region51: #{self_attention_block.4} parent=47 // pred_region
        %p4339 = scmp.lt.s32.totalorder %s17, 1
        %s4340 = scalar_select %p4339, %s17, 1
        %s4341 = smul.addr %s4340, 36
        %s4342 = smul.addr %s4341, 8
        %s4343 = scalar_lea.vmem %s5, %s4342
      $region52: #{self_attention_block.4} parent=47 // pred_fallthru
        _
    $region48: #{self_attention_block.4} parent=5 // pred_fallthru
      _
  $region6: #{self_attention_block.4} parent=0 // loop_footer
    %s15 = sadd.s32 1, %s11
  $region7: #{self_attention_block.4} parent=0 // loop_footer_branch
    %10 = sbr.rel target = $region3
  $region8: #{self_attention_block.4} parent=0 // loop_exit
    _

// kernel: self_attention_block.5
$region0: #{self_attention_block.5}
  #allocation0 [shape = 'u32[]', space=smem, size = 0x4, offset = 0x4, fixed_abs, tag = 'smem constant byte address 0x4 - core index']
  #allocation1 [shape = 'u32[144,128]{1,0:T(1,128)}', space=vmem, size = 0x12000, scoped, tag = 'internal scratch']
  %s0 = inlined_call_operand.vmem [shape: f32[2,256,128], index: 0, kind: input, shape index: {}, may-alias: {0,1}]
  %s1 = inlined_call_operand.vmem [shape: f32[2,256,128], index: 1, kind: input, shape index: {}, may-alias: {0,1}]
  %s2 = inlined_call_operand.vmem [shape: f32[1,128], index: 2, kind: input, shape index: {}]
  %s3 = inlined_call_operand.vmem [shape: f32[1,128], index: 3, kind: input, shape index: {}]
  %s4 = inlined_call_operand.vmem [shape: f32[2,256,128], index: 4, kind: input, shape index: {}]
  %s5 = inlined_call_operand.hbm [shape: f32[2,256,256], index: 5, kind: output, shape index: {0}]
  %s6 = inlined_call_operand.vmem [shape: f32[2,256,128], index: 6, kind: output, shape index: {1}]
  %7 = xla_tuple %s5, %s6
  %s8 = sld [smem:[#allocation0]]
  $region61: #{self_attention_block.5} parent=0
    _
  %s10 = ssub.s32 1, %s8
  %s11 = scalar_select 0, %s10, %s8
  $region1: #{self_attention_block.5} parent=0
    #allocation2 [shape = 'u8[262144]{0}', space=vmem, size = 0x40000, scoped, tag = 'output window, operand 0']
    #allocation3 [shape = 's32[2]{0}', space=sflag, size = 0x8, scoped, tag = 'scoped memory for self_attention_block.5']
    %12 = vsyncpa [#allocation3], 0
    %s13 = scalar_lea.sflag [#allocation3], 1
    %14 = vsyncpa %s13, 0
    loop: start=0, step=1, limit=6
    $region2: #{self_attention_block.5} parent=1 // loop_pre_header
      _
    $region3: #{self_attention_block.5} parent=1 // loop_header
      %s16 = sphi 0, %s20
      %p17 = scmp.ge.s32.totalorder %s16, 6
      %s23 = sphi 0, %s35
      %s24 = sphi 0, %s31
      %s25 = sphi 0, %s23
      %s26 = sphi 0, %s24
      %s27 = sphi 0, %s25
      %s28 = sphi 0, %s26
      %s40 = sphi 0, %s42
      %s43 = sphi 0, %s40
      %s44 = sphi 0, %s43
      %s60 = sphi 0, %s44
      %s66 = sphi 0, %s68
      %s69 = sphi 0, %s66
      %s70 = sphi 0, %s69
      %s86 = sphi 0, %s70
      %s90 = sphi 0, %s90
      %s92 = sphi 0, %s90
      %s93 = sphi 0, %s92
      %s107 = sphi 0, %s93
      %s111 = sphi 0, %s111
      %s113 = sphi 0, %s111
      %s114 = sphi 0, %s113
      %s128 = sphi 0, %s114
      %s134 = sphi 0, %s136
      %s137 = sphi 0, %s134
      %s138 = sphi 0, %s137
      %s154 = sphi 0, %s138
      %s162 = sphi 0, %s164
      %s165 = sphi 0, %s162
      %s166 = sphi 0, %s165
      %s182 = sphi 0, %s166
      %s190 = sphi 0, %s192
      %s193 = sphi 0, %s190
      %s194 = sphi 0, %s193
      %s210 = sphi 0, %s194
    $region4: #{self_attention_block.5} parent=1 // loop_header_branch
      %19 = sbr.rel (%p17) target = $region8
    $region5: #{self_attention_block.5} parent=1 // loop_body
      %s21 = ssub.s32 %s16, 1
      %s22 = ssub.s32 %s16, 2
      %s29 = sadd.s32 1, %s24
      %p30 = scmp.ge.s32.totalorder %s29, 2
      %s31 = scalar_select %p30, 0, %s29
      %s32 = sadd.s32 1, %s23
      %s33 = scalar_select %p30, %s32, %s23
      %p34 = scmp.ge.s32.totalorder %s33, 2
      %s35 = scalar_select %p34, 0, %s33
      %s36 = ssub.s32 %s23, %s35
      %s37 = ssub.s32 %s24, %s31
      %s38 = sor.u32 %s36, %s37
      %p39 = scmp.eq.s32.totalorder %s38, 0
      %s41 = sadd.s32 %s40, 1
      %s42 = scalar_select %p39, %s40, %s41
      %p45 = pneg %p39
      %p46 = scmp.eq.s32.totalorder %s16, 3
      %p47 = por %p45, %p46
      %p48 = scmp.ne.s32.totalorder %s40, %s43
      %p49 = scmp.eq.s32.totalorder %s16, 0
      %p50 = por %p48, %p49
      %p51 = scmp.ne.s32.totalorder %s40, %s43
      %p52 = scmp.eq.s32.totalorder %s21, 3
      %p53 = por %p51, %p52
      %p54 = scmp.ne.s32.totalorder %s43, %s44
      %p55 = scmp.eq.s32.totalorder %s21, 0
      %p56 = por %p54, %p55
      %p57 = scmp.ne.s32.totalorder %s43, %s44
      %p58 = scmp.eq.s32.totalorder %s22, 3
      %p59 = por %p57, %p58
      %p61 = scmp.ne.s32.totalorder %s44, %s60
      %p62 = scmp.eq.s32.totalorder %s22, 0
      %p63 = por %p61, %p62
      %s64 = ssub.s32 %s23, %s35
      %p65 = scmp.eq.s32.totalorder %s64, 0
      %s67 = sadd.s32 %s66, 1
      %s68 = scalar_select %p65, %s66, %s67
      %p71 = pneg %p65
      %p72 = scmp.eq.s32.totalorder %s16, 3
      %p73 = por %p71, %p72
      %p74 = scmp.ne.s32.totalorder %s66, %s69
      %p75 = scmp.eq.s32.totalorder %s16, 0
      %p76 = por %p74, %p75
      %p77 = scmp.ne.s32.totalorder %s66, %s69
      %p78 = scmp.eq.s32.totalorder %s21, 3
      %p79 = por %p77, %p78
      %p80 = scmp.ne.s32.totalorder %s69, %s70
      %p81 = scmp.eq.s32.totalorder %s21, 0
      %p82 = por %p80, %p81
      %p83 = scmp.ne.s32.totalorder %s69, %s70
      %p84 = scmp.eq.s32.totalorder %s22, 3
      %p85 = por %p83, %p84
      %p87 = scmp.ne.s32.totalorder %s70, %s86
      %p88 = scmp.eq.s32.totalorder %s22, 0
      %p89 = por %p87, %p88
      %s91 = sadd.s32 %s90, 1
      %p94 = scmp.eq.s32.totalorder %s16, 3
      %p95 = scmp.ne.s32.totalorder %s90, %s92
      %p96 = scmp.eq.s32.totalorder %s16, 0
      %p97 = por %p95, %p96
      %p98 = scmp.ne.s32.totalorder %s90, %s92
      %p99 = scmp.eq.s32.totalorder %s21, 3
      %p100 = por %p98, %p99
      %p101 = scmp.ne.s32.totalorder %s92, %s93
      %p102 = scmp.eq.s32.totalorder %s21, 0
      %p103 = por %p101, %p102
      %p104 = scmp.ne.s32.totalorder %s92, %s93
      %p105 = scmp.eq.s32.totalorder %s22, 3
      %p106 = por %p104, %p105
      %p108 = scmp.ne.s32.totalorder %s93, %s107
      %p109 = scmp.eq.s32.totalorder %s22, 0
      %p110 = por %p108, %p109
      %s112 = sadd.s32 %s111, 1
      %p115 = scmp.eq.s32.totalorder %s16, 3
      %p116 = scmp.ne.s32.totalorder %s111, %s113
      %p117 = scmp.eq.s32.totalorder %s16, 0
      %p118 = por %p116, %p117
      %p119 = scmp.ne.s32.totalorder %s111, %s113
      %p120 = scmp.eq.s32.totalorder %s21, 3
      %p121 = por %p119, %p120
      %p122 = scmp.ne.s32.totalorder %s113, %s114
      %p123 = scmp.eq.s32.totalorder %s21, 0
      %p124 = por %p122, %p123
      %p125 = scmp.ne.s32.totalorder %s113, %s114
      %p126 = scmp.eq.s32.totalorder %s22, 3
      %p127 = por %p125, %p126
      %p129 = scmp.ne.s32.totalorder %s114, %s128
      %p130 = scmp.eq.s32.totalorder %s22, 0
      %p131 = por %p129, %p130
      %s132 = ssub.s32 %s23, %s35
      %p133 = scmp.eq.s32.totalorder %s132, 0
      %s135 = sadd.s32 %s134, 1
      %s136 = scalar_select %p133, %s134, %s135
      %p139 = pneg %p133
      %p140 = scmp.eq.s32.totalorder %s16, 3
      %p141 = por %p139, %p140
      %p142 = scmp.ne.s32.totalorder %s134, %s137
      %p143 = scmp.eq.s32.totalorder %s16, 0
      %p144 = por %p142, %p143
      %p145 = scmp.ne.s32.totalorder %s134, %s137
      %p146 = scmp.eq.s32.totalorder %s21, 3
      %p147 = por %p145, %p146
      %p148 = scmp.ne.s32.totalorder %s137, %s138
      %p149 = scmp.eq.s32.totalorder %s21, 0
      %p150 = por %p148, %p149
      %p151 = scmp.ne.s32.totalorder %s137, %s138
      %p152 = scmp.eq.s32.totalorder %s22, 3
      %p153 = por %p151, %p152
      %p155 = scmp.ne.s32.totalorder %s138, %s154
      %p156 = scmp.eq.s32.totalorder %s22, 0
      %p157 = por %p155, %p156
      %s158 = ssub.s32 %s23, %s35
      %s159 = ssub.s32 %s24, %s31
      %s160 = sor.u32 %s158, %s159
      %p161 = scmp.eq.s32.totalorder %s160, 0
      %s163 = sadd.s32 %s162, 1
      %s164 = scalar_select %p161, %s162, %s163
      %p167 = pneg %p161
      %p168 = scmp.eq.s32.totalorder %s16, 3
      %p169 = por %p167, %p168
      %p170 = scmp.ne.s32.totalorder %s162, %s165
      %p171 = scmp.eq.s32.totalorder %s16, 0
      %p172 = por %p170, %p171
      %p173 = scmp.ne.s32.totalorder %s162, %s165
      %p174 = scmp.eq.s32.totalorder %s21, 3
      %p175 = por %p173, %p174
      %p176 = scmp.ne.s32.totalorder %s165, %s166
      %p177 = scmp.eq.s32.totalorder %s21, 0
      %p178 = por %p176, %p177
      %p179 = scmp.ne.s32.totalorder %s165, %s166
      %p180 = scmp.eq.s32.totalorder %s22, 3
      %p181 = por %p179, %p180
      %p183 = scmp.ne.s32.totalorder %s166, %s182
      %p184 = scmp.eq.s32.totalorder %s22, 0
      %p185 = por %p183, %p184
      %s186 = ssub.s32 %s23, %s35
      %s187 = ssub.s32 %s24, %s31
      %s188 = sor.u32 %s186, %s187
      %p189 = scmp.eq.s32.totalorder %s188, 0
      %s191 = sadd.s32 %s190, 1
      %s192 = scalar_select %p189, %s190, %s191
      %p195 = pneg %p189
      %p196 = scmp.eq.s32.totalorder %s16, 3
      %p197 = por %p195, %p196
      %p198 = scmp.ne.s32.totalorder %s190, %s193
      %p199 = scmp.eq.s32.totalorder %s16, 0
      %p200 = por %p198, %p199
      %p201 = scmp.ne.s32.totalorder %s190, %s193
      %p202 = scmp.eq.s32.totalorder %s21, 3
      %p203 = por %p201, %p202
      %p204 = scmp.ne.s32.totalorder %s193, %s194
      %p205 = scmp.eq.s32.totalorder %s21, 0
      %p206 = por %p204, %p205
      %p207 = scmp.ne.s32.totalorder %s193, %s194
      %p208 = scmp.eq.s32.totalorder %s22, 3
      %p209 = por %p207, %p208
      %p211 = scmp.ne.s32.totalorder %s194, %s210
      %p212 = scmp.eq.s32.totalorder %s22, 0
      %p213 = por %p211, %p212
      %p214 = scmp.le.s32.totalorder 1, %s16
      %p215 = scmp.lt.s32.totalorder %s16, 5
      %p216 = pnand %p214, %p215
      %p217 = pneg %p216
      // Predicated region
      $region9: #{self_attention_block.5} parent=5 // pred_check
        _
      $region10: #{self_attention_block.5} parent=5 // pred_check_branch
        %219 = sbr.rel (%p216) target = $region12
      $region11: #{self_attention_block.5} parent=5 // pred_region
        %s220 = ssub.s32 %s16, 1
        // Predicated region
        $region13: #{self_attention_block.5} parent=11 // pred_check
          %p221 = pneg %p103
        $region14: #{self_attention_block.5} parent=11 // pred_check_branch
          %223 = sbr.rel (%p221) target = $region16
        $region15: #{self_attention_block.5} parent=11 // pred_region
          _
        $region16: #{self_attention_block.5} parent=11 // pred_fallthru
          _
        // Predicated region
        $region17: #{self_attention_block.5} parent=11 // pred_check
          %p224 = pneg %p124
        $region18: #{self_attention_block.5} parent=11 // pred_check_branch
          %226 = sbr.rel (%p224) target = $region20
        $region19: #{self_attention_block.5} parent=11 // pred_region
          _
        $region20: #{self_attention_block.5} parent=11 // pred_fallthru
          _
      $region12: #{self_attention_block.5} parent=5 // pred_fallthru
        _
      %p227 = scmp.lt.s32.totalorder %s16, 4
      // Predicated region
      $region21: #{self_attention_block.5} parent=5 // pred_check
        %p228 = pneg %p227
      $region22: #{self_attention_block.5} parent=5 // pred_check_branch
        %230 = sbr.rel (%p228) target = $region24
      $region23: #{self_attention_block.5} parent=5 // pred_region
        // Predicated region
        $region25: #{self_attention_block.5} parent=23 // pred_check
          %p231 = pneg %p50
        $region26: #{self_attention_block.5} parent=23 // pred_check_branch
          %233 = sbr.rel (%p231) target = $region28
        $region27: #{self_attention_block.5} parent=23 // pred_region
          %s234 = smul.u32 16, %s24
          %p235 = scmp.lt.s32.totalorder %s23, 1
          %s236 = scalar_select %p235, %s23, 1
          %p237 = scmp.lt.s32.totalorder %s234, 31
          %s238 = scalar_select %p237, %s234, 31
          %s239 = smul.addr %s236, 32
          %s240 = sadd.s32 %s238, %s239
          %s241 = smul.addr %s240, 8
          %s242 = scalar_lea.vmem %s0, %s241
          %s243 = smul.u32 16, %s24
        $region28: #{self_attention_block.5} parent=23 // pred_fallthru
          _
        // Predicated region
        $region29: #{self_attention_block.5} parent=23 // pred_check
          %p244 = pneg %p76
        $region30: #{self_attention_block.5} parent=23 // pred_check_branch
          %246 = sbr.rel (%p244) target = $region32
        $region31: #{self_attention_block.5} parent=23 // pred_region
          %p247 = scmp.lt.s32.totalorder %s23, 1
          %s248 = scalar_select %p247, %s23, 1
          %s249 = smul.addr %s248, 32
          %s250 = smul.addr %s249, 8
          %s251 = scalar_lea.vmem %s1, %s250
        $region32: #{self_attention_block.5} parent=23 // pred_fallthru
          _
        // Predicated region
        $region33: #{self_attention_block.5} parent=23 // pred_check
          %p252 = pneg %p144
        $region34: #{self_attention_block.5} parent=23 // pred_check_branch
          %254 = sbr.rel (%p252) target = $region36
        $region35: #{self_attention_block.5} parent=23 // pred_region
          %p255 = scmp.lt.s32.totalorder %s23, 1
          %s256 = scalar_select %p255, %s23, 1
          %s257 = smul.addr %s256, 32
          %s258 = smul.addr %s257, 8
          %s259 = scalar_lea.vmem %s4, %s258
        $region36: #{self_attention_block.5} parent=23 // pred_fallthru
          _
      $region24: #{self_attention_block.5} parent=5 // pred_fallthru
        _
      %p260 = scmp.le.s32.totalorder 1, %s16
      %p261 = scmp.lt.s32.totalorder %s16, 5
      %p262 = pnand %p260, %p261
      %p263 = pneg %p262
      // Predicated region
      $region37: #{self_attention_block.5} parent=5 // pred_check
        _
      $region38: #{self_attention_block.5} parent=5 // pred_check_branch
        %265 = sbr.rel (%p262) target = $region40
      $region39: #{self_attention_block.5} parent=5 // pred_region
        %s266 = ssub.s32 %s16, 1
        %s267 = smul.u32 16, %s26
        %p268 = scmp.lt.s32.totalorder %s25, 1
        %s269 = scalar_select %p268, %s25, 1
        %p270 = scmp.lt.s32.totalorder %s267, 31
        %s271 = scalar_select %p270, %s267, 31
        %s272 = smul.addr %s269, 32
        %s273 = sadd.s32 %s271, %s272
        %s274 = smul.addr %s273, 8
        %s275 = scalar_lea.vmem %s0, %s274
        %p276 = pneg %p56
        %p277 = pneg %p53
        %p278 = scmp.lt.s32.totalorder %s25, 1
        %s279 = scalar_select %p278, %s25, 1
        %s280 = smul.addr %s279, 32
        %s281 = smul.addr %s280, 8
        %s282 = scalar_lea.vmem %s1, %s281
        %p283 = pneg %p82
        %p284 = pneg %p79
        %p285 = pneg %p103
        %p286 = pneg %p100
        %p287 = pneg %p124
        %p288 = pneg %p121
        %p289 = scmp.lt.s32.totalorder %s25, 1
        %s290 = scalar_select %p289, %s25, 1
        %s291 = smul.addr %s290, 32
        %s292 = smul.addr %s291, 8
        %s293 = scalar_lea.vmem %s4, %s292
        %p294 = pneg %p150
        %p295 = pneg %p147
        %p296 = pneg %p178
        %p297 = pneg %p175
        %s298 = sand.u32 %s165, 1
        %s299 = scalar_lea.sflag [#allocation3], %s298
        %s300 = sand.u32 %s165, 1
        %s301 = smul.addr %s300, 256
        %s302 = scalar_lea.vmem [#allocation2], %s301
        %p303 = pneg %p206
        %p304 = pneg %p203
        %s305 = smul.u32 16, %s26
        %p306 = scmp.lt.s32.totalorder %s25, 1
        %s307 = scalar_select %p306, %s25, 1
        %p308 = scmp.lt.s32.totalorder %s305, 31
        %s309 = scalar_select %p308, %s305, 31
        %s310 = smul.addr %s307, 32
        %s311 = sadd.s32 %s309, %s310
        %s312 = smul.addr %s311, 8
        %s313 = scalar_lea.vmem %s6, %s312
        %s314 = smul.u32 16, %s26
        %p315 = scmp.lt.s32.totalorder %s25, 1
        %s316 = scalar_select %p315, %s25, 1
        %p317 = scmp.lt.s32.totalorder %s314, 31
        %s318 = scalar_select %p317, %s314, 31
        %s319 = smul.addr %s316, 32
        %s320 = sadd.s32 %s318, %s319
        %s321 = smul.addr %s320, 8
        %s322 = scalar_lea.vmem %s0, %s321
        %s323 = smul.u32 16, %s26
        %p324 = scmp.lt.s32.totalorder %s25, 1
        %s325 = scalar_select %p324, %s25, 1
        %s326 = smul.addr %s325, 32
        %s327 = smul.addr %s326, 8
        %s328 = scalar_lea.vmem %s1, %s327
        %p329 = scmp.lt.s32.totalorder %s25, 1
        %s330 = scalar_select %p329, %s25, 1
        %s331 = smul.addr %s330, 32
        %s332 = smul.addr %s331, 8
        %s333 = scalar_lea.vmem %s4, %s332
        %s334 = smul.u32 16, %s26
        %s335 = smul.u32 16, %s26
        %p336 = scmp.lt.s32.totalorder %s25, 1
        %s337 = scalar_select %p336, %s25, 1
        %p338 = scmp.lt.s32.totalorder %s335, 31
        %s339 = scalar_select %p338, %s335, 31
        %s340 = smul.addr %s337, 32
        %s341 = sadd.s32 %s339, %s340
        %s342 = smul.addr %s341, 8
        %s343 = scalar_lea.vmem %s6, %s342
        %s344 = smul.u32 16, %s26
        %v346 = vld [vmem:[%s2] sm:$0x1]
        %v347 = vld [vmem:[%s3] sm:$0x1]
        %v348 = vld [vmem:[%s322] sm:$0xff]
        %v349 = vld [vmem:[%s322 + $0x8] sm:$0xff]
        %v350 = vld [vmem:[%s322 + $0x10] sm:$0xff]
        %v351 = vld [vmem:[%s322 + $0x18] sm:$0xff]
        %v352 = vld [vmem:[%s322 + $0x20] sm:$0xff]
        %v353 = vld [vmem:[%s322 + $0x28] sm:$0xff]
        %v354 = vld [vmem:[%s322 + $0x30] sm:$0xff]
        %v355 = vld [vmem:[%s322 + $0x38] sm:$0xff]
        %v356 = vld [vmem:[%s322 + $0x40] sm:$0xff]
        %v357 = vld [vmem:[%s322 + $0x48] sm:$0xff]
        %v358 = vld [vmem:[%s322 + $0x50] sm:$0xff]
        %v359 = vld [vmem:[%s322 + $0x58] sm:$0xff]
        %v360 = vld [vmem:[%s322 + $0x60] sm:$0xff]
        %v361 = vld [vmem:[%s322 + $0x68] sm:$0xff]
        %v362 = vld [vmem:[%s322 + $0x70] sm:$0xff]
        %v363 = vld [vmem:[%s322 + $0x78] sm:$0xff]
        %v365 = vlaneseq
        %v366 = vshrl.u32 %v365, 7
        %v367 = vsub.s32 0, %v366
        %v368 = vrot.slane %v346, %v367
        %v370 = vmul.f32 %v348, %v368
        %v371 = vmul.f32 %v349, %v368
        %v372 = vmul.f32 %v350, %v368
        %v373 = vmul.f32 %v351, %v368
        %v374 = vmul.f32 %v352, %v368
        %v375 = vmul.f32 %v353, %v368
        %v376 = vmul.f32 %v354, %v368
        %v377 = vmul.f32 %v355, %v368
        %v378 = vmul.f32 %v356, %v368
        %v379 = vmul.f32 %v357, %v368
        %v380 = vmul.f32 %v358, %v368
        %v381 = vmul.f32 %v359, %v368
        %v382 = vmul.f32 %v360, %v368
        %v383 = vmul.f32 %v361, %v368
        %v384 = vmul.f32 %v362, %v368
        %v385 = vmul.f32 %v363, %v368
        %v387 = vlaneseq
        %v388 = vshrl.u32 %v387, 7
        %v389 = vsub.s32 0, %v388
        %v390 = vrot.slane %v347, %v389
        %v392 = vadd.f32 %v370, %v390
        %v393 = vadd.f32 %v371, %v390
        %v394 = vadd.f32 %v372, %v390
        %v395 = vadd.f32 %v373, %v390
        %v396 = vadd.f32 %v374, %v390
        %v397 = vadd.f32 %v375, %v390
        %v398 = vadd.f32 %v376, %v390
        %v399 = vadd.f32 %v377, %v390
        %v400 = vadd.f32 %v378, %v390
        %v401 = vadd.f32 %v379, %v390
        %v402 = vadd.f32 %v380, %v390
        %v403 = vadd.f32 %v381, %v390
        %v404 = vadd.f32 %v382, %v390
        %v405 = vadd.f32 %v383, %v390
        %v406 = vadd.f32 %v384, %v390
        %v407 = vadd.f32 %v385, %v390
        %v408 = vmax.f32 %v392, 0.0
        %v409 = vmax.f32 %v393, 0.0
        %v410 = vmax.f32 %v394, 0.0
        %v411 = vmax.f32 %v395, 0.0
        %v412 = vmax.f32 %v396, 0.0
        %v413 = vmax.f32 %v397, 0.0
        %v414 = vmax.f32 %v398, 0.0
        %v415 = vmax.f32 %v399, 0.0
        %v416 = vmax.f32 %v400, 0.0
        %v417 = vmax.f32 %v401, 0.0
        %v418 = vmax.f32 %v402, 0.0
        %v419 = vmax.f32 %v403, 0.0
        %v420 = vmax.f32 %v404, 0.0
        %v421 = vmax.f32 %v405, 0.0
        %v422 = vmax.f32 %v406, 0.0
        %v423 = vmax.f32 %v407, 0.0
        %v424 = vpack.c.bf16 %v409, %v408
        %v425 = vpack.c.bf16 %v411, %v410
        %v426 = vpack.c.bf16 %v413, %v412
        %v427 = vpack.c.bf16 %v415, %v414
        %v428 = vpack.c.bf16 %v417, %v416
        %v429 = vpack.c.bf16 %v419, %v418
        %v430 = vpack.c.bf16 %v421, %v420
        %v431 = vpack.c.bf16 %v423, %v422
        %v432 = vld [vmem:[%s328] sm:$0xff]
        %v433 = vld [vmem:[%s328 + $0x8] sm:$0xff]
        %v434 = vld [vmem:[%s328 + $0x10] sm:$0xff]
        %v435 = vld [vmem:[%s328 + $0x18] sm:$0xff]
        %v436 = vld [vmem:[%s328 + $0x20] sm:$0xff]
        %v437 = vld [vmem:[%s328 + $0x28] sm:$0xff]
        %v438 = vld [vmem:[%s328 + $0x30] sm:$0xff]
        %v439 = vld [vmem:[%s328 + $0x38] sm:$0xff]
        %v440 = vld [vmem:[%s328 + $0x40] sm:$0xff]
        %v441 = vld [vmem:[%s328 + $0x48] sm:$0xff]
        %v442 = vld [vmem:[%s328 + $0x50] sm:$0xff]
        %v443 = vld [vmem:[%s328 + $0x58] sm:$0xff]
        %v444 = vld [vmem:[%s328 + $0x60] sm:$0xff]
        %v445 = vld [vmem:[%s328 + $0x68] sm:$0xff]
        %v446 = vld [vmem:[%s328 + $0x70] sm:$0xff]
        %v447 = vld [vmem:[%s328 + $0x78] sm:$0xff]
        %v448 = vld [vmem:[%s328 + $0x80] sm:$0xff]
        %v449 = vld [vmem:[%s328 + $0x88] sm:$0xff]
        %v450 = vld [vmem:[%s328 + $0x90] sm:$0xff]
        %v451 = vld [vmem:[%s328 + $0x98] sm:$0xff]
        %v452 = vld [vmem:[%s328 + $0xa0] sm:$0xff]
        %v453 = vld [vmem:[%s328 + $0xa8] sm:$0xff]
        %v454 = vld [vmem:[%s328 + $0xb0] sm:$0xff]
        %v455 = vld [vmem:[%s328 + $0xb8] sm:$0xff]
        %v456 = vld [vmem:[%s328 + $0xc0] sm:$0xff]
        %v457 = vld [vmem:[%s328 + $0xc8] sm:$0xff]
        %v458 = vld [vmem:[%s328 + $0xd0] sm:$0xff]
        %v459 = vld [vmem:[%s328 + $0xd8] sm:$0xff]
        %v460 = vld [vmem:[%s328 + $0xe0] sm:$0xff]
        %v461 = vld [vmem:[%s328 + $0xe8] sm:$0xff]
        %v462 = vld [vmem:[%s328 + $0xf0] sm:$0xff]
        %v463 = vld [vmem:[%s328 + $0xf8] sm:$0xff]
        %v464 = vmul.f32 %v432, %v368
        %v465 = vmul.f32 %v433, %v368
        %v466 = vmul.f32 %v434, %v368
        %v467 = vmul.f32 %v435, %v368
        %v468 = vmul.f32 %v436, %v368
        %v469 = vmul.f32 %v437, %v368
        %v470 = vmul.f32 %v438, %v368
        %v471 = vmul.f32 %v439, %v368
        %v472 = vmul.f32 %v440, %v368
        %v473 = vmul.f32 %v441, %v368
        %v474 = vmul.f32 %v442, %v368
        %v475 = vmul.f32 %v443, %v368
        %v476 = vmul.f32 %v444, %v368
        %v477 = vmul.f32 %v445, %v368
        %v478 = vmul.f32 %v446, %v368
        %v479 = vmul.f32 %v447, %v368
        %v480 = vmul.f32 %v448, %v368
        %v481 = vmul.f32 %v449, %v368
        %v482 = vmul.f32 %v450, %v368
        %v483 = vmul.f32 %v451, %v368
        %v484 = vmul.f32 %v452, %v368
        %v485 = vmul.f32 %v453, %v368
        %v486 = vmul.f32 %v454, %v368
        %v487 = vmul.f32 %v455, %v368
        %v488 = vmul.f32 %v456, %v368
        %v489 = vmul.f32 %v457, %v368
        %v490 = vmul.f32 %v458, %v368
        %v491 = vmul.f32 %v459, %v368
        %v492 = vmul.f32 %v460, %v368
        %v493 = vmul.f32 %v461, %v368
        %v494 = vmul.f32 %v462, %v368
        %v495 = vmul.f32 %v463, %v368
        %v496 = vadd.f32 %v464, %v390
        %v497 = vadd.f32 %v465, %v390
        %v498 = vadd.f32 %v466, %v390
        %v499 = vadd.f32 %v467, %v390
        %v500 = vadd.f32 %v468, %v390
        %v501 = vadd.f32 %v469, %v390
        %v502 = vadd.f32 %v470, %v390
        %v503 = vadd.f32 %v471, %v390
        %v504 = vadd.f32 %v472, %v390
        %v505 = vadd.f32 %v473, %v390
        %v506 = vadd.f32 %v474, %v390
        %v507 = vadd.f32 %v475, %v390
        %v508 = vadd.f32 %v476, %v390
        %v509 = vadd.f32 %v477, %v390
        %v510 = vadd.f32 %v478, %v390
        %v511 = vadd.f32 %v479, %v390
        %v512 = vadd.f32 %v480, %v390
        %v513 = vadd.f32 %v481, %v390
        %v514 = vadd.f32 %v482, %v390
        %v515 = vadd.f32 %v483, %v390
        %v516 = vadd.f32 %v484, %v390
        %v517 = vadd.f32 %v485, %v390
        %v518 = vadd.f32 %v486, %v390
        %v519 = vadd.f32 %v487, %v390
        %v520 = vadd.f32 %v488, %v390
        %v521 = vadd.f32 %v489, %v390
        %v522 = vadd.f32 %v490, %v390
        %v523 = vadd.f32 %v491, %v390
        %v524 = vadd.f32 %v492, %v390
        %v525 = vadd.f32 %v493, %v390
        %v526 = vadd.f32 %v494, %v390
        %v527 = vadd.f32 %v495, %v390
        %v528 = vmax.f32 %v496, 0.0
        %v529 = vmax.f32 %v497, 0.0
        %v530 = vmax.f32 %v498, 0.0
        %v531 = vmax.f32 %v499, 0.0
        %v532 = vmax.f32 %v500, 0.0
        %v533 = vmax.f32 %v501, 0.0
        %v534 = vmax.f32 %v502, 0.0
        %v535 = vmax.f32 %v503, 0.0
        %v536 = vmax.f32 %v504, 0.0
        %v537 = vmax.f32 %v505, 0.0
        %v538 = vmax.f32 %v506, 0.0
        %v539 = vmax.f32 %v507, 0.0
        %v540 = vmax.f32 %v508, 0.0
        %v541 = vmax.f32 %v509, 0.0
        %v542 = vmax.f32 %v510, 0.0
        %v543 = vmax.f32 %v511, 0.0
        %v544 = vmax.f32 %v512, 0.0
        %v545 = vmax.f32 %v513, 0.0
        %v546 = vmax.f32 %v514, 0.0
        %v547 = vmax.f32 %v515, 0.0
        %v548 = vmax.f32 %v516, 0.0
        %v549 = vmax.f32 %v517, 0.0
        %v550 = vmax.f32 %v518, 0.0
        %v551 = vmax.f32 %v519, 0.0
        %v552 = vmax.f32 %v520, 0.0
        %v553 = vmax.f32 %v521, 0.0
        %v554 = vmax.f32 %v522, 0.0
        %v555 = vmax.f32 %v523, 0.0
        %v556 = vmax.f32 %v524, 0.0
        %v557 = vmax.f32 %v525, 0.0
        %v558 = vmax.f32 %v526, 0.0
        %v559 = vmax.f32 %v527, 0.0
        %v560 = vpack.c.bf16 %v529, %v528
        %v561 = vpack.c.bf16 %v531, %v530
        %v562 = vpack.c.bf16 %v533, %v532
        %v563 = vpack.c.bf16 %v535, %v534
        %v564 = vpack.c.bf16 %v537, %v536
        %v565 = vpack.c.bf16 %v539, %v538
        %v566 = vpack.c.bf16 %v541, %v540
        %v567 = vpack.c.bf16 %v543, %v542
        %v568 = vpack.c.bf16 %v545, %v544
        %v569 = vpack.c.bf16 %v547, %v546
        %v570 = vpack.c.bf16 %v549, %v548
        %v571 = vpack.c.bf16 %v551, %v550
        %v572 = vpack.c.bf16 %v553, %v552
        %v573 = vpack.c.bf16 %v555, %v554
        %v574 = vpack.c.bf16 %v557, %v556
        %v575 = vpack.c.bf16 %v559, %v558
        %576 = vmatprep.subr.bf16.mxu0 0
        %577 = vmatpush1.bf16.xpose.msra.mxu0 %v560
        %578 = vmatprep.subr.bf16.mxu0 0
        %579 = vmatpush1.bf16.xpose.msra.mxu0 %v561
        %580 = vmatprep.subr.bf16.mxu0 0
        %581 = vmatpush1.bf16.xpose.msra.mxu0 %v562
        %582 = vmatprep.subr.bf16.mxu0 0
        %583 = vmatpush1.bf16.xpose.msra.mxu0 %v563
        %584 = vmatprep.subr.bf16.mxu0 0
        %585 = vmatpush1.bf16.xpose.msra.mxu0 %v564
        %586 = vmatprep.subr.bf16.mxu0 0
        %587 = vmatpush1.bf16.xpose.msra.mxu0 %v565
        %588 = vmatprep.subr.bf16.mxu0 0
        %589 = vmatpush1.bf16.xpose.msra.mxu0 %v566
        %590 = vmatprep.subr.bf16.mxu0 0
        %591 = vmatpush1.bf16.xpose.msra.mxu0 %v567
        %592 = vmatprep.subr.bf16.mxu0 0
        %593 = vmatpush1.bf16.xpose.msra.mxu0 %v568
        %594 = vmatprep.subr.bf16.mxu0 0
        %595 = vmatpush1.bf16.xpose.msra.mxu0 %v569
        %596 = vmatprep.subr.bf16.mxu0 0
        %597 = vmatpush1.bf16.xpose.msra.mxu0 %v570
        %598 = vmatprep.subr.bf16.mxu0 0
        %599 = vmatpush1.bf16.xpose.msra.mxu0 %v571
        %600 = vmatprep.subr.bf16.mxu0 0
        %601 = vmatpush1.bf16.xpose.msra.mxu0 %v572
        %602 = vmatprep.subr.bf16.mxu0 0
        %603 = vmatpush1.bf16.xpose.msra.mxu0 %v573
        %604 = vmatprep.subr.bf16.mxu0 0
        %605 = vmatpush1.bf16.xpose.msra.mxu0 %v574
        %606 = vmatprep.subr.bf16.mxu0 0
        %607 = vmatpush1.bf16.xpose.msra.mxu0 %v575
        %608 = vmatprep.mubr.bf16.mxu0 0
        %609 = vmatmul.mubr.bf16.gmra.mrb[0].mxu0 %v424
        %v610 = vpop.f32.mrb[0].mxu0
        %v611 = vadd.f32 0.0, %v610
        %v612 = vpop.f32.mrb[0].mxu0
        %v613 = vadd.f32 0.0, %v612
        %v614 = vpop.f32.mrb[0].mxu0
        %v615 = vadd.f32 0.0, %v614
        %v616 = vpop.f32.mrb[0].mxu0
        %v617 = vadd.f32 0.0, %v616
        %618 = vmatprep.mubr.bf16.mxu0 0
        %619 = vmatmul.mubr.bf16.gmra.mrb[0].mxu0 %v425
        %v620 = vpop.f32.mrb[0].mxu0
        %v621 = vadd.f32 0.0, %v620
        %v622 = vpop.f32.mrb[0].mxu0
        %v623 = vadd.f32 0.0, %v622
        %v624 = vpop.f32.mrb[0].mxu0
        %v625 = vadd.f32 0.0, %v624
        %v626 = vpop.f32.mrb[0].mxu0
        %v627 = vadd.f32 0.0, %v626
        %628 = vmatprep.mubr.bf16.mxu0 0
        %629 = vmatmul.mubr.bf16.gmra.mrb[0].mxu0 %v426
        %v630 = vpop.f32.mrb[0].mxu0
        %v631 = vadd.f32 0.0, %v630
        %v632 = vpop.f32.mrb[0].mxu0
        %v633 = vadd.f32 0.0, %v632
        %v634 = vpop.f32.mrb[0].mxu0
        %v635 = vadd.f32 0.0, %v634
        %v636 = vpop.f32.mrb[0].mxu0
        %v637 = vadd.f32 0.0, %v636
        %638 = vmatprep.mubr.bf16.mxu0 0
        %639 = vmatmul.mubr.bf16.gmra.mrb[0].mxu0 %v427
        %v640 = vpop.f32.mrb[0].mxu0
        %v641 = vadd.f32 0.0, %v640
        %v642 = vpop.f32.mrb[0].mxu0
        %v643 = vadd.f32 0.0, %v642
        %v644 = vpop.f32.mrb[0].mxu0
        %v645 = vadd.f32 0.0, %v644
        %v646 = vpop.f32.mrb[0].mxu0
        %v647 = vadd.f32 0.0, %v646
        %648 = vmatprep.mubr.bf16.mxu0 0
        %649 = vmatmul.mubr.bf16.gmra.mrb[0].mxu0 %v428
        %v650 = vpop.f32.mrb[0].mxu0
        %v651 = vadd.f32 0.0, %v650
        %v652 = vpop.f32.mrb[0].mxu0
        %v653 = vadd.f32 0.0, %v652
        %v654 = vpop.f32.mrb[0].mxu0
        %v655 = vadd.f32 0.0, %v654
        %v656 = vpop.f32.mrb[0].mxu0
        %v657 = vadd.f32 0.0, %v656
        %658 = vmatprep.mubr.bf16.mxu0 0
        %659 = vmatmul.mubr.bf16.gmra.mrb[0].mxu0 %v429
        %v660 = vpop.f32.mrb[0].mxu0
        %v661 = vadd.f32 0.0, %v660
        %v662 = vpop.f32.mrb[0].mxu0
        %v663 = vadd.f32 0.0, %v662
        %v664 = vpop.f32.mrb[0].mxu0
        %v665 = vadd.f32 0.0, %v664
        %v666 = vpop.f32.mrb[0].mxu0
        %v667 = vadd.f32 0.0, %v666
        %668 = vmatprep.mubr.bf16.mxu0 0
        %669 = vmatmul.mubr.bf16.gmra.mrb[0].mxu0 %v430
        %v670 = vpop.f32.mrb[0].mxu0
        %v671 = vadd.f32 0.0, %v670
        %v672 = vpop.f32.mrb[0].mxu0
        %v673 = vadd.f32 0.0, %v672
        %v674 = vpop.f32.mrb[0].mxu0
        %v675 = vadd.f32 0.0, %v674
        %v676 = vpop.f32.mrb[0].mxu0
        %v677 = vadd.f32 0.0, %v676
        %678 = vmatprep.mubr.bf16.mxu0 0
        %679 = vmatmul.mubr.bf16.gmra.mrb[0].mxu0 %v431
        %v680 = vpop.f32.mrb[0].mxu0
        %v681 = vadd.f32 0.0, %v680
        %v682 = vpop.f32.mrb[0].mxu0
        %v683 = vadd.f32 0.0, %v682
        %v684 = vpop.f32.mrb[0].mxu0
        %v685 = vadd.f32 0.0, %v684
        %v686 = vpop.f32.mrb[0].mxu0
        %v687 = vadd.f32 0.0, %v686
        %688 = vdwg.mxu0
        %v689 = vmax.f32 %v611, %v613
        %690 = vmax.xlane.f32.xlu0 %v689
        %v691 = vpop.xlane.xlu0 %690
        %v692 = vmax.f32 %v615, %v617
        %693 = vmax.xlane.f32.xlu0 %v692
        %v694 = vpop.xlane.xlu0 %693
        %v695 = vmax.f32 %v621, %v623
        %696 = vmax.xlane.f32.xlu0 %v695
        %v697 = vpop.xlane.xlu0 %696
        %v698 = vmax.f32 %v625, %v627
        %699 = vmax.xlane.f32.xlu0 %v698
        %v700 = vpop.xlane.xlu0 %699
        %v701 = vmax.f32 %v631, %v633
        %702 = vmax.xlane.f32.xlu0 %v701
        %v703 = vpop.xlane.xlu0 %702
        %v704 = vmax.f32 %v635, %v637
        %705 = vmax.xlane.f32.xlu0 %v704
        %v706 = vpop.xlane.xlu0 %705
        %v707 = vmax.f32 %v641, %v643
        %708 = vmax.xlane.f32.xlu0 %v707
        %v709 = vpop.xlane.xlu0 %708
        %v710 = vmax.f32 %v645, %v647
        %711 = vmax.xlane.f32.xlu0 %v710
        %v712 = vpop.xlane.xlu0 %711
        %v713 = vmax.f32 %v651, %v653
        %714 = vmax.xlane.f32.xlu0 %v713
        %v715 = vpop.xlane.xlu0 %714
        %v716 = vmax.f32 %v655, %v657
        %717 = vmax.xlane.f32.xlu0 %v716
        %v718 = vpop.xlane.xlu0 %717
        %v719 = vmax.f32 %v661, %v663
        %720 = vmax.xlane.f32.xlu0 %v719
        %v721 = vpop.xlane.xlu0 %720
        %v722 = vmax.f32 %v665, %v667
        %723 = vmax.xlane.f32.xlu0 %v722
        %v724 = vpop.xlane.xlu0 %723
        %v725 = vmax.f32 %v671, %v673
        %726 = vmax.xlane.f32.xlu0 %v725
        %v727 = vpop.xlane.xlu0 %726
        %v728 = vmax.f32 %v675, %v677
        %729 = vmax.xlane.f32.xlu0 %v728
        %v730 = vpop.xlane.xlu0 %729
        %v731 = vmax.f32 %v681, %v683
        %732 = vmax.xlane.f32.xlu0 %v731
        %v733 = vpop.xlane.xlu0 %732
        %v734 = vmax.f32 %v685, %v687
        %735 = vmax.xlane.f32.xlu0 %v734
        %v736 = vpop.xlane.xlu0 %735
        %v737 = vsub.f32 %v611, %v691
        %v738 = vsub.f32 %v613, %v691
        %v739 = vsub.f32 %v615, %v694
        %v740 = vsub.f32 %v617, %v694
        %v741 = vsub.f32 %v621, %v697
        %v742 = vsub.f32 %v623, %v697
        %v743 = vsub.f32 %v625, %v700
        %v744 = vsub.f32 %v627, %v700
        %v745 = vsub.f32 %v631, %v703
        %v746 = vsub.f32 %v633, %v703
        %v747 = vsub.f32 %v635, %v706
        %v748 = vsub.f32 %v637, %v706
        %v749 = vsub.f32 %v641, %v709
        %v750 = vsub.f32 %v643, %v709
        %v751 = vsub.f32 %v645, %v712
        %v752 = vsub.f32 %v647, %v712
        %v753 = vsub.f32 %v651, %v715
        %v754 = vsub.f32 %v653, %v715
        %v755 = vsub.f32 %v655, %v718
        %v756 = vsub.f32 %v657, %v718
        %v757 = vsub.f32 %v661, %v721
        %v758 = vsub.f32 %v663, %v721
        %v759 = vsub.f32 %v665, %v724
        %v760 = vsub.f32 %v667, %v724
        %v761 = vsub.f32 %v671, %v727
        %v762 = vsub.f32 %v673, %v727
        %v763 = vsub.f32 %v675, %v730
        %v764 = vsub.f32 %v677, %v730
        %v765 = vsub.f32 %v681, %v733
        %v766 = vsub.f32 %v683, %v733
        %v767 = vsub.f32 %v685, %v736
        %v768 = vsub.f32 %v687, %v736
        %v769 = vmul.f32 %v737, 1.442695
        %v770 = vpow.pop %v769
        %v771 = vmul.f32 %v738, 1.442695
        %v772 = vpow.pop %v771
        %v773 = vmul.f32 %v739, 1.442695
        %v774 = vpow.pop %v773
        %v775 = vmul.f32 %v740, 1.442695
        %v776 = vpow.pop %v775
        %v777 = vmul.f32 %v741, 1.442695
        %v778 = vpow.pop %v777
        %v779 = vmul.f32 %v742, 1.442695
        %v780 = vpow.pop %v779
        %v781 = vmul.f32 %v743, 1.442695
        %v782 = vpow.pop %v781
        %v783 = vmul.f32 %v744, 1.442695
        %v784 = vpow.pop %v783
        %v785 = vmul.f32 %v745, 1.442695
        %v786 = vpow.pop %v785
        %v787 = vmul.f32 %v746, 1.442695
        %v788 = vpow.pop %v787
        %v789 = vmul.f32 %v747, 1.442695
        %v790 = vpow.pop %v789
        %v791 = vmul.f32 %v748, 1.442695
        %v792 = vpow.pop %v791
        %v793 = vmul.f32 %v749, 1.442695
        %v794 = vpow.pop %v793
        %v795 = vmul.f32 %v750, 1.442695
        %v796 = vpow.pop %v795
        %v797 = vmul.f32 %v751, 1.442695
        %v798 = vpow.pop %v797
        %v799 = vmul.f32 %v752, 1.442695
        %v800 = vpow.pop %v799
        %v801 = vmul.f32 %v753, 1.442695
        %v802 = vpow.pop %v801
        %v803 = vmul.f32 %v754, 1.442695
        %v804 = vpow.pop %v803
        %v805 = vmul.f32 %v755, 1.442695
        %v806 = vpow.pop %v805
        %v807 = vmul.f32 %v756, 1.442695
        %v808 = vpow.pop %v807
        %v809 = vmul.f32 %v757, 1.442695
        %v810 = vpow.pop %v809
        %v811 = vmul.f32 %v758, 1.442695
        %v812 = vpow.pop %v811
        %v813 = vmul.f32 %v759, 1.442695
        %v814 = vpow.pop %v813
        %v815 = vmul.f32 %v760, 1.442695
        %v816 = vpow.pop %v815
        %v817 = vmul.f32 %v761, 1.442695
        %v818 = vpow.pop %v817
        %v819 = vmul.f32 %v762, 1.442695
        %v820 = vpow.pop %v819
        %v821 = vmul.f32 %v763, 1.442695
        %v822 = vpow.pop %v821
        %v823 = vmul.f32 %v764, 1.442695
        %v824 = vpow.pop %v823
        %v825 = vmul.f32 %v765, 1.442695
        %v826 = vpow.pop %v825
        %v827 = vmul.f32 %v766, 1.442695
        %v828 = vpow.pop %v827
        %v829 = vmul.f32 %v767, 1.442695
        %v830 = vpow.pop %v829
        %v831 = vmul.f32 %v768, 1.442695
        %v832 = vpow.pop %v831
        %v833 = vadd.f32 %v770, %v772
        %834 = vadd.xlane.f32.xlu0 %v833
        %v835 = vpop.xlane.xlu0 %834
        %v836 = vadd.f32 %v774, %v776
        %837 = vadd.xlane.f32.xlu0 %v836
        %v838 = vpop.xlane.xlu0 %837
        %v839 = vadd.f32 %v778, %v780
        %840 = vadd.xlane.f32.xlu0 %v839
        %v841 = vpop.xlane.xlu0 %840
        %v842 = vadd.f32 %v782, %v784
        %843 = vadd.xlane.f32.xlu0 %v842
        %v844 = vpop.xlane.xlu0 %843
        %v845 = vadd.f32 %v786, %v788
        %846 = vadd.xlane.f32.xlu0 %v845
        %v847 = vpop.xlane.xlu0 %846
        %v848 = vadd.f32 %v790, %v792
        %849 = vadd.xlane.f32.xlu0 %v848
        %v850 = vpop.xlane.xlu0 %849
        %v851 = vadd.f32 %v794, %v796
        %852 = vadd.xlane.f32.xlu0 %v851
        %v853 = vpop.xlane.xlu0 %852
        %v854 = vadd.f32 %v798, %v800
        %855 = vadd.xlane.f32.xlu0 %v854
        %v856 = vpop.xlane.xlu0 %855
        %v857 = vadd.f32 %v802, %v804
        %858 = vadd.xlane.f32.xlu0 %v857
        %v859 = vpop.xlane.xlu0 %858
        %v860 = vadd.f32 %v806, %v808
        %861 = vadd.xlane.f32.xlu0 %v860
        %v862 = vpop.xlane.xlu0 %861
        %v863 = vadd.f32 %v810, %v812
        %864 = vadd.xlane.f32.xlu0 %v863
        %v865 = vpop.xlane.xlu0 %864
        %v866 = vadd.f32 %v814, %v816
        %867 = vadd.xlane.f32.xlu0 %v866
        %v868 = vpop.xlane.xlu0 %867
        %v869 = vadd.f32 %v818, %v820
        %870 = vadd.xlane.f32.xlu0 %v869
        %v871 = vpop.xlane.xlu0 %870
        %v872 = vadd.f32 %v822, %v824
        %873 = vadd.xlane.f32.xlu0 %v872
        %v874 = vpop.xlane.xlu0 %873
        %v875 = vadd.f32 %v826, %v828
        %876 = vadd.xlane.f32.xlu0 %v875
        %v877 = vpop.xlane.xlu0 %876
        %v878 = vadd.f32 %v830, %v832
        %879 = vadd.xlane.f32.xlu0 %v878
        %v880 = vpop.xlane.xlu0 %879
        %v881 = vrcp.pop %v835
        %v882 = vrcp.pop %v838
        %v883 = vrcp.pop %v841
        %v884 = vrcp.pop %v844
        %v885 = vrcp.pop %v847
        %v886 = vrcp.pop %v850
        %v887 = vrcp.pop %v853
        %v888 = vrcp.pop %v856
        %v889 = vrcp.pop %v859
        %v890 = vrcp.pop %v862
        %v891 = vrcp.pop %v865
        %v892 = vrcp.pop %v868
        %v893 = vrcp.pop %v871
        %v894 = vrcp.pop %v874
        %v895 = vrcp.pop %v877
        %v896 = vrcp.pop %v880
        %v897 = vmul.f32 %v770, %v881
        %v898 = vmul.f32 %v772, %v881
        %v899 = vmul.f32 %v774, %v882
        %v900 = vmul.f32 %v776, %v882
        %v901 = vmul.f32 %v778, %v883
        %v902 = vmul.f32 %v780, %v883
        %v903 = vmul.f32 %v782, %v884
        %v904 = vmul.f32 %v784, %v884
        %v905 = vmul.f32 %v786, %v885
        %v906 = vmul.f32 %v788, %v885
        %v907 = vmul.f32 %v790, %v886
        %v908 = vmul.f32 %v792, %v886
        %v909 = vmul.f32 %v794, %v887
        %v910 = vmul.f32 %v796, %v887
        %v911 = vmul.f32 %v798, %v888
        %v912 = vmul.f32 %v800, %v888
        %v913 = vmul.f32 %v802, %v889
        %v914 = vmul.f32 %v804, %v889
        %v915 = vmul.f32 %v806, %v890
        %v916 = vmul.f32 %v808, %v890
        %v917 = vmul.f32 %v810, %v891
        %v918 = vmul.f32 %v812, %v891
        %v919 = vmul.f32 %v814, %v892
        %v920 = vmul.f32 %v816, %v892
        %v921 = vmul.f32 %v818, %v893
        %v922 = vmul.f32 %v820, %v893
        %v923 = vmul.f32 %v822, %v894
        %v924 = vmul.f32 %v824, %v894
        %v925 = vmul.f32 %v826, %v895
        %v926 = vmul.f32 %v828, %v895
        %v927 = vmul.f32 %v830, %v896
        %v928 = vmul.f32 %v832, %v896
        %929 = vst [vmem:[%s302] sm:$0xff] %v897
        %930 = vst [vmem:[%s302 + $0x8] sm:$0xff] %v898
        %931 = vst [vmem:[%s302 + $0x10] sm:$0xff] %v899
        %932 = vst [vmem:[%s302 + $0x18] sm:$0xff] %v900
        %933 = vst [vmem:[%s302 + $0x20] sm:$0xff] %v901
        %934 = vst [vmem:[%s302 + $0x28] sm:$0xff] %v902
        %935 = vst [vmem:[%s302 + $0x30] sm:$0xff] %v903
        %936 = vst [vmem:[%s302 + $0x38] sm:$0xff] %v904
        %937 = vst [vmem:[%s302 + $0x40] sm:$0xff] %v905
        %938 = vst [vmem:[%s302 + $0x48] sm:$0xff] %v906
        %939 = vst [vmem:[%s302 + $0x50] sm:$0xff] %v907
        %940 = vst [vmem:[%s302 + $0x58] sm:$0xff] %v908
        %941 = vst [vmem:[%s302 + $0x60] sm:$0xff] %v909
        %942 = vst [vmem:[%s302 + $0x68] sm:$0xff] %v910
        %943 = vst [vmem:[%s302 + $0x70] sm:$0xff] %v911
        %944 = vst [vmem:[%s302 + $0x78] sm:$0xff] %v912
        %945 = vst [vmem:[%s302 + $0x80] sm:$0xff] %v913
        %946 = vst [vmem:[%s302 + $0x88] sm:$0xff] %v914
        %947 = vst [vmem:[%s302 + $0x90] sm:$0xff] %v915
        %948 = vst [vmem:[%s302 + $0x98] sm:$0xff] %v916
        %949 = vst [vmem:[%s302 + $0xa0] sm:$0xff] %v917
        %950 = vst [vmem:[%s302 + $0xa8] sm:$0xff] %v918
        %951 = vst [vmem:[%s302 + $0xb0] sm:$0xff] %v919
        %952 = vst [vmem:[%s302 + $0xb8] sm:$0xff] %v920
        %953 = vst [vmem:[%s302 + $0xc0] sm:$0xff] %v921
        %954 = vst [vmem:[%s302 + $0xc8] sm:$0xff] %v922
        %955 = vst [vmem:[%s302 + $0xd0] sm:$0xff] %v923
        %956 = vst [vmem:[%s302 + $0xd8] sm:$0xff] %v924
        %957 = vst [vmem:[%s302 + $0xe0] sm:$0xff] %v925
        %958 = vst [vmem:[%s302 + $0xe8] sm:$0xff] %v926
        %959 = vst [vmem:[%s302 + $0xf0] sm:$0xff] %v927
        %960 = vst [vmem:[%s302 + $0xf8] sm:$0xff] %v928
        %v961 = vpack.c.bf16 %v899, %v897
        %v962 = vpack.c.bf16 %v900, %v898
        %v963 = vpack.c.bf16 %v903, %v901
        %v964 = vpack.c.bf16 %v904, %v902
        %v965 = vpack.c.bf16 %v907, %v905
        %v966 = vpack.c.bf16 %v908, %v906
        %v967 = vpack.c.bf16 %v911, %v909
        %v968 = vpack.c.bf16 %v912, %v910
        %v969 = vpack.c.bf16 %v915, %v913
        %v970 = vpack.c.bf16 %v916, %v914
        %v971 = vpack.c.bf16 %v919, %v917
        %v972 = vpack.c.bf16 %v920, %v918
        %v973 = vpack.c.bf16 %v923, %v921
        %v974 = vpack.c.bf16 %v924, %v922
        %v975 = vpack.c.bf16 %v927, %v925
        %v976 = vpack.c.bf16 %v928, %v926
        %v977 = vld [vmem:[%s333] sm:$0xff]
        %v978 = vld [vmem:[%s333 + $0x8] sm:$0xff]
        %v979 = vld [vmem:[%s333 + $0x10] sm:$0xff]
        %v980 = vld [vmem:[%s333 + $0x18] sm:$0xff]
        %v981 = vld [vmem:[%s333 + $0x20] sm:$0xff]
        %v982 = vld [vmem:[%s333 + $0x28] sm:$0xff]
        %v983 = vld [vmem:[%s333 + $0x30] sm:$0xff]
        %v984 = vld [vmem:[%s333 + $0x38] sm:$0xff]
        %v985 = vld [vmem:[%s333 + $0x40] sm:$0xff]
        %v986 = vld [vmem:[%s333 + $0x48] sm:$0xff]
        %v987 = vld [vmem:[%s333 + $0x50] sm:$0xff]
        %v988 = vld [vmem:[%s333 + $0x58] sm:$0xff]
        %v989 = vld [vmem:[%s333 + $0x60] sm:$0xff]
        %v990 = vld [vmem:[%s333 + $0x68] sm:$0xff]
        %v991 = vld [vmem:[%s333 + $0x70] sm:$0xff]
        %v992 = vld [vmem:[%s333 + $0x78] sm:$0xff]
        %v993 = vld [vmem:[%s333 + $0x80] sm:$0xff]
        %v994 = vld [vmem:[%s333 + $0x88] sm:$0xff]
        %v995 = vld [vmem:[%s333 + $0x90] sm:$0xff]
        %v996 = vld [vmem:[%s333 + $0x98] sm:$0xff]
        %v997 = vld [vmem:[%s333 + $0xa0] sm:$0xff]
        %v998 = vld [vmem:[%s333 + $0xa8] sm:$0xff]
        %v999 = vld [vmem:[%s333 + $0xb0] sm:$0xff]
        %v1000 = vld [vmem:[%s333 + $0xb8] sm:$0xff]
        %v1001 = vld [vmem:[%s333 + $0xc0] sm:$0xff]
        %v1002 = vld [vmem:[%s333 + $0xc8] sm:$0xff]
        %v1003 = vld [vmem:[%s333 + $0xd0] sm:$0xff]
        %v1004 = vld [vmem:[%s333 + $0xd8] sm:$0xff]
        %v1005 = vld [vmem:[%s333 + $0xe0] sm:$0xff]
        %v1006 = vld [vmem:[%s333 + $0xe8] sm:$0xff]
        %v1007 = vld [vmem:[%s333 + $0xf0] sm:$0xff]
        %v1008 = vld [vmem:[%s333 + $0xf8] sm:$0xff]
        %v1009 = vpack.c.bf16 %v978, %v977
        %v1010 = vpack.c.bf16 %v980, %v979
        %v1011 = vpack.c.bf16 %v982, %v981
        %v1012 = vpack.c.bf16 %v984, %v983
        %v1013 = vpack.c.bf16 %v986, %v985
        %v1014 = vpack.c.bf16 %v988, %v987
        %v1015 = vpack.c.bf16 %v990, %v989
        %v1016 = vpack.c.bf16 %v992, %v991
        %v1017 = vpack.c.bf16 %v994, %v993
        %v1018 = vpack.c.bf16 %v996, %v995
        %v1019 = vpack.c.bf16 %v998, %v997
        %v1020 = vpack.c.bf16 %v1000, %v999
        %v1021 = vpack.c.bf16 %v1002, %v1001
        %v1022 = vpack.c.bf16 %v1004, %v1003
        %v1023 = vpack.c.bf16 %v1006, %v1005
        %v1024 = vpack.c.bf16 %v1008, %v1007
        %1025 = vmatprep.subr.bf16.mxu0 0
        %1026 = vmatpush1.bf16.msra.mxu0 %v1009
        %1027 = vmatprep.subr.bf16.mxu0 0
        %1028 = vmatpush1.bf16.msra.mxu0 %v1010
        %1029 = vmatprep.subr.bf16.mxu0 0
        %1030 = vmatpush1.bf16.msra.mxu0 %v1011
        %1031 = vmatprep.subr.bf16.mxu0 0
        %1032 = vmatpush1.bf16.msra.mxu0 %v1012
        %1033 = vmatprep.subr.bf16.mxu0 0
        %1034 = vmatpush1.bf16.msra.mxu0 %v1013
        %1035 = vmatprep.subr.bf16.mxu0 0
        %1036 = vmatpush1.bf16.msra.mxu0 %v1014
        %1037 = vmatprep.subr.bf16.mxu0 0
        %1038 = vmatpush1.bf16.msra.mxu0 %v1015
        %1039 = vmatprep.subr.bf16.mxu0 0
        %1040 = vmatpush1.bf16.msra.mxu0 %v1016
        %1041 = vmatprep.subr.bf16.mxu0 0
        %1042 = vmatpush1.bf16.msra.mxu0 %v1017
        %1043 = vmatprep.subr.bf16.mxu0 0
        %1044 = vmatpush1.bf16.msra.mxu0 %v1018
        %1045 = vmatprep.subr.bf16.mxu0 0
        %1046 = vmatpush1.bf16.msra.mxu0 %v1019
        %1047 = vmatprep.subr.bf16.mxu0 0
        %1048 = vmatpush1.bf16.msra.mxu0 %v1020
        %1049 = vmatprep.subr.bf16.mxu0 0
        %1050 = vmatpush1.bf16.msra.mxu0 %v1021
        %1051 = vmatprep.subr.bf16.mxu0 0
        %1052 = vmatpush1.bf16.msra.mxu0 %v1022
        %1053 = vmatprep.subr.bf16.mxu0 0
        %1054 = vmatpush1.bf16.msra.mxu0 %v1023
        %1055 = vmatprep.subr.bf16.mxu0 0
        %1056 = vmatpush1.bf16.msra.mxu0 %v1024
        %1057 = vmatprep.mubr.bf16.mxu0 %v962
        %1058 = vmatmul.mubr.bf16.gmra.mrb[0].mxu0 %v961
        %v1059 = vpop.f32.mrb[0].mxu0
        %v1060 = vadd.f32 0.0, %v1059
        %v1061 = vpop.f32.mrb[0].mxu0
        %v1062 = vpop.f32.mrb[0].mxu0
        %v1063 = vadd.f32 0.0, %v1062
        %v1064 = vpop.f32.mrb[0].mxu0
        %1065 = vmatprep.mubr.bf16.mxu0 %v964
        %1066 = vmatmul.mubr.bf16.gmra.mrb[0].mxu0 %v963
        %v1067 = vpop.f32.mrb[0].mxu0
        %v1068 = vadd.f32 0.0, %v1067
        %v1069 = vpop.f32.mrb[0].mxu0
        %v1070 = vpop.f32.mrb[0].mxu0
        %v1071 = vadd.f32 0.0, %v1070
        %v1072 = vpop.f32.mrb[0].mxu0
        %1073 = vmatprep.mubr.bf16.mxu0 %v966
        %1074 = vmatmul.mubr.bf16.gmra.mrb[0].mxu0 %v965
        %v1075 = vpop.f32.mrb[0].mxu0
        %v1076 = vadd.f32 0.0, %v1075
        %v1077 = vpop.f32.mrb[0].mxu0
        %v1078 = vpop.f32.mrb[0].mxu0
        %v1079 = vadd.f32 0.0, %v1078
        %v1080 = vpop.f32.mrb[0].mxu0
        %1081 = vmatprep.mubr.bf16.mxu0 %v968
        %1082 = vmatmul.mubr.bf16.gmra.mrb[0].mxu0 %v967
        %v1083 = vpop.f32.mrb[0].mxu0
        %v1084 = vadd.f32 0.0, %v1083
        %v1085 = vpop.f32.mrb[0].mxu0
        %v1086 = vpop.f32.mrb[0].mxu0
        %v1087 = vadd.f32 0.0, %v1086
        %v1088 = vpop.f32.mrb[0].mxu0
        %1089 = vmatprep.mubr.bf16.mxu0 %v970
        %1090 = vmatmul.mubr.bf16.gmra.mrb[0].mxu0 %v969
        %v1091 = vpop.f32.mrb[0].mxu0
        %v1092 = vadd.f32 0.0, %v1091
        %v1093 = vpop.f32.mrb[0].mxu0
        %v1094 = vpop.f32.mrb[0].mxu0
        %v1095 = vadd.f32 0.0, %v1094
        %v1096 = vpop.f32.mrb[0].mxu0
        %1097 = vmatprep.mubr.bf16.mxu0 %v972
        %1098 = vmatmul.mubr.bf16.gmra.mrb[0].mxu0 %v971
        %v1099 = vpop.f32.mrb[0].mxu0
        %v1100 = vadd.f32 0.0, %v1099
        %v1101 = vpop.f32.mrb[0].mxu0
        %v1102 = vpop.f32.mrb[0].mxu0
        %v1103 = vadd.f32 0.0, %v1102
        %v1104 = vpop.f32.mrb[0].mxu0
        %1105 = vmatprep.mubr.bf16.mxu0 %v974
        %1106 = vmatmul.mubr.bf16.gmra.mrb[0].mxu0 %v973
        %v1107 = vpop.f32.mrb[0].mxu0
        %v1108 = vadd.f32 0.0, %v1107
        %v1109 = vpop.f32.mrb[0].mxu0
        %v1110 = vpop.f32.mrb[0].mxu0
        %v1111 = vadd.f32 0.0, %v1110
        %v1112 = vpop.f32.mrb[0].mxu0
        %1113 = vmatprep.mubr.bf16.mxu0 %v976
        %1114 = vmatmul.mubr.bf16.gmra.mrb[0].mxu0 %v975
        %v1115 = vpop.f32.mrb[0].mxu0
        %v1116 = vadd.f32 0.0, %v1115
        %v1117 = vpop.f32.mrb[0].mxu0
        %v1118 = vpop.f32.mrb[0].mxu0
        %v1119 = vadd.f32 0.0, %v1118
        %v1120 = vpop.f32.mrb[0].mxu0
        %1121 = vdwg.mxu0
        %1122 = vst [vmem:[%s343] sm:$0xff] %v1060
        %1123 = vst [vmem:[%s343 + $0x8] sm:$0xff] %v1063
        %1124 = vst [vmem:[%s343 + $0x10] sm:$0xff] %v1068
        %1125 = vst [vmem:[%s343 + $0x18] sm:$0xff] %v1071
        %1126 = vst [vmem:[%s343 + $0x20] sm:$0xff] %v1076
        %1127 = vst [vmem:[%s343 + $0x28] sm:$0xff] %v1079
        %1128 = vst [vmem:[%s343 + $0x30] sm:$0xff] %v1084
        %1129 = vst [vmem:[%s343 + $0x38] sm:$0xff] %v1087
        %1130 = vst [vmem:[%s343 + $0x40] sm:$0xff] %v1092
        %1131 = vst [vmem:[%s343 + $0x48] sm:$0xff] %v1095
        %1132 = vst [vmem:[%s343 + $0x50] sm:$0xff] %v1100
        %1133 = vst [vmem:[%s343 + $0x58] sm:$0xff] %v1103
        %1134 = vst [vmem:[%s343 + $0x60] sm:$0xff] %v1108
        %1135 = vst [vmem:[%s343 + $0x68] sm:$0xff] %v1111
        %1136 = vst [vmem:[%s343 + $0x70] sm:$0xff] %v1116
        %1137 = vst [vmem:[%s343 + $0x78] sm:$0xff] %v1119
        %s1138 = sand.u32 %s165, 1
        %s1139 = scalar_lea.sflag [#allocation3], %s1138
        %s1140 = sand.u32 %s165, 1
        %s1141 = smul.addr %s1140, 256
        %s1142 = scalar_lea.vmem [#allocation2], %s1141
        %s1143 = smul.u32 16, %s26
        %p1144 = scmp.lt.s32.totalorder %s25, 1
        %s1145 = scalar_select %p1144, %s25, 1
        %p1146 = scmp.lt.s32.totalorder %s1143, 31
        %s1147 = scalar_select %p1146, %s1143, 31
        %s1148 = smul.addr %s1145, 32
        %s1149 = sadd.s32 %s1147, %s1148
        %s1150 = smul.addr %s1149, 8
        %s1151 = scalar_lea.vmem %s6, %s1150
        // Predicated region
        $region41: #{self_attention_block.5} parent=39 // pred_check
          %p1152 = pneg %p175
        $region42: #{self_attention_block.5} parent=39 // pred_check_branch
          %1154 = sbr.rel (%p1152) target = $region44
        $region43: #{self_attention_block.5} parent=39 // pred_region
          %s1155 = smul.u32 16, %s26
          %s1157 = ssub.s32 4096, 4096
          %1158 = vsyncadd %s1139, %s1157
          %s1159 = smul.addr %s1155, 2
          %s1160 = smul.addr %s25, 64
          %s1161 = sadd.s32 %s1159, %s1160
          %s1162 = smul.addr %s1161, 128
          %s1163 = scalar_lea.hbm %s5, %s1162
          %s1164 = sshll.u32 %s1142, 4
          %s1165 = int_to_ptr.vmem [resolvable:$true] %s1164
          %1170 = dma.vmem_to_hbm [thread:$0]  %s1165, 4096, %s1163, %s1139, 256, 256, 16
        $region44: #{self_attention_block.5} parent=39 // pred_fallthru
          _
        // Predicated region
        $region45: #{self_attention_block.5} parent=39 // pred_check
          %p1171 = pneg %p203
        $region46: #{self_attention_block.5} parent=39 // pred_check_branch
          %1173 = sbr.rel (%p1171) target = $region48
        $region47: #{self_attention_block.5} parent=39 // pred_region
          %s1174 = smul.u32 16, %s26
        $region48: #{self_attention_block.5} parent=39 // pred_fallthru
          _
      $region40: #{self_attention_block.5} parent=5 // pred_fallthru
        _
      %p1175 = scmp.le.s32.totalorder 2, %s16
      // Predicated region
      $region49: #{self_attention_block.5} parent=5 // pred_check
        %p1176 = pneg %p1175
      $region50: #{self_attention_block.5} parent=5 // pred_check_branch
        %1178 = sbr.rel (%p1176) target = $region52
      $region51: #{self_attention_block.5} parent=5 // pred_region
        %s1179 = ssub.s32 %s16, 2
        // Predicated region
        $region53: #{self_attention_block.5} parent=51 // pred_check
          %p1180 = pneg %p181
        $region54: #{self_attention_block.5} parent=51 // pred_check_branch
          %1182 = sbr.rel (%p1180) target = $region56
        $region55: #{self_attention_block.5} parent=51 // pred_region
          %s1183 = sand.u32 %s166, 1
          %s1184 = scalar_lea.sflag [#allocation3], %s1183
          %s1185 = sand.u32 %s166, 1
          %s1186 = smul.addr %s1185, 256
          %s1187 = scalar_lea.vmem [#allocation2], %s1186
          %1188 = dma.done %s1184, 4096
        $region56: #{self_attention_block.5} parent=51 // pred_fallthru
          _
        // Predicated region
        $region57: #{self_attention_block.5} parent=51 // pred_check
          %p1189 = pneg %p209
        $region58: #{self_attention_block.5} parent=51 // pred_check_branch
          %1191 = sbr.rel (%p1189) target = $region60
        $region59: #{self_attention_block.5} parent=51 // pred_region
          %s1192 = smul.u32 16, %s28
          %p1193 = scmp.lt.s32.totalorder %s27, 1
          %s1194 = scalar_select %p1193, %s27, 1
          %p1195 = scmp.lt.s32.totalorder %s1192, 31
          %s1196 = scalar_select %p1195, %s1192, 31
          %s1197 = smul.addr %s1194, 32
          %s1198 = sadd.s32 %s1196, %s1197
          %s1199 = smul.addr %s1198, 8
          %s1200 = scalar_lea.vmem %s6, %s1199
        $region60: #{self_attention_block.5} parent=51 // pred_fallthru
          _
      $region52: #{self_attention_block.5} parent=5 // pred_fallthru
        _
    $region6: #{self_attention_block.5} parent=1 // loop_footer
      %s20 = sadd.s32 1, %s16
    $region7: #{self_attention_block.5} parent=1 // loop_footer_branch
      %15 = sbr.rel target = $region3
    $region8: #{self_attention_block.5} parent=1 // loop_exit
      _
    %1201 = vsyncpa [#allocation3], 1
    %s1202 = scalar_lea.sflag [#allocation3], 1
    %1203 = vsyncpa %s1202, 1

</llo_original>
